<compile_context>
chip_gen: v6e
topology: v6e:2x2x1
jax: 0.10.0
libtpu: 0.0.40
codegen_flags: <defaults>
</compile_context>

<pallas_src>
import math

import jax
import jax.numpy as jnp
from jax.experimental import pallas as pl
from jax.experimental.pallas import tpu as pltpu

EPS = 1e-5

MODEL_CFG = dict(
    bn_size=2,
    drop_rate=0.0,
    growth_rate=8,
    num_init_features=272,
    block_config=(2, 2, 2, 2),
    dropout0=0.0,
    dropout1=0.0,
    d_feature0=64,
    d_feature1=160,
)
N_CLASS = 19
OUTPUT_STRIDE = 8


# ----------------------------------------------------------------------------
# Fused GEMM Pallas kernel:  out = post(relu?)(post_affine(bias + pre(relu?)(pre_affine(A)) @ W))
# ----------------------------------------------------------------------------

def _round_up(x, m):
    return (x + m - 1) // m * m


def _pick_tiles(M, K, N):
    # M / K: use the full dim as a single tile when small (allowed: block == full array dim),
    # avoiding an extra HBM pad copy of the activation. N is always padded to a 128 multiple so
    # output stores are lane-dense.
    if M <= 512:
        tm, Mp = M, M
    else:
        tm = 256
        Mp = _round_up(M, tm)
    if K <= 2048:
        tk, Kp = K, K
    else:
        tk = 512
        Kp = _round_up(K, tk)
    if N <= 1024:
        tn = Np = _round_up(N, 128)
    else:
        tn = 512
        Np = _round_up(N, tn)
    return (tm, tk, tn), (Mp, Kp, Np)


def _make_gemm_kernel(has_pre, pre_relu, has_bias, has_post, post_relu, nk):
    def kernel(*refs):
        idx = 0
        x_ref = refs[idx]; idx += 1
        w_ref = refs[idx]; idx += 1
        if has_pre:
            psc_ref = refs[idx]; psh_ref = refs[idx + 1]; idx += 2
        if has_bias:
            b_ref = refs[idx]; idx += 1
        if has_post:
            qsc_ref = refs[idx]; qsh_ref = refs[idx + 1]; idx += 2
        o_ref = refs[idx]
        acc_ref = refs[idx + 1]

        k = pl.program_id(2)

        @pl.when(k == 0)
        def _():
            acc_ref[...] = jnp.zeros_like(acc_ref)

        a = x_ref[...]                                # f32 tile
        if has_pre:
            a = a * psc_ref[...] + psh_ref[...]       # fused BN affine (per-K column)
        if pre_relu:
            a = jnp.maximum(a, 0.0)
        acc_ref[...] += jnp.dot(a.astype(jnp.bfloat16), w_ref[...],
                                preferred_element_type=jnp.float32)

        @pl.when(k == nk - 1)
        def _():
            y = acc_ref[...]
            if has_bias:
                y = y + b_ref[...]
            if has_post:
                y = y * qsc_ref[...] + qsh_ref[...]   # fused BN affine on output channels
            if post_relu:
                y = jnp.maximum(y, 0.0)
            o_ref[...] = y.astype(o_ref.dtype)

    return kernel


def fused_gemm(lhs, rhs, *, pre_scale=None, pre_shift=None, pre_relu=False,
               bias=None, post_scale=None, post_shift=None, post_relu=False):
    """lhs: (M, K) f32, rhs: (K, N) f32.  Returns (M, N) f32."""
    M, K = lhs.shape
    K2, N = rhs.shape
    assert K == K2
    (tm, tk, tn), (Mp, Kp, Np) = _pick_tiles(M, K, N)

    lhs_p = lhs if (Mp == M and Kp == K) else jnp.pad(lhs, ((0, Mp - M), (0, Kp - K)))
    rhs_p = rhs if (Kp == K and Np == N) else jnp.pad(rhs, ((0, Kp - K), (0, Np - N)))
    rhs_p = rhs_p.astype(jnp.bfloat16)

    has_pre = pre_scale is not None
    has_bias = bias is not None
    has_post = post_scale is not None

    def pad_vec(v, P):
        v = jnp.asarray(v, jnp.float32).reshape(-1)
        if v.shape[0] != P:
            v = jnp.pad(v, (0, P - v.shape[0]))
        return v.reshape(1, P)

    inputs = [lhs_p, rhs_p]
    in_specs = [pl.BlockSpec((tm, tk), lambda i, j, k: (i, k)),
                pl.BlockSpec((tk, tn), lambda i, j, k: (k, j))]
    if has_pre:
        inputs += [pad_vec(pre_scale, Kp), pad_vec(pre_shift, Kp)]
        in_specs += [pl.BlockSpec((1, tk), lambda i, j, k: (0, k))] * 2
    if has_bias:
        inputs += [pad_vec(bias, Np)]
        in_specs += [pl.BlockSpec((1, tn), lambda i, j, k: (0, j))]
    if has_post:
        inputs += [pad_vec(post_scale, Np), pad_vec(post_shift, Np)]
        in_specs += [pl.BlockSpec((1, tn), lambda i, j, k: (0, j))] * 2

    nm, nn, nk = Mp // tm, Np // tn, Kp // tk
    kernel = _make_gemm_kernel(has_pre, pre_relu, has_bias, has_post, post_relu, nk)

    out = pl.pallas_call(
        kernel,
        out_shape=jax.ShapeDtypeStruct((Mp, Np), jnp.float32),
        grid_spec=pltpu.PrefetchScalarGridSpec(
            num_scalar_prefetch=0,
            grid=(nm, nn, nk),
            in_specs=in_specs,
            out_specs=pl.BlockSpec((tm, tn), lambda i, j, k: (i, j)),
            scratch_shapes=[pltpu.VMEM((tm, tn), jnp.float32)],
        ),
        compiler_params=pltpu.CompilerParams(
            dimension_semantics=("parallel", "parallel", "arbitrary")),
    )(*inputs)
    if Mp != M or Np != N:
        out = out[:M, :N]
    return out


# ----------------------------------------------------------------------------
# Pooling kernels (tiled over rows, tap axis reduced in-kernel)
# ----------------------------------------------------------------------------

def _pool_max_kernel(t_ref, o_ref):
    o_ref[...] = jnp.max(t_ref[...], axis=0)


def _pool_mean_kernel(t_ref, o_ref):
    o_ref[...] = jnp.mean(t_ref[...], axis=0)


def _pool_reduce(taps, op):
    T, M, C = taps.shape
    if M <= 1024:
        tmr = _round_up(M, 8)
        Mp = tmr
    else:
        tmr = 512
        Mp = _round_up(M, tmr)
    if Mp != M:
        taps = jnp.pad(taps, ((0, 0), (0, Mp - M), (0, 0)))
    kern = _pool_max_kernel if op == 'max' else _pool_mean_kernel
    y = pl.pallas_call(
        kern,
        out_shape=jax.ShapeDtypeStruct((Mp, C), jnp.float32),
        grid=(Mp // tmr,),
        in_specs=[pl.BlockSpec((T, tmr, C), lambda i: (0, i, 0))],
        out_specs=pl.BlockSpec((tmr, C), lambda i: (i, 0)),
        compiler_params=pltpu.CompilerParams(dimension_semantics=("parallel",)),
    )(taps)
    return y[:M] if Mp != M else y


# ----------------------------------------------------------------------------
# Op wrappers (padding / slicing / reshapes only; compute lives in the kernels)
# ----------------------------------------------------------------------------

def bn_affine(p):
    scale = p['gamma'] / jnp.sqrt(p['var'] + EPS)
    shift = p['beta'] - p['mean'] * scale
    return scale, shift


def conv2d(x, w, bias=None, *, stride=1, dilation=1, padding=0,
           pre_scale=None, pre_shift=None, pre_relu=False,
           post_scale=None, post_shift=None, post_relu=False):
    """x: (N,H,W,Cin) NHWC; w: (Cout,Cin,KH,KW) PyTorch OIHW layout.

    pre_*  : per-input-channel BN affine + ReLU fused before the matmul (exact only when the
             conv has no zero padding — all fused uses are 1x1 convs).
    post_* : per-output-channel bias/BN affine + ReLU fused as the GEMM epilogue.
    """
    N, H, W, Cin = x.shape
    Cout, Cin2, KH, KW = w.shape
    assert Cin == Cin2
    if pre_scale is not None or pre_relu:
        assert padding == 0, "pre-activation fusion requires padding == 0"

    if KH == 1 and KW == 1 and stride == 1 and padding == 0:
        Ho, Wo = H, W
        patches = x.reshape(N * H * W, Cin)
        w2 = w.reshape(Cout, Cin).T
    else:
        xp = jnp.pad(x, ((0, 0), (padding, padding), (padding, padding), (0, 0)))
        Ho = (H + 2 * padding - dilation * (KH - 1) - 1) // stride + 1
        Wo = (W + 2 * padding - dilation * (KW - 1) - 1) // stride + 1
        taps = []
        for kh in range(KH):
            for kw in range(KW):
                sl = xp[:,
                        kh * dilation: kh * dilation + (Ho - 1) * stride + 1: stride,
                        kw * dilation: kw * dilation + (Wo - 1) * stride + 1: stride,
                        :]
                taps.append(sl.reshape(N * Ho * Wo, Cin))
        patches = jnp.concatenate(taps, axis=-1)               # (M, KH*KW*Cin) lane-contiguous
        w2 = jnp.transpose(w, (2, 3, 1, 0)).reshape(KH * KW * Cin, Cout)
        if pre_scale is not None:                              # tile per-channel affine over taps
            pre_scale = jnp.tile(pre_scale, KH * KW)
            pre_shift = jnp.tile(pre_shift, KH * KW)

    out = fused_gemm(patches, w2,
                     pre_scale=pre_scale, pre_shift=pre_shift, pre_relu=pre_relu,
                     bias=bias,
                     post_scale=post_scale, post_shift=post_shift, post_relu=post_relu)
    return out.reshape(N, Ho, Wo, Cout)


def max_pool(x, k, stride, padding):
    N, H, W, C = x.shape
    xp = jnp.pad(x, ((0, 0), (padding, padding), (padding, padding), (0, 0)),
                 constant_values=-jnp.inf)
    Ho = (H + 2 * padding - k) // stride + 1
    Wo = (W + 2 * padding - k) // stride + 1
    taps = []
    for kh in range(k):
        for kw in range(k):
            sl = xp[:, kh: kh + (Ho - 1) * stride + 1: stride,
                       kw: kw + (Wo - 1) * stride + 1: stride, :]
            taps.append(sl.reshape(N * Ho * Wo, C))
    y = _pool_reduce(jnp.stack(taps, axis=0), 'max')
    return y.reshape(N, Ho, Wo, C)


def avg_pool2(x):
    N, H, W, C = x.shape
    Ho, Wo = H // 2, W // 2
    taps = []
    for kh in range(2):
        for kw in range(2):
            sl = x[:, kh: kh + (Ho - 1) * 2 + 1: 2, kw: kw + (Wo - 1) * 2 + 1: 2, :]
            taps.append(sl.reshape(N * Ho * Wo, C))
    y = _pool_reduce(jnp.stack(taps, axis=0), 'mean')
    return y.reshape(N, Ho, Wo, C)


def _bilinear_matrix(size_in, size_out):
    """PyTorch bilinear (align_corners=False) interpolation matrix (size_out, size_in)."""
    scale = size_in / size_out
    dst = jnp.arange(size_out, dtype=jnp.float32)
    src = jnp.maximum((dst + 0.5) * scale - 0.5, 0.0)
    i0 = jnp.clip(jnp.floor(src).astype(jnp.int32), 0, size_in - 1)
    i1 = jnp.minimum(i0 + 1, size_in - 1)
    w1 = jnp.clip(src - i0.astype(jnp.float32), 0.0, 1.0)
    w0 = 1.0 - w1
    A = jnp.zeros((size_out, size_in), jnp.float32)
    A = A.at[jnp.arange(size_out), i0].add(w0)
    A = A.at[jnp.arange(size_out), i1].add(w1)
    return A


def upsample_bilinear(x, scale_factor):
    """Separable bilinear upsample; both passes via the fused GEMM kernel."""
    N, H, W, C = x.shape
    Ho, Wo = H * scale_factor, W * scale_factor
    Ah = _bilinear_matrix(H, Ho)
    Aw = _bilinear_matrix(W, Wo)
    xh = jnp.transpose(x, (1, 0, 2, 3)).reshape(H, N * W * C)
    yh = fused_gemm(Ah, xh)                                    # (Ho, N*W*C)
    yh = yh.reshape(Ho, N, W, C).transpose(1, 0, 2, 3)         # (N, Ho, W, C)
    xw = jnp.transpose(yh, (2, 0, 1, 3)).reshape(W, N * Ho * C)
    yw = fused_gemm(Aw, xw)                                    # (Wo, N*Ho*C)
    return yw.reshape(Wo, N, Ho, C).transpose(1, 2, 0, 3)      # (N, Ho, Wo, C)


# ----------------------------------------------------------------------------
# Parameter initialization (deterministic, mirroring the module's __init__)
# ----------------------------------------------------------------------------

class KeyGen:
    def __init__(self, key):
        self.key = key

    def __call__(self):
        self.key, k = jax.random.split(self.key)
        return k


def kaiming_uniform(key, shape):
    fan_in = shape[1] * shape[2] * shape[3]
    bound = math.sqrt(6.0 / fan_in)
    return jax.random.uniform(key, shape, jnp.float32, -bound, bound)


def conv_bias_init(key, fan_in, cout):
    bound = 1.0 / math.sqrt(fan_in)
    return jax.random.uniform(key, (cout,), jnp.float32, -bound, bound)


def bn_params(c):
    return dict(gamma=jnp.ones((c,), jnp.float32), beta=jnp.zeros((c,), jnp.float32),
                mean=jnp.zeros((c,), jnp.float32), var=jnp.ones((c,), jnp.float32))


def init_params(key, cfg, n_class, output_stride):
    kg = KeyGen(key)
    g = cfg['growth_rate']
    bs = cfg['bn_size']
    f0 = cfg['num_init_features']
    bc = cfg['block_config']
    d0 = cfg['d_feature0']
    d1 = cfg['d_feature1']
    feature_size = output_stride // 8

    P = {}
    P['conv0_w'] = kaiming_uniform(kg(), (f0, 3, 7, 7))
    P['norm0'] = bn_params(f0)

    num_features = f0
    dil_per_block = [1, 1, int(2 / feature_size), int(4 / feature_size)]
    dense_blocks, transitions = [], []
    for bi, nl in enumerate(bc):
        layers = []
        for i in range(nl):
            cin = num_features + i * g
            layers.append(dict(
                norm1=bn_params(cin),
                conv1_w=kaiming_uniform(kg(), (bs * g, cin, 1, 1)),
                norm2=bn_params(bs * g),
                conv2_w=kaiming_uniform(kg(), (g, bs * g, 3, 3)),
                dilation=dil_per_block[bi],
            ))
        dense_blocks.append(layers)
        num_features = num_features + nl * g
        trans_out = num_features // 2
        stride = 2 if bi == 0 else (feature_size if bi == 1 else 1)
        transitions.append(dict(
            norm=bn_params(num_features),
            conv_w=kaiming_uniform(kg(), (trans_out, num_features, 1, 1)),
            stride=stride,
        ))
        num_features = trans_out

    P['dense_blocks'] = dense_blocks
    P['transitions'] = transitions
    P['norm5'] = bn_params(num_features)
    P['num_features'] = num_features

    def aspp_block(cin, ksize, dil, bn_start):
        blk = dict(bn_start=bn_start, dilation=dil, ksize=ksize)
        if bn_start:
            blk['norm1'] = bn_params(cin)
        blk['conv1_w'] = kaiming_uniform(kg(), (d0, cin, 1, 1))
        blk['conv1_b'] = conv_bias_init(kg(), cin, d0)
        blk['norm2'] = bn_params(d0)
        blk['conv2_w'] = kaiming_uniform(kg(), (d1, d0, ksize, ksize))
        blk['conv2_b'] = conv_bias_init(kg(), d0 * ksize * ksize, d1)
        return blk

    nf = num_features
    P['aspp'] = [
        aspp_block(nf, 3, 3, False),
        aspp_block(nf + d1, 3, 6, True),
        aspp_block(nf + 2 * d1, 3, 12, True),
        aspp_block(nf + 3 * d1, 3, 18, True),
        aspp_block(nf + 4 * d1, 3, 24, True),
    ]
    P['aspp_v2'] = [
        aspp_block(nf, 5, 3, True),
        aspp_block(nf + d1, 5, 6, True),
        aspp_block(nf + 2 * d1, 5, 12, True),
        aspp_block(nf + 3 * d1, 5, 18, True),
        aspp_block(nf + 4 * d1, 5, 24, True),
    ]

    # Hard-coded in the module: in_channels=832*2, out_channels=832 (matches this cfg exactly).
    P['concat_conv_w'] = kaiming_uniform(kg(), (832, 832 * 2, 1, 1))

    cls_cin = nf + 5 * d1
    P['cls_conv_w'] = kaiming_uniform(kg(), (n_class, cls_cin, 1, 1))
    P['cls_conv_b'] = conv_bias_init(kg(), cls_cin, n_class)
    return P


# ----------------------------------------------------------------------------
# Forward pass
# ----------------------------------------------------------------------------

def dense_layer_fwd(x, lp):
    s1, b1 = bn_affine(lp['norm1'])
    s2, b2 = bn_affine(lp['norm2'])
    # norm.1 -> relu.1 -> conv.1 (1x1) -> norm.2 -> relu.2 : all fused into one GEMM
    y = conv2d(x, lp['conv1_w'],
               pre_scale=s1, pre_shift=b1, pre_relu=True,
               post_scale=s2, post_shift=b2, post_relu=True)
    d = lp['dilation']
    y = conv2d(y, lp['conv2_w'], dilation=d, padding=d)        # conv.2 (3x3 dilated)
    return jnp.concatenate([x, y], axis=-1)                    # torch.cat([x, new_features], 1)


def transition_fwd(x, tp, extra_post=None):
    s, b = bn_affine(tp['norm'])
    if extra_post is not None:
        # Fuse norm5 (affine, no relu) as the epilogue of the last transition's 1x1 conv
        # (affine commutes with the avg pool, and here stride == 1 anyway).
        qs, qb = extra_post
        y = conv2d(x, tp['conv_w'], pre_scale=s, pre_shift=b, pre_relu=True,
                   post_scale=qs, post_shift=qb, post_relu=False)
    else:
        y = conv2d(x, tp['conv_w'], pre_scale=s, pre_shift=b, pre_relu=True)
    if tp['stride'] == 2:
        y = avg_pool2(y)
    return y


def aspp_fwd(x, bp):
    s2, b2 = bn_affine(bp['norm2'])
    if bp['bn_start']:
        s1, b1 = bn_affine(bp['norm1'])
        y = conv2d(x, bp['conv1_w'], bias=bp['conv1_b'],
                   pre_scale=s1, pre_shift=b1, pre_relu=True,      # norm.1 -> relu.1
                   post_scale=s2, post_shift=b2, post_relu=True)   # norm.2 -> relu.2
    else:
        y = conv2d(x, bp['conv1_w'], bias=bp['conv1_b'],
                   pre_relu=True,                                  # relu.1 only
                   post_scale=s2, post_shift=b2, post_relu=True)
    k, d = bp['ksize'], bp['dilation']
    pad = d if k == 3 else d * 2
    y = conv2d(y, bp['conv2_w'], bias=bp['conv2_b'], dilation=d, padding=pad)
    return y                                                       # dropout p=0 -> identity


def features_fwd(x, P):
    s0, b0 = bn_affine(P['norm0'])
    y = conv2d(x, P['conv0_w'], stride=2, padding=3,
               post_scale=s0, post_shift=b0, post_relu=True)       # conv0 + norm0 + relu0 fused
    y = max_pool(y, 3, 2, 1)
    n_blocks = len(P['dense_blocks'])
    for bi, (layers, trans) in enumerate(zip(P['dense_blocks'], P['transitions'])):
        for lp in layers:
            y = dense_layer_fwd(y, lp)
        extra = bn_affine(P['norm5']) if bi == n_blocks - 1 else None
        y = transition_fwd(y, trans, extra_post=extra)
    # feature_size == 1 (output_stride=8) -> no 'upsample' module inside features
    return y


def dense_aspp_forward(x_nchw, P):
    x = jnp.transpose(x_nchw, (0, 2, 3, 1)).astype(jnp.float32)    # NCHW -> NHWC
    feature = features_fwd(x, P)

    # TODO(synk): the O(L^2) channel concatenation is left to XLA; a preallocated channel buffer
    # with input_output_aliases would remove these copies for large feature maps.
    f = feature
    for bp in P['aspp']:
        a = aspp_fwd(f, bp)
        f = jnp.concatenate([a, f], axis=-1)                       # torch.cat((aspp, feature), 1)

    f2 = feature
    for bp in P['aspp_v2']:
        a = aspp_fwd(f2, bp)
        f2 = jnp.concatenate([a, f2], axis=-1)

    cat = jnp.concatenate([f, f2], axis=-1)                        # 1664 channels
    out = conv2d(cat, P['concat_conv_w'])                          # -> 832

    # classification: Dropout2d(p=0) identity -> 1x1 conv (+bias) -> bilinear upsample x8
    cls = conv2d(out, P['cls_conv_w'], bias=P['cls_conv_b'])
    cls = upsample_bilinear(cls, 8)
    return jnp.transpose(cls, (0, 3, 1, 2))                        # NHWC -> NCHW


# ----------------------------------------------------------------------------
# Main
# ----------------------------------------------------------------------------

if __name__ == "__main__":
    key = jax.random.PRNGKey(0)
    kp, kx = jax.random.split(key)
    params = init_params(kp, MODEL_CFG, N_CLASS, OUTPUT_STRIDE)

    # Small input consistent with the module: N=2, RGB, 32x32 -> feature map 4x4 -> output 32x32.
    x = jax.random.normal(kx, (2, 3, 32, 32), dtype=jnp.float32)

    out = dense_aspp_forward(x, params)
    out = jax.block_until_ready(out)

    assert out.shape == (2, N_CLASS, 32, 32), out.shape
    assert bool(jnp.isfinite(out).all())
    print("KERNEL_OK")
</pallas_src>

<mosaic_0001>
module attributes {stable_mosaic.version = 11 : i64} {
  func.func @kernel(%arg0: i32, %arg1: i32, %arg2: i32, %arg3: memref<512x147xf32, #tpu.memory_space<vmem>>, %arg4: memref<147x384xbf16, #tpu.memory_space<vmem>>, %arg5: memref<1x384xf32, #tpu.memory_space<vmem>>, %arg6: memref<1x384xf32, #tpu.memory_space<vmem>>, %arg7: memref<512x384xf32, #tpu.memory_space<vmem>>, %arg8: memref<512x384xf32, #tpu.memory_space<vmem>>) attributes {dimension_semantics = [#tpu.dimension_semantics<parallel>, #tpu.dimension_semantics<parallel>, #tpu.dimension_semantics<arbitrary>], iteration_bounds = array<i64: 1, 1, 1>, scalar_prefetch = 0 : i64, scratch_operands = 1 : i64, tpu.core_type = #tpu.core_type<tc>, window_params = [{transform_indices = @transform_0, window_bounds = array<i64: 512, 147>}, {transform_indices = @transform_1, window_bounds = array<i64: 147, 384>}, {transform_indices = @transform_2, window_bounds = array<i64: 1, 384>}, {transform_indices = @transform_3, window_bounds = array<i64: 1, 384>}, {transform_indices = @transform_4, window_bounds = array<i64: 512, 384>}]} {
    %c0_i32 = arith.constant 0 : i32
    %0 = arith.cmpi eq, %arg2, %c0_i32 : i32
    %1 = arith.extui %0 : i1 to i32
    %c0_i32_0 = arith.constant 0 : i32
    %2 = arith.cmpi ne, %1, %c0_i32_0 : i32
    scf.if %2 {
      %cst_10 = arith.constant 0.000000e+00 : f32
      %13 = vector.broadcast %cst_10 : f32 to vector<512x384xf32>
      %c0_11 = arith.constant 0 : index
      %c0_12 = arith.constant 0 : index
      %14 = vector.load %arg8[%c0_11, %c0_12] : memref<512x384xf32, #tpu.memory_space<vmem>>, vector<512x384xf32>
      tpu.vector_store %arg8[%c0_11, %c0_12], %13 {strides = array<i32>} : memref<512x384xf32, #tpu.memory_space<vmem>>, vector<512x384xf32>,
    } else {
    }
    %c0 = arith.constant 0 : index
    %c0_1 = arith.constant 0 : index
    %3 = vector.load %arg3[%c0, %c0_1] : memref<512x147xf32, #tpu.memory_space<vmem>>, vector<512x147xf32>
    %c0_2 = arith.constant 0 : index
    %c0_3 = arith.constant 0 : index
    %4 = vector.load %arg8[%c0_2, %c0_3] : memref<512x384xf32, #tpu.memory_space<vmem>>, vector<512x384xf32>
    %5 = arith.truncf %3 : vector<512x147xf32> to vector<512x147xbf16>
    %c0_4 = arith.constant 0 : index
    %c0_5 = arith.constant 0 : index
    %6 = vector.load %arg4[%c0_4, %c0_5] : memref<147x384xbf16, #tpu.memory_space<vmem>>, vector<147x384xbf16>
    %cst = arith.constant dense<0.000000e+00> : vector<512x384xf32>
    %7 = tpu.matmul %5, %6, %cst {dimension_numbers = #tpu.dot_dimension_numbers<[1], [0], [0], [1], [0, 0, 1, 1], [], []>} : vector<512x147xbf16>, vector<147x384xbf16>, vector<512x384xf32> -> vector<512x384xf32>
    %8 = arith.addf %4, %7 : vector<512x384xf32>
    %c0_6 = arith.constant 0 : index
    %c0_7 = arith.constant 0 : index
    %9 = vector.load %arg8[%c0_6, %c0_7] : memref<512x384xf32, #tpu.memory_space<vmem>>, vector<512x384xf32>
    tpu.vector_store %arg8[%c0_6, %c0_7], %8 {strides = array<i32>} : memref<512x384xf32, #tpu.memory_space<vmem>>, vector<512x384xf32>,
    %c0_i32_8 = arith.constant 0 : i32
    %10 = arith.cmpi eq, %arg2, %c0_i32_8 : i32
    %11 = arith.extui %10 : i1 to i32
    %c0_i32_9 = arith.constant 0 : i32
    %12 = arith.cmpi ne, %11, %c0_i32_9 : i32
    scf.if %12 {
      %c0_10 = arith.constant 0 : index
      %c0_11 = arith.constant 0 : index
      %13 = vector.load %arg8[%c0_10, %c0_11] : memref<512x384xf32, #tpu.memory_space<vmem>>, vector<512x384xf32>
      %c0_12 = arith.constant 0 : index
      %c0_13 = arith.constant 0 : index
      %14 = vector.load %arg5[%c0_12, %c0_13] : memref<1x384xf32, #tpu.memory_space<vmem>>, vector<1x384xf32>
      %15 = vector.broadcast %14 : vector<1x384xf32> to vector<512x384xf32>
      %16 = arith.mulf %13, %15 : vector<512x384xf32>
      %c0_14 = arith.constant 0 : index
      %c0_15 = arith.constant 0 : index
      %17 = vector.load %arg6[%c0_14, %c0_15] : memref<1x384xf32, #tpu.memory_space<vmem>>, vector<1x384xf32>
      %18 = vector.broadcast %17 : vector<1x384xf32> to vector<512x384xf32>
      %19 = arith.addf %16, %18 : vector<512x384xf32>
      %cst_16 = arith.constant 0.000000e+00 : f32
      %20 = vector.broadcast %cst_16 : f32 to vector<512x384xf32>
      %21 = arith.maximumf %19, %20 : vector<512x384xf32>
      %c0_17 = arith.constant 0 : index
      %c0_18 = arith.constant 0 : index
      %22 = vector.load %arg7[%c0_17, %c0_18] : memref<512x384xf32, #tpu.memory_space<vmem>>, vector<512x384xf32>
      tpu.vector_store %arg7[%c0_17, %c0_18], %21 {strides = array<i32>} : memref<512x384xf32, #tpu.memory_space<vmem>>, vector<512x384xf32>,
    } else {
    }
    return
  }
  func.func @transform_0(%arg0: i32, %arg1: i32, %arg2: i32) -> (i32, i32) {
    %c0_i32 = arith.constant 0 : i32
    return %arg0, %arg2 : i32, i32
  }
  func.func @transform_1(%arg0: i32, %arg1: i32, %arg2: i32) -> (i32, i32) {
    %c0_i32 = arith.constant 0 : i32
    return %arg2, %arg1 : i32, i32
  }
  func.func @transform_2(%arg0: i32, %arg1: i32, %arg2: i32) -> (i32, i32) {
    %c0_i32 = arith.constant 0 : i32
    %c0_i32_0 = arith.constant 0 : i32
    return %c0_i32, %arg1 : i32, i32
  }
  func.func @transform_3(%arg0: i32, %arg1: i32, %arg2: i32) -> (i32, i32) {
    %c0_i32 = arith.constant 0 : i32
    %c0_i32_0 = arith.constant 0 : i32
    return %c0_i32, %arg1 : i32, i32
  }
  func.func @transform_4(%arg0: i32, %arg1: i32, %arg2: i32) -> (i32, i32) {
    %c0_i32 = arith.constant 0 : i32
    return %arg0, %arg1 : i32, i32
  }
}

</mosaic_0001>

<llo_original>
// kernel: tpu_custom_call.1
$region0: #{tpu_custom_call.1}
  #allocation0 [shape = 'u32[]', space=smem, size = 0x4, offset = 0x4, fixed_abs, tag = 'smem constant byte address 0x4 - core index']
  #allocation1 [shape = 'u32[144,128]{1,0:T(1,128)}', space=vmem, size = 0x12000, scoped, tag = 'internal scratch']
  #allocation2 [shape = 'f32[512,384]{1,0:T(8,128)}', space=vmem, size = 0xc0000, scoped, tag = 'scratch operand']
  %s0 = inlined_call_operand.vmem [shape: f32[512,147], index: 0, kind: input, shape index: {}]
  %s1 = inlined_call_operand.vmem [shape: bf16[147,384], index: 1, kind: input, shape index: {}]
  %s2 = inlined_call_operand.vmem [shape: f32[1,384], index: 2, kind: input, shape index: {}]
  %s3 = inlined_call_operand.vmem [shape: f32[1,384], index: 3, kind: input, shape index: {}]
  %s4 = inlined_call_operand.hbm [shape: f32[512,384], index: 4, kind: output, shape index: {}]
  %s5 = sld [smem:[#allocation0]]
  $region34: #{tpu_custom_call.1} parent=0
    _
  %s7 = ssub.s32 1, %s5
  %s8 = scalar_select 0, %s7, %s5
  $region1: #{tpu_custom_call.1} parent=0
    #allocation3 [shape = 'u8[786432]{0}', space=vmem, size = 0xc0000, scoped, tag = 'output window, operand 0, single buffered']
    #allocation4 [shape = 's32[1]{0}', space=sflag, size = 0x4, scoped, tag = 'scoped memory for tpu_custom_call.1']
    %9 = vsyncpa [#allocation4], 0
    // Predicated region
    $region2: #{tpu_custom_call.1} parent=1 // pred_check
      _
    $region3: #{tpu_custom_call.1} parent=1 // pred_check_branch
      %11 = sbr.rel (0) target = $region5
    $region4: #{tpu_custom_call.1} parent=1 // pred_region
      _
    $region5: #{tpu_custom_call.1} parent=1 // pred_fallthru
      _
    // Predicated region
    $region6: #{tpu_custom_call.1} parent=1 // pred_check
      _
    $region7: #{tpu_custom_call.1} parent=1 // pred_check_branch
      %13 = sbr.rel (0) target = $region9
    $region8: #{tpu_custom_call.1} parent=1 // pred_region
      _
    $region9: #{tpu_custom_call.1} parent=1 // pred_fallthru
      _
    // Predicated region
    $region10: #{tpu_custom_call.1} parent=1 // pred_check
      _
    $region11: #{tpu_custom_call.1} parent=1 // pred_check_branch
      %15 = sbr.rel (0) target = $region13
    $region12: #{tpu_custom_call.1} parent=1 // pred_region
      _
    $region13: #{tpu_custom_call.1} parent=1 // pred_fallthru
      _
    // Predicated region
    $region14: #{tpu_custom_call.1} parent=1 // pred_check
      _
    $region15: #{tpu_custom_call.1} parent=1 // pred_check_branch
      %17 = sbr.rel (0) target = $region17
    $region16: #{tpu_custom_call.1} parent=1 // pred_region
      _
    $region17: #{tpu_custom_call.1} parent=1 // pred_fallthru
      _
    %p19 = scmp.eq.s32.totalorder 0, 0
    // Predicated region
    $region18: #{tpu_custom_call.1} parent=1 // pred_check
      %p20 = pneg %p19
    $region19: #{tpu_custom_call.1} parent=1 // pred_check_branch
      %22 = sbr.rel (%p20) target = $region21
    $region20: #{tpu_custom_call.1} parent=1 // pred_region
      %23 = vst [vmem:[#allocation2] sm:$0xff] 0.0
      %24 = vst [vmem:[#allocation2 + $0x8] sm:$0xff] 0.0
      %25 = vst [vmem:[#allocation2 + $0x10] sm:$0xff] 0.0
      %26 = vst [vmem:[#allocation2 + $0x18] sm:$0xff] 0.0
      %27 = vst [vmem:[#allocation2 + $0x20] sm:$0xff] 0.0
      %28 = vst [vmem:[#allocation2 + $0x28] sm:$0xff] 0.0
      %29 = vst [vmem:[#allocation2 + $0x30] sm:$0xff] 0.0
      %30 = vst [vmem:[#allocation2 + $0x38] sm:$0xff] 0.0
      %31 = vst [vmem:[#allocation2 + $0x40] sm:$0xff] 0.0
      %32 = vst [vmem:[#allocation2 + $0x48] sm:$0xff] 0.0
      %33 = vst [vmem:[#allocation2 + $0x50] sm:$0xff] 0.0
      %34 = vst [vmem:[#allocation2 + $0x58] sm:$0xff] 0.0
      %35 = vst [vmem:[#allocation2 + $0x60] sm:$0xff] 0.0
      %36 = vst [vmem:[#allocation2 + $0x68] sm:$0xff] 0.0
      %37 = vst [vmem:[#allocation2 + $0x70] sm:$0xff] 0.0
      %38 = vst [vmem:[#allocation2 + $0x78] sm:$0xff] 0.0
      %39 = vst [vmem:[#allocation2 + $0x80] sm:$0xff] 0.0
      %40 = vst [vmem:[#allocation2 + $0x88] sm:$0xff] 0.0
      %41 = vst [vmem:[#allocation2 + $0x90] sm:$0xff] 0.0
      %42 = vst [vmem:[#allocation2 + $0x98] sm:$0xff] 0.0
      %43 = vst [vmem:[#allocation2 + $0xa0] sm:$0xff] 0.0
      %44 = vst [vmem:[#allocation2 + $0xa8] sm:$0xff] 0.0
      %45 = vst [vmem:[#allocation2 + $0xb0] sm:$0xff] 0.0
      %46 = vst [vmem:[#allocation2 + $0xb8] sm:$0xff] 0.0
      %47 = vst [vmem:[#allocation2 + $0xc0] sm:$0xff] 0.0
      %48 = vst [vmem:[#allocation2 + $0xc8] sm:$0xff] 0.0
      %49 = vst [vmem:[#allocation2 + $0xd0] sm:$0xff] 0.0
      %50 = vst [vmem:[#allocation2 + $0xd8] sm:$0xff] 0.0
      %51 = vst [vmem:[#allocation2 + $0xe0] sm:$0xff] 0.0
      %52 = vst [vmem:[#allocation2 + $0xe8] sm:$0xff] 0.0
      %53 = vst [vmem:[#allocation2 + $0xf0] sm:$0xff] 0.0
      %54 = vst [vmem:[#allocation2 + $0xf8] sm:$0xff] 0.0
      %55 = vst [vmem:[#allocation2 + $0x100] sm:$0xff] 0.0
      %56 = vst [vmem:[#allocation2 + $0x108] sm:$0xff] 0.0
      %57 = vst [vmem:[#allocation2 + $0x110] sm:$0xff] 0.0
      %58 = vst [vmem:[#allocation2 + $0x118] sm:$0xff] 0.0
      %59 = vst [vmem:[#allocation2 + $0x120] sm:$0xff] 0.0
      %60 = vst [vmem:[#allocation2 + $0x128] sm:$0xff] 0.0
      %61 = vst [vmem:[#allocation2 + $0x130] sm:$0xff] 0.0
      %62 = vst [vmem:[#allocation2 + $0x138] sm:$0xff] 0.0
      %63 = vst [vmem:[#allocation2 + $0x140] sm:$0xff] 0.0
      %64 = vst [vmem:[#allocation2 + $0x148] sm:$0xff] 0.0
      %65 = vst [vmem:[#allocation2 + $0x150] sm:$0xff] 0.0
      %66 = vst [vmem:[#allocation2 + $0x158] sm:$0xff] 0.0
      %67 = vst [vmem:[#allocation2 + $0x160] sm:$0xff] 0.0
      %68 = vst [vmem:[#allocation2 + $0x168] sm:$0xff] 0.0
      %69 = vst [vmem:[#allocation2 + $0x170] sm:$0xff] 0.0
      %70 = vst [vmem:[#allocation2 + $0x178] sm:$0xff] 0.0
      %71 = vst [vmem:[#allocation2 + $0x180] sm:$0xff] 0.0
      %72 = vst [vmem:[#allocation2 + $0x188] sm:$0xff] 0.0
      %73 = vst [vmem:[#allocation2 + $0x190] sm:$0xff] 0.0
      %74 = vst [vmem:[#allocation2 + $0x198] sm:$0xff] 0.0
      %75 = vst [vmem:[#allocation2 + $0x1a0] sm:$0xff] 0.0
      %76 = vst [vmem:[#allocation2 + $0x1a8] sm:$0xff] 0.0
      %77 = vst [vmem:[#allocation2 + $0x1b0] sm:$0xff] 0.0
      %78 = vst [vmem:[#allocation2 + $0x1b8] sm:$0xff] 0.0
      %79 = vst [vmem:[#allocation2 + $0x1c0] sm:$0xff] 0.0
      %80 = vst [vmem:[#allocation2 + $0x1c8] sm:$0xff] 0.0
      %81 = vst [vmem:[#allocation2 + $0x1d0] sm:$0xff] 0.0
      %82 = vst [vmem:[#allocation2 + $0x1d8] sm:$0xff] 0.0
      %83 = vst [vmem:[#allocation2 + $0x1e0] sm:$0xff] 0.0
      %84 = vst [vmem:[#allocation2 + $0x1e8] sm:$0xff] 0.0
      %85 = vst [vmem:[#allocation2 + $0x1f0] sm:$0xff] 0.0
      %86 = vst [vmem:[#allocation2 + $0x1f8] sm:$0xff] 0.0
      %87 = vst [vmem:[#allocation2 + $0x200] sm:$0xff] 0.0
      %88 = vst [vmem:[#allocation2 + $0x208] sm:$0xff] 0.0
      %89 = vst [vmem:[#allocation2 + $0x210] sm:$0xff] 0.0
      %90 = vst [vmem:[#allocation2 + $0x218] sm:$0xff] 0.0
      %91 = vst [vmem:[#allocation2 + $0x220] sm:$0xff] 0.0
      %92 = vst [vmem:[#allocation2 + $0x228] sm:$0xff] 0.0
      %93 = vst [vmem:[#allocation2 + $0x230] sm:$0xff] 0.0
      %94 = vst [vmem:[#allocation2 + $0x238] sm:$0xff] 0.0
      %95 = vst [vmem:[#allocation2 + $0x240] sm:$0xff] 0.0
      %96 = vst [vmem:[#allocation2 + $0x248] sm:$0xff] 0.0
      %97 = vst [vmem:[#allocation2 + $0x250] sm:$0xff] 0.0
      %98 = vst [vmem:[#allocation2 + $0x258] sm:$0xff] 0.0
      %99 = vst [vmem:[#allocation2 + $0x260] sm:$0xff] 0.0
      %100 = vst [vmem:[#allocation2 + $0x268] sm:$0xff] 0.0
      %101 = vst [vmem:[#allocation2 + $0x270] sm:$0xff] 0.0
      %102 = vst [vmem:[#allocation2 + $0x278] sm:$0xff] 0.0
      %103 = vst [vmem:[#allocation2 + $0x280] sm:$0xff] 0.0
      %104 = vst [vmem:[#allocation2 + $0x288] sm:$0xff] 0.0
      %105 = vst [vmem:[#allocation2 + $0x290] sm:$0xff] 0.0
      %106 = vst [vmem:[#allocation2 + $0x298] sm:$0xff] 0.0
      %107 = vst [vmem:[#allocation2 + $0x2a0] sm:$0xff] 0.0
      %108 = vst [vmem:[#allocation2 + $0x2a8] sm:$0xff] 0.0
      %109 = vst [vmem:[#allocation2 + $0x2b0] sm:$0xff] 0.0
      %110 = vst [vmem:[#allocation2 + $0x2b8] sm:$0xff] 0.0
      %111 = vst [vmem:[#allocation2 + $0x2c0] sm:$0xff] 0.0
      %112 = vst [vmem:[#allocation2 + $0x2c8] sm:$0xff] 0.0
      %113 = vst [vmem:[#allocation2 + $0x2d0] sm:$0xff] 0.0
      %114 = vst [vmem:[#allocation2 + $0x2d8] sm:$0xff] 0.0
      %115 = vst [vmem:[#allocation2 + $0x2e0] sm:$0xff] 0.0
      %116 = vst [vmem:[#allocation2 + $0x2e8] sm:$0xff] 0.0
      %117 = vst [vmem:[#allocation2 + $0x2f0] sm:$0xff] 0.0
      %118 = vst [vmem:[#allocation2 + $0x2f8] sm:$0xff] 0.0
      %119 = vst [vmem:[#allocation2 + $0x300] sm:$0xff] 0.0
      %120 = vst [vmem:[#allocation2 + $0x308] sm:$0xff] 0.0
      %121 = vst [vmem:[#allocation2 + $0x310] sm:$0xff] 0.0
      %122 = vst [vmem:[#allocation2 + $0x318] sm:$0xff] 0.0
      %123 = vst [vmem:[#allocation2 + $0x320] sm:$0xff] 0.0
      %124 = vst [vmem:[#allocation2 + $0x328] sm:$0xff] 0.0
      %125 = vst [vmem:[#allocation2 + $0x330] sm:$0xff] 0.0
      %126 = vst [vmem:[#allocation2 + $0x338] sm:$0xff] 0.0
      %127 = vst [vmem:[#allocation2 + $0x340] sm:$0xff] 0.0
      %128 = vst [vmem:[#allocation2 + $0x348] sm:$0xff] 0.0
      %129 = vst [vmem:[#allocation2 + $0x350] sm:$0xff] 0.0
      %130 = vst [vmem:[#allocation2 + $0x358] sm:$0xff] 0.0
      %131 = vst [vmem:[#allocation2 + $0x360] sm:$0xff] 0.0
      %132 = vst [vmem:[#allocation2 + $0x368] sm:$0xff] 0.0
      %133 = vst [vmem:[#allocation2 + $0x370] sm:$0xff] 0.0
      %134 = vst [vmem:[#allocation2 + $0x378] sm:$0xff] 0.0
      %135 = vst [vmem:[#allocation2 + $0x380] sm:$0xff] 0.0
      %136 = vst [vmem:[#allocation2 + $0x388] sm:$0xff] 0.0
      %137 = vst [vmem:[#allocation2 + $0x390] sm:$0xff] 0.0
      %138 = vst [vmem:[#allocation2 + $0x398] sm:$0xff] 0.0
      %139 = vst [vmem:[#allocation2 + $0x3a0] sm:$0xff] 0.0
      %140 = vst [vmem:[#allocation2 + $0x3a8] sm:$0xff] 0.0
      %141 = vst [vmem:[#allocation2 + $0x3b0] sm:$0xff] 0.0
      %142 = vst [vmem:[#allocation2 + $0x3b8] sm:$0xff] 0.0
      %143 = vst [vmem:[#allocation2 + $0x3c0] sm:$0xff] 0.0
      %144 = vst [vmem:[#allocation2 + $0x3c8] sm:$0xff] 0.0
      %145 = vst [vmem:[#allocation2 + $0x3d0] sm:$0xff] 0.0
      %146 = vst [vmem:[#allocation2 + $0x3d8] sm:$0xff] 0.0
      %147 = vst [vmem:[#allocation2 + $0x3e0] sm:$0xff] 0.0
      %148 = vst [vmem:[#allocation2 + $0x3e8] sm:$0xff] 0.0
      %149 = vst [vmem:[#allocation2 + $0x3f0] sm:$0xff] 0.0
      %150 = vst [vmem:[#allocation2 + $0x3f8] sm:$0xff] 0.0
      %151 = vst [vmem:[#allocation2 + $0x400] sm:$0xff] 0.0
      %152 = vst [vmem:[#allocation2 + $0x408] sm:$0xff] 0.0
      %153 = vst [vmem:[#allocation2 + $0x410] sm:$0xff] 0.0
      %154 = vst [vmem:[#allocation2 + $0x418] sm:$0xff] 0.0
      %155 = vst [vmem:[#allocation2 + $0x420] sm:$0xff] 0.0
      %156 = vst [vmem:[#allocation2 + $0x428] sm:$0xff] 0.0
      %157 = vst [vmem:[#allocation2 + $0x430] sm:$0xff] 0.0
      %158 = vst [vmem:[#allocation2 + $0x438] sm:$0xff] 0.0
      %159 = vst [vmem:[#allocation2 + $0x440] sm:$0xff] 0.0
      %160 = vst [vmem:[#allocation2 + $0x448] sm:$0xff] 0.0
      %161 = vst [vmem:[#allocation2 + $0x450] sm:$0xff] 0.0
      %162 = vst [vmem:[#allocation2 + $0x458] sm:$0xff] 0.0
      %163 = vst [vmem:[#allocation2 + $0x460] sm:$0xff] 0.0
      %164 = vst [vmem:[#allocation2 + $0x468] sm:$0xff] 0.0
      %165 = vst [vmem:[#allocation2 + $0x470] sm:$0xff] 0.0
      %166 = vst [vmem:[#allocation2 + $0x478] sm:$0xff] 0.0
      %167 = vst [vmem:[#allocation2 + $0x480] sm:$0xff] 0.0
      %168 = vst [vmem:[#allocation2 + $0x488] sm:$0xff] 0.0
      %169 = vst [vmem:[#allocation2 + $0x490] sm:$0xff] 0.0
      %170 = vst [vmem:[#allocation2 + $0x498] sm:$0xff] 0.0
      %171 = vst [vmem:[#allocation2 + $0x4a0] sm:$0xff] 0.0
      %172 = vst [vmem:[#allocation2 + $0x4a8] sm:$0xff] 0.0
      %173 = vst [vmem:[#allocation2 + $0x4b0] sm:$0xff] 0.0
      %174 = vst [vmem:[#allocation2 + $0x4b8] sm:$0xff] 0.0
      %175 = vst [vmem:[#allocation2 + $0x4c0] sm:$0xff] 0.0
      %176 = vst [vmem:[#allocation2 + $0x4c8] sm:$0xff] 0.0
      %177 = vst [vmem:[#allocation2 + $0x4d0] sm:$0xff] 0.0
      %178 = vst [vmem:[#allocation2 + $0x4d8] sm:$0xff] 0.0
      %179 = vst [vmem:[#allocation2 + $0x4e0] sm:$0xff] 0.0
      %180 = vst [vmem:[#allocation2 + $0x4e8] sm:$0xff] 0.0
      %181 = vst [vmem:[#allocation2 + $0x4f0] sm:$0xff] 0.0
      %182 = vst [vmem:[#allocation2 + $0x4f8] sm:$0xff] 0.0
      %183 = vst [vmem:[#allocation2 + $0x500] sm:$0xff] 0.0
      %184 = vst [vmem:[#allocation2 + $0x508] sm:$0xff] 0.0
      %185 = vst [vmem:[#allocation2 + $0x510] sm:$0xff] 0.0
      %186 = vst [vmem:[#allocation2 + $0x518] sm:$0xff] 0.0
      %187 = vst [vmem:[#allocation2 + $0x520] sm:$0xff] 0.0
      %188 = vst [vmem:[#allocation2 + $0x528] sm:$0xff] 0.0
      %189 = vst [vmem:[#allocation2 + $0x530] sm:$0xff] 0.0
      %190 = vst [vmem:[#allocation2 + $0x538] sm:$0xff] 0.0
      %191 = vst [vmem:[#allocation2 + $0x540] sm:$0xff] 0.0
      %192 = vst [vmem:[#allocation2 + $0x548] sm:$0xff] 0.0
      %193 = vst [vmem:[#allocation2 + $0x550] sm:$0xff] 0.0
      %194 = vst [vmem:[#allocation2 + $0x558] sm:$0xff] 0.0
      %195 = vst [vmem:[#allocation2 + $0x560] sm:$0xff] 0.0
      %196 = vst [vmem:[#allocation2 + $0x568] sm:$0xff] 0.0
      %197 = vst [vmem:[#allocation2 + $0x570] sm:$0xff] 0.0
      %198 = vst [vmem:[#allocation2 + $0x578] sm:$0xff] 0.0
      %199 = vst [vmem:[#allocation2 + $0x580] sm:$0xff] 0.0
      %200 = vst [vmem:[#allocation2 + $0x588] sm:$0xff] 0.0
      %201 = vst [vmem:[#allocation2 + $0x590] sm:$0xff] 0.0
      %202 = vst [vmem:[#allocation2 + $0x598] sm:$0xff] 0.0
      %203 = vst [vmem:[#allocation2 + $0x5a0] sm:$0xff] 0.0
      %204 = vst [vmem:[#allocation2 + $0x5a8] sm:$0xff] 0.0
      %205 = vst [vmem:[#allocation2 + $0x5b0] sm:$0xff] 0.0
      %206 = vst [vmem:[#allocation2 + $0x5b8] sm:$0xff] 0.0
      %207 = vst [vmem:[#allocation2 + $0x5c0] sm:$0xff] 0.0
      %208 = vst [vmem:[#allocation2 + $0x5c8] sm:$0xff] 0.0
      %209 = vst [vmem:[#allocation2 + $0x5d0] sm:$0xff] 0.0
      %210 = vst [vmem:[#allocation2 + $0x5d8] sm:$0xff] 0.0
      %211 = vst [vmem:[#allocation2 + $0x5e0] sm:$0xff] 0.0
      %212 = vst [vmem:[#allocation2 + $0x5e8] sm:$0xff] 0.0
      %213 = vst [vmem:[#allocation2 + $0x5f0] sm:$0xff] 0.0
      %214 = vst [vmem:[#allocation2 + $0x5f8] sm:$0xff] 0.0
    $region21: #{tpu_custom_call.1} parent=1 // pred_fallthru
      _
    %v215 = vld [vmem:[%s0] sm:$0xff]
    %v216 = vld [vmem:[%s0 + $0x8] sm:$0xff]
    %v217 = vld [vmem:[%s0 + $0x10] sm:$0xff]
    %v218 = vld [vmem:[%s0 + $0x18] sm:$0xff]
    %v219 = vld [vmem:[%s0 + $0x20] sm:$0xff]
    %v220 = vld [vmem:[%s0 + $0x28] sm:$0xff]
    %v221 = vld [vmem:[%s0 + $0x30] sm:$0xff]
    %v222 = vld [vmem:[%s0 + $0x38] sm:$0xff]
    %v223 = vld [vmem:[%s0 + $0x40] sm:$0xff]
    %v224 = vld [vmem:[%s0 + $0x48] sm:$0xff]
    %v225 = vld [vmem:[%s0 + $0x50] sm:$0xff]
    %v226 = vld [vmem:[%s0 + $0x58] sm:$0xff]
    %v227 = vld [vmem:[%s0 + $0x60] sm:$0xff]
    %v228 = vld [vmem:[%s0 + $0x68] sm:$0xff]
    %v229 = vld [vmem:[%s0 + $0x70] sm:$0xff]
    %v230 = vld [vmem:[%s0 + $0x78] sm:$0xff]
    %v231 = vld [vmem:[%s0 + $0x80] sm:$0xff]
    %v232 = vld [vmem:[%s0 + $0x88] sm:$0xff]
    %v233 = vld [vmem:[%s0 + $0x90] sm:$0xff]
    %v234 = vld [vmem:[%s0 + $0x98] sm:$0xff]
    %v235 = vld [vmem:[%s0 + $0xa0] sm:$0xff]
    %v236 = vld [vmem:[%s0 + $0xa8] sm:$0xff]
    %v237 = vld [vmem:[%s0 + $0xb0] sm:$0xff]
    %v238 = vld [vmem:[%s0 + $0xb8] sm:$0xff]
    %v239 = vld [vmem:[%s0 + $0xc0] sm:$0xff]
    %v240 = vld [vmem:[%s0 + $0xc8] sm:$0xff]
    %v241 = vld [vmem:[%s0 + $0xd0] sm:$0xff]
    %v242 = vld [vmem:[%s0 + $0xd8] sm:$0xff]
    %v243 = vld [vmem:[%s0 + $0xe0] sm:$0xff]
    %v244 = vld [vmem:[%s0 + $0xe8] sm:$0xff]
    %v245 = vld [vmem:[%s0 + $0xf0] sm:$0xff]
    %v246 = vld [vmem:[%s0 + $0xf8] sm:$0xff]
    %v247 = vld [vmem:[%s0 + $0x100] sm:$0xff]
    %v248 = vld [vmem:[%s0 + $0x108] sm:$0xff]
    %v249 = vld [vmem:[%s0 + $0x110] sm:$0xff]
    %v250 = vld [vmem:[%s0 + $0x118] sm:$0xff]
    %v251 = vld [vmem:[%s0 + $0x120] sm:$0xff]
    %v252 = vld [vmem:[%s0 + $0x128] sm:$0xff]
    %v253 = vld [vmem:[%s0 + $0x130] sm:$0xff]
    %v254 = vld [vmem:[%s0 + $0x138] sm:$0xff]
    %v255 = vld [vmem:[%s0 + $0x140] sm:$0xff]
    %v256 = vld [vmem:[%s0 + $0x148] sm:$0xff]
    %v257 = vld [vmem:[%s0 + $0x150] sm:$0xff]
    %v258 = vld [vmem:[%s0 + $0x158] sm:$0xff]
    %v259 = vld [vmem:[%s0 + $0x160] sm:$0xff]
    %v260 = vld [vmem:[%s0 + $0x168] sm:$0xff]
    %v261 = vld [vmem:[%s0 + $0x170] sm:$0xff]
    %v262 = vld [vmem:[%s0 + $0x178] sm:$0xff]
    %v263 = vld [vmem:[%s0 + $0x180] sm:$0xff]
    %v264 = vld [vmem:[%s0 + $0x188] sm:$0xff]
    %v265 = vld [vmem:[%s0 + $0x190] sm:$0xff]
    %v266 = vld [vmem:[%s0 + $0x198] sm:$0xff]
    %v267 = vld [vmem:[%s0 + $0x1a0] sm:$0xff]
    %v268 = vld [vmem:[%s0 + $0x1a8] sm:$0xff]
    %v269 = vld [vmem:[%s0 + $0x1b0] sm:$0xff]
    %v270 = vld [vmem:[%s0 + $0x1b8] sm:$0xff]
    %v271 = vld [vmem:[%s0 + $0x1c0] sm:$0xff]
    %v272 = vld [vmem:[%s0 + $0x1c8] sm:$0xff]
    %v273 = vld [vmem:[%s0 + $0x1d0] sm:$0xff]
    %v274 = vld [vmem:[%s0 + $0x1d8] sm:$0xff]
    %v275 = vld [vmem:[%s0 + $0x1e0] sm:$0xff]
    %v276 = vld [vmem:[%s0 + $0x1e8] sm:$0xff]
    %v277 = vld [vmem:[%s0 + $0x1f0] sm:$0xff]
    %v278 = vld [vmem:[%s0 + $0x1f8] sm:$0xff]
    %v279 = vld [vmem:[%s0 + $0x200] sm:$0xff]
    %v280 = vld [vmem:[%s0 + $0x208] sm:$0xff]
    %v281 = vld [vmem:[%s0 + $0x210] sm:$0xff]
    %v282 = vld [vmem:[%s0 + $0x218] sm:$0xff]
    %v283 = vld [vmem:[%s0 + $0x220] sm:$0xff]
    %v284 = vld [vmem:[%s0 + $0x228] sm:$0xff]
    %v285 = vld [vmem:[%s0 + $0x230] sm:$0xff]
    %v286 = vld [vmem:[%s0 + $0x238] sm:$0xff]
    %v287 = vld [vmem:[%s0 + $0x240] sm:$0xff]
    %v288 = vld [vmem:[%s0 + $0x248] sm:$0xff]
    %v289 = vld [vmem:[%s0 + $0x250] sm:$0xff]
    %v290 = vld [vmem:[%s0 + $0x258] sm:$0xff]
    %v291 = vld [vmem:[%s0 + $0x260] sm:$0xff]
    %v292 = vld [vmem:[%s0 + $0x268] sm:$0xff]
    %v293 = vld [vmem:[%s0 + $0x270] sm:$0xff]
    %v294 = vld [vmem:[%s0 + $0x278] sm:$0xff]
    %v295 = vld [vmem:[%s0 + $0x280] sm:$0xff]
    %v296 = vld [vmem:[%s0 + $0x288] sm:$0xff]
    %v297 = vld [vmem:[%s0 + $0x290] sm:$0xff]
    %v298 = vld [vmem:[%s0 + $0x298] sm:$0xff]
    %v299 = vld [vmem:[%s0 + $0x2a0] sm:$0xff]
    %v300 = vld [vmem:[%s0 + $0x2a8] sm:$0xff]
    %v301 = vld [vmem:[%s0 + $0x2b0] sm:$0xff]
    %v302 = vld [vmem:[%s0 + $0x2b8] sm:$0xff]
    %v303 = vld [vmem:[%s0 + $0x2c0] sm:$0xff]
    %v304 = vld [vmem:[%s0 + $0x2c8] sm:$0xff]
    %v305 = vld [vmem:[%s0 + $0x2d0] sm:$0xff]
    %v306 = vld [vmem:[%s0 + $0x2d8] sm:$0xff]
    %v307 = vld [vmem:[%s0 + $0x2e0] sm:$0xff]
    %v308 = vld [vmem:[%s0 + $0x2e8] sm:$0xff]
    %v309 = vld [vmem:[%s0 + $0x2f0] sm:$0xff]
    %v310 = vld [vmem:[%s0 + $0x2f8] sm:$0xff]
    %v311 = vld [vmem:[%s0 + $0x300] sm:$0xff]
    %v312 = vld [vmem:[%s0 + $0x308] sm:$0xff]
    %v313 = vld [vmem:[%s0 + $0x310] sm:$0xff]
    %v314 = vld [vmem:[%s0 + $0x318] sm:$0xff]
    %v315 = vld [vmem:[%s0 + $0x320] sm:$0xff]
    %v316 = vld [vmem:[%s0 + $0x328] sm:$0xff]
    %v317 = vld [vmem:[%s0 + $0x330] sm:$0xff]
    %v318 = vld [vmem:[%s0 + $0x338] sm:$0xff]
    %v319 = vld [vmem:[%s0 + $0x340] sm:$0xff]
    %v320 = vld [vmem:[%s0 + $0x348] sm:$0xff]
    %v321 = vld [vmem:[%s0 + $0x350] sm:$0xff]
    %v322 = vld [vmem:[%s0 + $0x358] sm:$0xff]
    %v323 = vld [vmem:[%s0 + $0x360] sm:$0xff]
    %v324 = vld [vmem:[%s0 + $0x368] sm:$0xff]
    %v325 = vld [vmem:[%s0 + $0x370] sm:$0xff]
    %v326 = vld [vmem:[%s0 + $0x378] sm:$0xff]
    %v327 = vld [vmem:[%s0 + $0x380] sm:$0xff]
    %v328 = vld [vmem:[%s0 + $0x388] sm:$0xff]
    %v329 = vld [vmem:[%s0 + $0x390] sm:$0xff]
    %v330 = vld [vmem:[%s0 + $0x398] sm:$0xff]
    %v331 = vld [vmem:[%s0 + $0x3a0] sm:$0xff]
    %v332 = vld [vmem:[%s0 + $0x3a8] sm:$0xff]
    %v333 = vld [vmem:[%s0 + $0x3b0] sm:$0xff]
    %v334 = vld [vmem:[%s0 + $0x3b8] sm:$0xff]
    %v335 = vld [vmem:[%s0 + $0x3c0] sm:$0xff]
    %v336 = vld [vmem:[%s0 + $0x3c8] sm:$0xff]
    %v337 = vld [vmem:[%s0 + $0x3d0] sm:$0xff]
    %v338 = vld [vmem:[%s0 + $0x3d8] sm:$0xff]
    %v339 = vld [vmem:[%s0 + $0x3e0] sm:$0xff]
    %v340 = vld [vmem:[%s0 + $0x3e8] sm:$0xff]
    %v341 = vld [vmem:[%s0 + $0x3f0] sm:$0xff]
    %v342 = vld [vmem:[%s0 + $0x3f8] sm:$0xff]
    %v343 = vld [vmem:[#allocation2] sm:$0xff]
    %v344 = vld [vmem:[#allocation2 + $0x8] sm:$0xff]
    %v345 = vld [vmem:[#allocation2 + $0x10] sm:$0xff]
    %v346 = vld [vmem:[#allocation2 + $0x18] sm:$0xff]
    %v347 = vld [vmem:[#allocation2 + $0x20] sm:$0xff]
    %v348 = vld [vmem:[#allocation2 + $0x28] sm:$0xff]
    %v349 = vld [vmem:[#allocation2 + $0x30] sm:$0xff]
    %v350 = vld [vmem:[#allocation2 + $0x38] sm:$0xff]
    %v351 = vld [vmem:[#allocation2 + $0x40] sm:$0xff]
    %v352 = vld [vmem:[#allocation2 + $0x48] sm:$0xff]
    %v353 = vld [vmem:[#allocation2 + $0x50] sm:$0xff]
    %v354 = vld [vmem:[#allocation2 + $0x58] sm:$0xff]
    %v355 = vld [vmem:[#allocation2 + $0x60] sm:$0xff]
    %v356 = vld [vmem:[#allocation2 + $0x68] sm:$0xff]
    %v357 = vld [vmem:[#allocation2 + $0x70] sm:$0xff]
    %v358 = vld [vmem:[#allocation2 + $0x78] sm:$0xff]
    %v359 = vld [vmem:[#allocation2 + $0x80] sm:$0xff]
    %v360 = vld [vmem:[#allocation2 + $0x88] sm:$0xff]
    %v361 = vld [vmem:[#allocation2 + $0x90] sm:$0xff]
    %v362 = vld [vmem:[#allocation2 + $0x98] sm:$0xff]
    %v363 = vld [vmem:[#allocation2 + $0xa0] sm:$0xff]
    %v364 = vld [vmem:[#allocation2 + $0xa8] sm:$0xff]
    %v365 = vld [vmem:[#allocation2 + $0xb0] sm:$0xff]
    %v366 = vld [vmem:[#allocation2 + $0xb8] sm:$0xff]
    %v367 = vld [vmem:[#allocation2 + $0xc0] sm:$0xff]
    %v368 = vld [vmem:[#allocation2 + $0xc8] sm:$0xff]
    %v369 = vld [vmem:[#allocation2 + $0xd0] sm:$0xff]
    %v370 = vld [vmem:[#allocation2 + $0xd8] sm:$0xff]
    %v371 = vld [vmem:[#allocation2 + $0xe0] sm:$0xff]
    %v372 = vld [vmem:[#allocation2 + $0xe8] sm:$0xff]
    %v373 = vld [vmem:[#allocation2 + $0xf0] sm:$0xff]
    %v374 = vld [vmem:[#allocation2 + $0xf8] sm:$0xff]
    %v375 = vld [vmem:[#allocation2 + $0x100] sm:$0xff]
    %v376 = vld [vmem:[#allocation2 + $0x108] sm:$0xff]
    %v377 = vld [vmem:[#allocation2 + $0x110] sm:$0xff]
    %v378 = vld [vmem:[#allocation2 + $0x118] sm:$0xff]
    %v379 = vld [vmem:[#allocation2 + $0x120] sm:$0xff]
    %v380 = vld [vmem:[#allocation2 + $0x128] sm:$0xff]
    %v381 = vld [vmem:[#allocation2 + $0x130] sm:$0xff]
    %v382 = vld [vmem:[#allocation2 + $0x138] sm:$0xff]
    %v383 = vld [vmem:[#allocation2 + $0x140] sm:$0xff]
    %v384 = vld [vmem:[#allocation2 + $0x148] sm:$0xff]
    %v385 = vld [vmem:[#allocation2 + $0x150] sm:$0xff]
    %v386 = vld [vmem:[#allocation2 + $0x158] sm:$0xff]
    %v387 = vld [vmem:[#allocation2 + $0x160] sm:$0xff]
    %v388 = vld [vmem:[#allocation2 + $0x168] sm:$0xff]
    %v389 = vld [vmem:[#allocation2 + $0x170] sm:$0xff]
    %v390 = vld [vmem:[#allocation2 + $0x178] sm:$0xff]
    %v391 = vld [vmem:[#allocation2 + $0x180] sm:$0xff]
    %v392 = vld [vmem:[#allocation2 + $0x188] sm:$0xff]
    %v393 = vld [vmem:[#allocation2 + $0x190] sm:$0xff]
    %v394 = vld [vmem:[#allocation2 + $0x198] sm:$0xff]
    %v395 = vld [vmem:[#allocation2 + $0x1a0] sm:$0xff]
    %v396 = vld [vmem:[#allocation2 + $0x1a8] sm:$0xff]
    %v397 = vld [vmem:[#allocation2 + $0x1b0] sm:$0xff]
    %v398 = vld [vmem:[#allocation2 + $0x1b8] sm:$0xff]
    %v399 = vld [vmem:[#allocation2 + $0x1c0] sm:$0xff]
    %v400 = vld [vmem:[#allocation2 + $0x1c8] sm:$0xff]
    %v401 = vld [vmem:[#allocation2 + $0x1d0] sm:$0xff]
    %v402 = vld [vmem:[#allocation2 + $0x1d8] sm:$0xff]
    %v403 = vld [vmem:[#allocation2 + $0x1e0] sm:$0xff]
    %v404 = vld [vmem:[#allocation2 + $0x1e8] sm:$0xff]
    %v405 = vld [vmem:[#allocation2 + $0x1f0] sm:$0xff]
    %v406 = vld [vmem:[#allocation2 + $0x1f8] sm:$0xff]
    %v407 = vld [vmem:[#allocation2 + $0x200] sm:$0xff]
    %v408 = vld [vmem:[#allocation2 + $0x208] sm:$0xff]
    %v409 = vld [vmem:[#allocation2 + $0x210] sm:$0xff]
    %v410 = vld [vmem:[#allocation2 + $0x218] sm:$0xff]
    %v411 = vld [vmem:[#allocation2 + $0x220] sm:$0xff]
    %v412 = vld [vmem:[#allocation2 + $0x228] sm:$0xff]
    %v413 = vld [vmem:[#allocation2 + $0x230] sm:$0xff]
    %v414 = vld [vmem:[#allocation2 + $0x238] sm:$0xff]
    %v415 = vld [vmem:[#allocation2 + $0x240] sm:$0xff]
    %v416 = vld [vmem:[#allocation2 + $0x248] sm:$0xff]
    %v417 = vld [vmem:[#allocation2 + $0x250] sm:$0xff]
    %v418 = vld [vmem:[#allocation2 + $0x258] sm:$0xff]
    %v419 = vld [vmem:[#allocation2 + $0x260] sm:$0xff]
    %v420 = vld [vmem:[#allocation2 + $0x268] sm:$0xff]
    %v421 = vld [vmem:[#allocation2 + $0x270] sm:$0xff]
    %v422 = vld [vmem:[#allocation2 + $0x278] sm:$0xff]
    %v423 = vld [vmem:[#allocation2 + $0x280] sm:$0xff]
    %v424 = vld [vmem:[#allocation2 + $0x288] sm:$0xff]
    %v425 = vld [vmem:[#allocation2 + $0x290] sm:$0xff]
    %v426 = vld [vmem:[#allocation2 + $0x298] sm:$0xff]
    %v427 = vld [vmem:[#allocation2 + $0x2a0] sm:$0xff]
    %v428 = vld [vmem:[#allocation2 + $0x2a8] sm:$0xff]
    %v429 = vld [vmem:[#allocation2 + $0x2b0] sm:$0xff]
    %v430 = vld [vmem:[#allocation2 + $0x2b8] sm:$0xff]
    %v431 = vld [vmem:[#allocation2 + $0x2c0] sm:$0xff]
    %v432 = vld [vmem:[#allocation2 + $0x2c8] sm:$0xff]
    %v433 = vld [vmem:[#allocation2 + $0x2d0] sm:$0xff]
    %v434 = vld [vmem:[#allocation2 + $0x2d8] sm:$0xff]
    %v435 = vld [vmem:[#allocation2 + $0x2e0] sm:$0xff]
    %v436 = vld [vmem:[#allocation2 + $0x2e8] sm:$0xff]
    %v437 = vld [vmem:[#allocation2 + $0x2f0] sm:$0xff]
    %v438 = vld [vmem:[#allocation2 + $0x2f8] sm:$0xff]
    %v439 = vld [vmem:[#allocation2 + $0x300] sm:$0xff]
    %v440 = vld [vmem:[#allocation2 + $0x308] sm:$0xff]
    %v441 = vld [vmem:[#allocation2 + $0x310] sm:$0xff]
    %v442 = vld [vmem:[#allocation2 + $0x318] sm:$0xff]
    %v443 = vld [vmem:[#allocation2 + $0x320] sm:$0xff]
    %v444 = vld [vmem:[#allocation2 + $0x328] sm:$0xff]
    %v445 = vld [vmem:[#allocation2 + $0x330] sm:$0xff]
    %v446 = vld [vmem:[#allocation2 + $0x338] sm:$0xff]
    %v447 = vld [vmem:[#allocation2 + $0x340] sm:$0xff]
    %v448 = vld [vmem:[#allocation2 + $0x348] sm:$0xff]
    %v449 = vld [vmem:[#allocation2 + $0x350] sm:$0xff]
    %v450 = vld [vmem:[#allocation2 + $0x358] sm:$0xff]
    %v451 = vld [vmem:[#allocation2 + $0x360] sm:$0xff]
    %v452 = vld [vmem:[#allocation2 + $0x368] sm:$0xff]
    %v453 = vld [vmem:[#allocation2 + $0x370] sm:$0xff]
    %v454 = vld [vmem:[#allocation2 + $0x378] sm:$0xff]
    %v455 = vld [vmem:[#allocation2 + $0x380] sm:$0xff]
    %v456 = vld [vmem:[#allocation2 + $0x388] sm:$0xff]
    %v457 = vld [vmem:[#allocation2 + $0x390] sm:$0xff]
    %v458 = vld [vmem:[#allocation2 + $0x398] sm:$0xff]
    %v459 = vld [vmem:[#allocation2 + $0x3a0] sm:$0xff]
    %v460 = vld [vmem:[#allocation2 + $0x3a8] sm:$0xff]
    %v461 = vld [vmem:[#allocation2 + $0x3b0] sm:$0xff]
    %v462 = vld [vmem:[#allocation2 + $0x3b8] sm:$0xff]
    %v463 = vld [vmem:[#allocation2 + $0x3c0] sm:$0xff]
    %v464 = vld [vmem:[#allocation2 + $0x3c8] sm:$0xff]
    %v465 = vld [vmem:[#allocation2 + $0x3d0] sm:$0xff]
    %v466 = vld [vmem:[#allocation2 + $0x3d8] sm:$0xff]
    %v467 = vld [vmem:[#allocation2 + $0x3e0] sm:$0xff]
    %v468 = vld [vmem:[#allocation2 + $0x3e8] sm:$0xff]
    %v469 = vld [vmem:[#allocation2 + $0x3f0] sm:$0xff]
    %v470 = vld [vmem:[#allocation2 + $0x3f8] sm:$0xff]
    %v471 = vld [vmem:[#allocation2 + $0x400] sm:$0xff]
    %v472 = vld [vmem:[#allocation2 + $0x408] sm:$0xff]
    %v473 = vld [vmem:[#allocation2 + $0x410] sm:$0xff]
    %v474 = vld [vmem:[#allocation2 + $0x418] sm:$0xff]
    %v475 = vld [vmem:[#allocation2 + $0x420] sm:$0xff]
    %v476 = vld [vmem:[#allocation2 + $0x428] sm:$0xff]
    %v477 = vld [vmem:[#allocation2 + $0x430] sm:$0xff]
    %v478 = vld [vmem:[#allocation2 + $0x438] sm:$0xff]
    %v479 = vld [vmem:[#allocation2 + $0x440] sm:$0xff]
    %v480 = vld [vmem:[#allocation2 + $0x448] sm:$0xff]
    %v481 = vld [vmem:[#allocation2 + $0x450] sm:$0xff]
    %v482 = vld [vmem:[#allocation2 + $0x458] sm:$0xff]
    %v483 = vld [vmem:[#allocation2 + $0x460] sm:$0xff]
    %v484 = vld [vmem:[#allocation2 + $0x468] sm:$0xff]
    %v485 = vld [vmem:[#allocation2 + $0x470] sm:$0xff]
    %v486 = vld [vmem:[#allocation2 + $0x478] sm:$0xff]
    %v487 = vld [vmem:[#allocation2 + $0x480] sm:$0xff]
    %v488 = vld [vmem:[#allocation2 + $0x488] sm:$0xff]
    %v489 = vld [vmem:[#allocation2 + $0x490] sm:$0xff]
    %v490 = vld [vmem:[#allocation2 + $0x498] sm:$0xff]
    %v491 = vld [vmem:[#allocation2 + $0x4a0] sm:$0xff]
    %v492 = vld [vmem:[#allocation2 + $0x4a8] sm:$0xff]
    %v493 = vld [vmem:[#allocation2 + $0x4b0] sm:$0xff]
    %v494 = vld [vmem:[#allocation2 + $0x4b8] sm:$0xff]
    %v495 = vld [vmem:[#allocation2 + $0x4c0] sm:$0xff]
    %v496 = vld [vmem:[#allocation2 + $0x4c8] sm:$0xff]
    %v497 = vld [vmem:[#allocation2 + $0x4d0] sm:$0xff]
    %v498 = vld [vmem:[#allocation2 + $0x4d8] sm:$0xff]
    %v499 = vld [vmem:[#allocation2 + $0x4e0] sm:$0xff]
    %v500 = vld [vmem:[#allocation2 + $0x4e8] sm:$0xff]
    %v501 = vld [vmem:[#allocation2 + $0x4f0] sm:$0xff]
    %v502 = vld [vmem:[#allocation2 + $0x4f8] sm:$0xff]
    %v503 = vld [vmem:[#allocation2 + $0x500] sm:$0xff]
    %v504 = vld [vmem:[#allocation2 + $0x508] sm:$0xff]
    %v505 = vld [vmem:[#allocation2 + $0x510] sm:$0xff]
    %v506 = vld [vmem:[#allocation2 + $0x518] sm:$0xff]
    %v507 = vld [vmem:[#allocation2 + $0x520] sm:$0xff]
    %v508 = vld [vmem:[#allocation2 + $0x528] sm:$0xff]
    %v509 = vld [vmem:[#allocation2 + $0x530] sm:$0xff]
    %v510 = vld [vmem:[#allocation2 + $0x538] sm:$0xff]
    %v511 = vld [vmem:[#allocation2 + $0x540] sm:$0xff]
    %v512 = vld [vmem:[#allocation2 + $0x548] sm:$0xff]
    %v513 = vld [vmem:[#allocation2 + $0x550] sm:$0xff]
    %v514 = vld [vmem:[#allocation2 + $0x558] sm:$0xff]
    %v515 = vld [vmem:[#allocation2 + $0x560] sm:$0xff]
    %v516 = vld [vmem:[#allocation2 + $0x568] sm:$0xff]
    %v517 = vld [vmem:[#allocation2 + $0x570] sm:$0xff]
    %v518 = vld [vmem:[#allocation2 + $0x578] sm:$0xff]
    %v519 = vld [vmem:[#allocation2 + $0x580] sm:$0xff]
    %v520 = vld [vmem:[#allocation2 + $0x588] sm:$0xff]
    %v521 = vld [vmem:[#allocation2 + $0x590] sm:$0xff]
    %v522 = vld [vmem:[#allocation2 + $0x598] sm:$0xff]
    %v523 = vld [vmem:[#allocation2 + $0x5a0] sm:$0xff]
    %v524 = vld [vmem:[#allocation2 + $0x5a8] sm:$0xff]
    %v525 = vld [vmem:[#allocation2 + $0x5b0] sm:$0xff]
    %v526 = vld [vmem:[#allocation2 + $0x5b8] sm:$0xff]
    %v527 = vld [vmem:[#allocation2 + $0x5c0] sm:$0xff]
    %v528 = vld [vmem:[#allocation2 + $0x5c8] sm:$0xff]
    %v529 = vld [vmem:[#allocation2 + $0x5d0] sm:$0xff]
    %v530 = vld [vmem:[#allocation2 + $0x5d8] sm:$0xff]
    %v531 = vld [vmem:[#allocation2 + $0x5e0] sm:$0xff]
    %v532 = vld [vmem:[#allocation2 + $0x5e8] sm:$0xff]
    %v533 = vld [vmem:[#allocation2 + $0x5f0] sm:$0xff]
    %v534 = vld [vmem:[#allocation2 + $0x5f8] sm:$0xff]
    %v535 = vpack.c.bf16 %v217, %v215
    %v536 = vpack.c.bf16 %v218, %v216
    %v537 = vpack.c.bf16 %v221, %v219
    %v538 = vpack.c.bf16 %v222, %v220
    %v539 = vpack.c.bf16 %v225, %v223
    %v540 = vpack.c.bf16 %v226, %v224
    %v541 = vpack.c.bf16 %v229, %v227
    %v542 = vpack.c.bf16 %v230, %v228
    %v543 = vpack.c.bf16 %v233, %v231
    %v544 = vpack.c.bf16 %v234, %v232
    %v545 = vpack.c.bf16 %v237, %v235
    %v546 = vpack.c.bf16 %v238, %v236
    %v547 = vpack.c.bf16 %v241, %v239
    %v548 = vpack.c.bf16 %v242, %v240
    %v549 = vpack.c.bf16 %v245, %v243
    %v550 = vpack.c.bf16 %v246, %v244
    %v551 = vpack.c.bf16 %v249, %v247
    %v552 = vpack.c.bf16 %v250, %v248
    %v553 = vpack.c.bf16 %v253, %v251
    %v554 = vpack.c.bf16 %v254, %v252
    %v555 = vpack.c.bf16 %v257, %v255
    %v556 = vpack.c.bf16 %v258, %v256
    %v557 = vpack.c.bf16 %v261, %v259
    %v558 = vpack.c.bf16 %v262, %v260
    %v559 = vpack.c.bf16 %v265, %v263
    %v560 = vpack.c.bf16 %v266, %v264
    %v561 = vpack.c.bf16 %v269, %v267
    %v562 = vpack.c.bf16 %v270, %v268
    %v563 = vpack.c.bf16 %v273, %v271
    %v564 = vpack.c.bf16 %v274, %v272
    %v565 = vpack.c.bf16 %v277, %v275
    %v566 = vpack.c.bf16 %v278, %v276
    %v567 = vpack.c.bf16 %v281, %v279
    %v568 = vpack.c.bf16 %v282, %v280
    %v569 = vpack.c.bf16 %v285, %v283
    %v570 = vpack.c.bf16 %v286, %v284
    %v571 = vpack.c.bf16 %v289, %v287
    %v572 = vpack.c.bf16 %v290, %v288
    %v573 = vpack.c.bf16 %v293, %v291
    %v574 = vpack.c.bf16 %v294, %v292
    %v575 = vpack.c.bf16 %v297, %v295
    %v576 = vpack.c.bf16 %v298, %v296
    %v577 = vpack.c.bf16 %v301, %v299
    %v578 = vpack.c.bf16 %v302, %v300
    %v579 = vpack.c.bf16 %v305, %v303
    %v580 = vpack.c.bf16 %v306, %v304
    %v581 = vpack.c.bf16 %v309, %v307
    %v582 = vpack.c.bf16 %v310, %v308
    %v583 = vpack.c.bf16 %v313, %v311
    %v584 = vpack.c.bf16 %v314, %v312
    %v585 = vpack.c.bf16 %v317, %v315
    %v586 = vpack.c.bf16 %v318, %v316
    %v587 = vpack.c.bf16 %v321, %v319
    %v588 = vpack.c.bf16 %v322, %v320
    %v589 = vpack.c.bf16 %v325, %v323
    %v590 = vpack.c.bf16 %v326, %v324
    %v591 = vpack.c.bf16 %v329, %v327
    %v592 = vpack.c.bf16 %v330, %v328
    %v593 = vpack.c.bf16 %v333, %v331
    %v594 = vpack.c.bf16 %v334, %v332
    %v595 = vpack.c.bf16 %v337, %v335
    %v596 = vpack.c.bf16 %v338, %v336
    %v597 = vpack.c.bf16 %v341, %v339
    %v598 = vpack.c.bf16 %v342, %v340
    %v599 = vld [vmem:[%s1] sm:$0xff]
    %v600 = vld [vmem:[%s1 + $0x8] sm:$0xf]
    %v601 = vld [vmem:[%s1 + $0xc] sm:$0xff]
    %v602 = vld [vmem:[%s1 + $0x14] sm:$0xf]
    %v603 = vld [vmem:[%s1 + $0x18] sm:$0xff]
    %v604 = vld [vmem:[%s1 + $0x20] sm:$0xf]
    %v605 = vld [vmem:[%s1 + $0x24] sm:$0xff]
    %v606 = vld [vmem:[%s1 + $0x2c] sm:$0xf]
    %v607 = vld [vmem:[%s1 + $0x30] sm:$0xff]
    %v608 = vld [vmem:[%s1 + $0x38] sm:$0xf]
    %v609 = vld [vmem:[%s1 + $0x3c] sm:$0xff]
    %v610 = vld [vmem:[%s1 + $0x44] sm:$0xf]
    %v611 = vld [vmem:[%s1 + $0x48] sm:$0xff]
    %v612 = vld [vmem:[%s1 + $0x50] sm:$0xf]
    %v613 = vld [vmem:[%s1 + $0x54] sm:$0xff]
    %v614 = vld [vmem:[%s1 + $0x5c] sm:$0xf]
    %v615 = vld [vmem:[%s1 + $0x60] sm:$0xff]
    %v616 = vld [vmem:[%s1 + $0x68] sm:$0xf]
    %v617 = vld [vmem:[%s1 + $0x6c] sm:$0xff]
    %v618 = vld [vmem:[%s1 + $0x74] sm:$0xf]
    %v619 = vld [vmem:[%s1 + $0x78] sm:$0xff]
    %v620 = vld [vmem:[%s1 + $0x80] sm:$0xf]
    %v621 = vld [vmem:[%s1 + $0x84] sm:$0xff]
    %v622 = vld [vmem:[%s1 + $0x8c] sm:$0xf]
    %v623 = vld [vmem:[%s1 + $0x90] sm:$0xff]
    %v624 = vld [vmem:[%s1 + $0x98] sm:$0xf]
    %v625 = vld [vmem:[%s1 + $0x9c] sm:$0xff]
    %v626 = vld [vmem:[%s1 + $0xa4] sm:$0xf]
    %v627 = vld [vmem:[%s1 + $0xa8] sm:$0xff]
    %v628 = vld [vmem:[%s1 + $0xb0] sm:$0xf]
    %v629 = vld [vmem:[%s1 + $0xb4] sm:$0xff]
    %v630 = vld [vmem:[%s1 + $0xbc] sm:$0xf]
    %v631 = vld [vmem:[%s1 + $0xc0] sm:$0xff]
    %v632 = vld [vmem:[%s1 + $0xc8] sm:$0xf]
    %v633 = vld [vmem:[%s1 + $0xcc] sm:$0xff]
    %v634 = vld [vmem:[%s1 + $0xd4] sm:$0xf]
    %v635 = vld [vmem:[%s1 + $0xd8] sm:$0x33]
    %v636 = vld [vmem:[%s1 + $0xe0] sm:$0x3]
    %v675 = vunpack.c.l.b16 %v599
    %v676 = vunpack.c.h.b16 %v599
    %v677 = vunpack.c.l.b16 %v600
    %v678 = vunpack.c.l.b16 %v601
    %v679 = vunpack.c.h.b16 %v601
    %v680 = vunpack.c.l.b16 %v602
    %v681 = vunpack.c.l.b16 %v603
    %v682 = vunpack.c.h.b16 %v603
    %v683 = vunpack.c.l.b16 %v604
    %v684 = vunpack.c.l.b16 %v605
    %v685 = vunpack.c.h.b16 %v605
    %v686 = vunpack.c.l.b16 %v606
    %v687 = vunpack.c.l.b16 %v607
    %v688 = vunpack.c.h.b16 %v607
    %v689 = vunpack.c.l.b16 %v608
    %v690 = vunpack.c.l.b16 %v609
    %v691 = vunpack.c.h.b16 %v609
    %v692 = vunpack.c.l.b16 %v610
    %v693 = vunpack.c.l.b16 %v611
    %v694 = vunpack.c.h.b16 %v611
    %v695 = vunpack.c.l.b16 %v612
    %v696 = vunpack.c.l.b16 %v613
    %v697 = vunpack.c.h.b16 %v613
    %v698 = vunpack.c.l.b16 %v614
    %v699 = vunpack.c.l.b16 %v615
    %v700 = vunpack.c.h.b16 %v615
    %v701 = vunpack.c.l.b16 %v616
    %v702 = vunpack.c.l.b16 %v617
    %v703 = vunpack.c.h.b16 %v617
    %v704 = vunpack.c.l.b16 %v618
    %v705 = vunpack.c.l.b16 %v619
    %v706 = vunpack.c.h.b16 %v619
    %v707 = vunpack.c.l.b16 %v620
    %v708 = vunpack.c.l.b16 %v621
    %v709 = vunpack.c.h.b16 %v621
    %v710 = vunpack.c.l.b16 %v622
    %v711 = vunpack.c.l.b16 %v623
    %v712 = vunpack.c.h.b16 %v623
    %v713 = vunpack.c.l.b16 %v624
    %v714 = vunpack.c.l.b16 %v625
    %v715 = vunpack.c.h.b16 %v625
    %v716 = vunpack.c.l.b16 %v626
    %v717 = vunpack.c.l.b16 %v627
    %v718 = vunpack.c.h.b16 %v627
    %v719 = vunpack.c.l.b16 %v628
    %v720 = vunpack.c.l.b16 %v629
    %v721 = vunpack.c.h.b16 %v629
    %v722 = vunpack.c.l.b16 %v630
    %v723 = vunpack.c.l.b16 %v631
    %v724 = vunpack.c.h.b16 %v631
    %v725 = vunpack.c.l.b16 %v632
    %v726 = vunpack.c.l.b16 %v633
    %v727 = vunpack.c.h.b16 %v633
    %v728 = vunpack.c.l.b16 %v634
    %v729 = vunpack.c.l.b16 %v635
    %v730 = vunpack.c.h.b16 %v635
    %v731 = vunpack.c.l.b16 %v636
    %v732 = vpack.c.b16 %v678, %v675
    %v733 = vpack.c.b16 %v679, %v676
    %v734 = vpack.c.b16 %v680, %v677
    %v735 = vpack.c.b16 %v684, %v681
    %v736 = vpack.c.b16 %v685, %v682
    %v737 = vpack.c.b16 %v686, %v683
    %v738 = vpack.c.b16 %v690, %v687
    %v739 = vpack.c.b16 %v691, %v688
    %v740 = vpack.c.b16 %v692, %v689
    %v741 = vpack.c.b16 %v696, %v693
    %v742 = vpack.c.b16 %v697, %v694
    %v743 = vpack.c.b16 %v698, %v695
    %v744 = vpack.c.b16 %v702, %v699
    %v745 = vpack.c.b16 %v703, %v700
    %v746 = vpack.c.b16 %v704, %v701
    %v747 = vpack.c.b16 %v708, %v705
    %v748 = vpack.c.b16 %v709, %v706
    %v749 = vpack.c.b16 %v710, %v707
    %v750 = vpack.c.b16 %v714, %v711
    %v751 = vpack.c.b16 %v715, %v712
    %v752 = vpack.c.b16 %v716, %v713
    %v753 = vpack.c.b16 %v720, %v717
    %v754 = vpack.c.b16 %v721, %v718
    %v755 = vpack.c.b16 %v722, %v719
    %v756 = vpack.c.b16 %v726, %v723
    %v757 = vpack.c.b16 %v727, %v724
    %v758 = vpack.c.b16 %v728, %v725
    %v759 = vpack.c.b16 %v729, %v729
    %v760 = vpack.c.b16 %v730, %v730
    %v761 = vpack.c.b16 %v731, %v731
    %vm789 = vcmask 154624
    %v791 = vsel %vm789, %v536, 0
    %v794 = vsel %vm789, %v538, 0
    %v797 = vsel %vm789, %v540, 0
    %v800 = vsel %vm789, %v542, 0
    %v803 = vsel %vm789, %v544, 0
    %v806 = vsel %vm789, %v546, 0
    %v809 = vsel %vm789, %v548, 0
    %v812 = vsel %vm789, %v550, 0
    %v815 = vsel %vm789, %v552, 0
    %v818 = vsel %vm789, %v554, 0
    %v821 = vsel %vm789, %v556, 0
    %v824 = vsel %vm789, %v558, 0
    %v827 = vsel %vm789, %v560, 0
    %v830 = vsel %vm789, %v562, 0
    %v833 = vsel %vm789, %v564, 0
    %v836 = vsel %vm789, %v566, 0
    %v839 = vsel %vm789, %v568, 0
    %v842 = vsel %vm789, %v570, 0
    %v845 = vsel %vm789, %v572, 0
    %v848 = vsel %vm789, %v574, 0
    %v851 = vsel %vm789, %v576, 0
    %v854 = vsel %vm789, %v578, 0
    %v857 = vsel %vm789, %v580, 0
    %v860 = vsel %vm789, %v582, 0
    %v863 = vsel %vm789, %v584, 0
    %v866 = vsel %vm789, %v586, 0
    %v869 = vsel %vm789, %v588, 0
    %v872 = vsel %vm789, %v590, 0
    %v875 = vsel %vm789, %v592, 0
    %v878 = vsel %vm789, %v594, 0
    %v881 = vsel %vm789, %v596, 0
    %v884 = vsel %vm789, %v598, 0
    %vm886 = vcmask 1040384
    %vm887 = vcmask 1041408
    %v888 = vsel %vm886, 4294967295, 65535
    %v889 = vsel %vm887, %v888, 0
    %v891 = vand.u32 %v759, %v889
    %v894 = vand.u32 %v760, %v889
    %v897 = vand.u32 %v761, %v889
    %899 = vmatprep.subr.bf16.mxu0 %v754
    %900 = vmatpush1.bf16.msra.mxu0 %v753
    %901 = vmatprep.subr.bf16.mxu0 %v751
    %902 = vmatpush1.bf16.msra.mxu0 %v750
    %903 = vmatprep.subr.bf16.mxu0 %v748
    %904 = vmatpush1.bf16.msra.mxu0 %v747
    %905 = vmatprep.subr.bf16.mxu0 %v745
    %906 = vmatpush1.bf16.msra.mxu0 %v744
    %907 = vmatprep.subr.bf16.mxu0 %v742
    %908 = vmatpush1.bf16.msra.mxu0 %v741
    %909 = vmatprep.subr.bf16.mxu0 %v739
    %910 = vmatpush1.bf16.msra.mxu0 %v738
    %911 = vmatprep.subr.bf16.mxu0 %v736
    %912 = vmatpush1.bf16.msra.mxu0 %v735
    %913 = vmatprep.subr.bf16.mxu0 %v733
    %914 = vmatpush1.bf16.msra.mxu0 %v732
    %915 = vmatprep.subr.bf16.mxu0 0
    %916 = vmatpush2.bf16.msra.mxu0 0
    %917 = vmatprep.subr.bf16.mxu0 0
    %918 = vmatpush2.bf16.msra.mxu0 0
    %919 = vmatprep.subr.bf16.mxu0 0
    %920 = vmatpush2.bf16.msra.mxu0 0
    %921 = vmatprep.subr.bf16.mxu0 0
    %922 = vmatpush2.bf16.msra.mxu0 0
    %923 = vmatprep.subr.bf16.mxu0 0
    %924 = vmatpush2.bf16.msra.mxu0 0
    %925 = vmatprep.subr.bf16.mxu0 0
    %926 = vmatpush2.bf16.msra.mxu0 0
    %927 = vmatprep.subr.bf16.mxu0 %v894
    %928 = vmatpush2.bf16.msra.mxu0 %v891
    %929 = vmatprep.subr.bf16.mxu0 %v757
    %930 = vmatpush2.bf16.msra.mxu0 %v756
    %931 = vmatprep.mubr.bf16.mxu0 %v791
    %932 = vmatmul.mubr.bf16.gmra.mxu0 %v535
    %v933 = vpop.f32.mrf.mxu0
    %v934 = vadd.f32 0.0, %v933
    %v935 = vpop.f32.mrf.mxu0
    %v936 = vadd.f32 0.0, %v935
    %v937 = vpop.f32.mrf.mxu0
    %v938 = vadd.f32 0.0, %v937
    %v939 = vpop.f32.mrf.mxu0
    %v940 = vadd.f32 0.0, %v939
    %941 = vmatprep.mubr.bf16.mxu0 %v794
    %942 = vmatmul.mubr.bf16.gmra.mxu0 %v537
    %v943 = vpop.f32.mrf.mxu0
    %v944 = vadd.f32 0.0, %v943
    %v945 = vpop.f32.mrf.mxu0
    %v946 = vadd.f32 0.0, %v945
    %v947 = vpop.f32.mrf.mxu0
    %v948 = vadd.f32 0.0, %v947
    %v949 = vpop.f32.mrf.mxu0
    %v950 = vadd.f32 0.0, %v949
    %951 = vmatprep.mubr.bf16.mxu0 %v797
    %952 = vmatmul.mubr.bf16.gmra.mxu0 %v539
    %v953 = vpop.f32.mrf.mxu0
    %v954 = vadd.f32 0.0, %v953
    %v955 = vpop.f32.mrf.mxu0
    %v956 = vadd.f32 0.0, %v955
    %v957 = vpop.f32.mrf.mxu0
    %v958 = vadd.f32 0.0, %v957
    %v959 = vpop.f32.mrf.mxu0
    %v960 = vadd.f32 0.0, %v959
    %961 = vmatprep.mubr.bf16.mxu0 %v800
    %962 = vmatmul.mubr.bf16.gmra.mxu0 %v541
    %v963 = vpop.f32.mrf.mxu0
    %v964 = vadd.f32 0.0, %v963
    %v965 = vpop.f32.mrf.mxu0
    %v966 = vadd.f32 0.0, %v965
    %v967 = vpop.f32.mrf.mxu0
    %v968 = vadd.f32 0.0, %v967
    %v969 = vpop.f32.mrf.mxu0
    %v970 = vadd.f32 0.0, %v969
    %971 = vmatprep.mubr.bf16.mxu0 %v803
    %972 = vmatmul.mubr.bf16.gmra.mxu0 %v543
    %v973 = vpop.f32.mrf.mxu0
    %v974 = vadd.f32 0.0, %v973
    %v975 = vpop.f32.mrf.mxu0
    %v976 = vadd.f32 0.0, %v975
    %v977 = vpop.f32.mrf.mxu0
    %v978 = vadd.f32 0.0, %v977
    %v979 = vpop.f32.mrf.mxu0
    %v980 = vadd.f32 0.0, %v979
    %981 = vmatprep.mubr.bf16.mxu0 %v806
    %982 = vmatmul.mubr.bf16.gmra.mxu0 %v545
    %v983 = vpop.f32.mrf.mxu0
    %v984 = vadd.f32 0.0, %v983
    %v985 = vpop.f32.mrf.mxu0
    %v986 = vadd.f32 0.0, %v985
    %v987 = vpop.f32.mrf.mxu0
    %v988 = vadd.f32 0.0, %v987
    %v989 = vpop.f32.mrf.mxu0
    %v990 = vadd.f32 0.0, %v989
    %991 = vmatprep.mubr.bf16.mxu0 %v809
    %992 = vmatmul.mubr.bf16.gmra.mxu0 %v547
    %v993 = vpop.f32.mrf.mxu0
    %v994 = vadd.f32 0.0, %v993
    %v995 = vpop.f32.mrf.mxu0
    %v996 = vadd.f32 0.0, %v995
    %v997 = vpop.f32.mrf.mxu0
    %v998 = vadd.f32 0.0, %v997
    %v999 = vpop.f32.mrf.mxu0
    %v1000 = vadd.f32 0.0, %v999
    %1001 = vmatprep.mubr.bf16.mxu0 %v812
    %1002 = vmatmul.mubr.bf16.gmra.mxu0 %v549
    %v1003 = vpop.f32.mrf.mxu0
    %v1004 = vadd.f32 0.0, %v1003
    %v1005 = vpop.f32.mrf.mxu0
    %v1006 = vadd.f32 0.0, %v1005
    %v1007 = vpop.f32.mrf.mxu0
    %v1008 = vadd.f32 0.0, %v1007
    %v1009 = vpop.f32.mrf.mxu0
    %v1010 = vadd.f32 0.0, %v1009
    %1011 = vmatprep.mubr.bf16.mxu0 %v815
    %1012 = vmatmul.mubr.bf16.gmra.mxu0 %v551
    %v1013 = vpop.f32.mrf.mxu0
    %v1014 = vadd.f32 0.0, %v1013
    %v1015 = vpop.f32.mrf.mxu0
    %v1016 = vadd.f32 0.0, %v1015
    %v1017 = vpop.f32.mrf.mxu0
    %v1018 = vadd.f32 0.0, %v1017
    %v1019 = vpop.f32.mrf.mxu0
    %v1020 = vadd.f32 0.0, %v1019
    %1021 = vmatprep.mubr.bf16.mxu0 %v818
    %1022 = vmatmul.mubr.bf16.gmra.mxu0 %v553
    %v1023 = vpop.f32.mrf.mxu0
    %v1024 = vadd.f32 0.0, %v1023
    %v1025 = vpop.f32.mrf.mxu0
    %v1026 = vadd.f32 0.0, %v1025
    %v1027 = vpop.f32.mrf.mxu0
    %v1028 = vadd.f32 0.0, %v1027
    %v1029 = vpop.f32.mrf.mxu0
    %v1030 = vadd.f32 0.0, %v1029
    %1031 = vmatprep.mubr.bf16.mxu0 %v821
    %1032 = vmatmul.mubr.bf16.gmra.mxu0 %v555
    %v1033 = vpop.f32.mrf.mxu0
    %v1034 = vadd.f32 0.0, %v1033
    %v1035 = vpop.f32.mrf.mxu0
    %v1036 = vadd.f32 0.0, %v1035
    %v1037 = vpop.f32.mrf.mxu0
    %v1038 = vadd.f32 0.0, %v1037
    %v1039 = vpop.f32.mrf.mxu0
    %v1040 = vadd.f32 0.0, %v1039
    %1041 = vmatprep.mubr.bf16.mxu0 %v824
    %1042 = vmatmul.mubr.bf16.gmra.mxu0 %v557
    %v1043 = vpop.f32.mrf.mxu0
    %v1044 = vadd.f32 0.0, %v1043
    %v1045 = vpop.f32.mrf.mxu0
    %v1046 = vadd.f32 0.0, %v1045
    %v1047 = vpop.f32.mrf.mxu0
    %v1048 = vadd.f32 0.0, %v1047
    %v1049 = vpop.f32.mrf.mxu0
    %v1050 = vadd.f32 0.0, %v1049
    %1051 = vmatprep.mubr.bf16.mxu0 %v827
    %1052 = vmatmul.mubr.bf16.gmra.mxu0 %v559
    %v1053 = vpop.f32.mrf.mxu0
    %v1054 = vadd.f32 0.0, %v1053
    %v1055 = vpop.f32.mrf.mxu0
    %v1056 = vadd.f32 0.0, %v1055
    %v1057 = vpop.f32.mrf.mxu0
    %v1058 = vadd.f32 0.0, %v1057
    %v1059 = vpop.f32.mrf.mxu0
    %v1060 = vadd.f32 0.0, %v1059
    %1061 = vmatprep.mubr.bf16.mxu0 %v830
    %1062 = vmatmul.mubr.bf16.gmra.mxu0 %v561
    %v1063 = vpop.f32.mrf.mxu0
    %v1064 = vadd.f32 0.0, %v1063
    %v1065 = vpop.f32.mrf.mxu0
    %v1066 = vadd.f32 0.0, %v1065
    %v1067 = vpop.f32.mrf.mxu0
    %v1068 = vadd.f32 0.0, %v1067
    %v1069 = vpop.f32.mrf.mxu0
    %v1070 = vadd.f32 0.0, %v1069
    %1071 = vmatprep.mubr.bf16.mxu0 %v833
    %1072 = vmatmul.mubr.bf16.gmra.mxu0 %v563
    %v1073 = vpop.f32.mrf.mxu0
    %v1074 = vadd.f32 0.0, %v1073
    %v1075 = vpop.f32.mrf.mxu0
    %v1076 = vadd.f32 0.0, %v1075
    %v1077 = vpop.f32.mrf.mxu0
    %v1078 = vadd.f32 0.0, %v1077
    %v1079 = vpop.f32.mrf.mxu0
    %v1080 = vadd.f32 0.0, %v1079
    %1081 = vmatprep.mubr.bf16.mxu0 %v836
    %1082 = vmatmul.mubr.bf16.gmra.mxu0 %v565
    %v1083 = vpop.f32.mrf.mxu0
    %v1084 = vadd.f32 0.0, %v1083
    %v1085 = vpop.f32.mrf.mxu0
    %v1086 = vadd.f32 0.0, %v1085
    %v1087 = vpop.f32.mrf.mxu0
    %v1088 = vadd.f32 0.0, %v1087
    %v1089 = vpop.f32.mrf.mxu0
    %v1090 = vadd.f32 0.0, %v1089
    %1091 = vmatprep.mubr.bf16.mxu0 %v839
    %1092 = vmatmul.mubr.bf16.gmra.mxu0 %v567
    %v1093 = vpop.f32.mrf.mxu0
    %v1094 = vadd.f32 0.0, %v1093
    %v1095 = vpop.f32.mrf.mxu0
    %v1096 = vadd.f32 0.0, %v1095
    %v1097 = vpop.f32.mrf.mxu0
    %v1098 = vadd.f32 0.0, %v1097
    %v1099 = vpop.f32.mrf.mxu0
    %v1100 = vadd.f32 0.0, %v1099
    %1101 = vmatprep.mubr.bf16.mxu0 %v842
    %1102 = vmatmul.mubr.bf16.gmra.mxu0 %v569
    %v1103 = vpop.f32.mrf.mxu0
    %v1104 = vadd.f32 0.0, %v1103
    %v1105 = vpop.f32.mrf.mxu0
    %v1106 = vadd.f32 0.0, %v1105
    %v1107 = vpop.f32.mrf.mxu0
    %v1108 = vadd.f32 0.0, %v1107
    %v1109 = vpop.f32.mrf.mxu0
    %v1110 = vadd.f32 0.0, %v1109
    %1111 = vmatprep.mubr.bf16.mxu0 %v845
    %1112 = vmatmul.mubr.bf16.gmra.mxu0 %v571
    %v1113 = vpop.f32.mrf.mxu0
    %v1114 = vadd.f32 0.0, %v1113
    %v1115 = vpop.f32.mrf.mxu0
    %v1116 = vadd.f32 0.0, %v1115
    %v1117 = vpop.f32.mrf.mxu0
    %v1118 = vadd.f32 0.0, %v1117
    %v1119 = vpop.f32.mrf.mxu0
    %v1120 = vadd.f32 0.0, %v1119
    %1121 = vmatprep.mubr.bf16.mxu0 %v848
    %1122 = vmatmul.mubr.bf16.gmra.mxu0 %v573
    %v1123 = vpop.f32.mrf.mxu0
    %v1124 = vadd.f32 0.0, %v1123
    %v1125 = vpop.f32.mrf.mxu0
    %v1126 = vadd.f32 0.0, %v1125
    %v1127 = vpop.f32.mrf.mxu0
    %v1128 = vadd.f32 0.0, %v1127
    %v1129 = vpop.f32.mrf.mxu0
    %v1130 = vadd.f32 0.0, %v1129
    %1131 = vmatprep.mubr.bf16.mxu0 %v851
    %1132 = vmatmul.mubr.bf16.gmra.mxu0 %v575
    %v1133 = vpop.f32.mrf.mxu0
    %v1134 = vadd.f32 0.0, %v1133
    %v1135 = vpop.f32.mrf.mxu0
    %v1136 = vadd.f32 0.0, %v1135
    %v1137 = vpop.f32.mrf.mxu0
    %v1138 = vadd.f32 0.0, %v1137
    %v1139 = vpop.f32.mrf.mxu0
    %v1140 = vadd.f32 0.0, %v1139
    %1141 = vmatprep.mubr.bf16.mxu0 %v854
    %1142 = vmatmul.mubr.bf16.gmra.mxu0 %v577
    %v1143 = vpop.f32.mrf.mxu0
    %v1144 = vadd.f32 0.0, %v1143
    %v1145 = vpop.f32.mrf.mxu0
    %v1146 = vadd.f32 0.0, %v1145
    %v1147 = vpop.f32.mrf.mxu0
    %v1148 = vadd.f32 0.0, %v1147
    %v1149 = vpop.f32.mrf.mxu0
    %v1150 = vadd.f32 0.0, %v1149
    %1151 = vmatprep.mubr.bf16.mxu0 %v857
    %1152 = vmatmul.mubr.bf16.gmra.mxu0 %v579
    %v1153 = vpop.f32.mrf.mxu0
    %v1154 = vadd.f32 0.0, %v1153
    %v1155 = vpop.f32.mrf.mxu0
    %v1156 = vadd.f32 0.0, %v1155
    %v1157 = vpop.f32.mrf.mxu0
    %v1158 = vadd.f32 0.0, %v1157
    %v1159 = vpop.f32.mrf.mxu0
    %v1160 = vadd.f32 0.0, %v1159
    %1161 = vmatprep.mubr.bf16.mxu0 %v860
    %1162 = vmatmul.mubr.bf16.gmra.mxu0 %v581
    %v1163 = vpop.f32.mrf.mxu0
    %v1164 = vadd.f32 0.0, %v1163
    %v1165 = vpop.f32.mrf.mxu0
    %v1166 = vadd.f32 0.0, %v1165
    %v1167 = vpop.f32.mrf.mxu0
    %v1168 = vadd.f32 0.0, %v1167
    %v1169 = vpop.f32.mrf.mxu0
    %v1170 = vadd.f32 0.0, %v1169
    %1171 = vmatprep.mubr.bf16.mxu0 %v863
    %1172 = vmatmul.mubr.bf16.gmra.mxu0 %v583
    %v1173 = vpop.f32.mrf.mxu0
    %v1174 = vadd.f32 0.0, %v1173
    %v1175 = vpop.f32.mrf.mxu0
    %v1176 = vadd.f32 0.0, %v1175
    %v1177 = vpop.f32.mrf.mxu0
    %v1178 = vadd.f32 0.0, %v1177
    %v1179 = vpop.f32.mrf.mxu0
    %v1180 = vadd.f32 0.0, %v1179
    %1181 = vmatprep.mubr.bf16.mxu0 %v866
    %1182 = vmatmul.mubr.bf16.gmra.mxu0 %v585
    %v1183 = vpop.f32.mrf.mxu0
    %v1184 = vadd.f32 0.0, %v1183
    %v1185 = vpop.f32.mrf.mxu0
    %v1186 = vadd.f32 0.0, %v1185
    %v1187 = vpop.f32.mrf.mxu0
    %v1188 = vadd.f32 0.0, %v1187
    %v1189 = vpop.f32.mrf.mxu0
    %v1190 = vadd.f32 0.0, %v1189
    %1191 = vmatprep.mubr.bf16.mxu0 %v869
    %1192 = vmatmul.mubr.bf16.gmra.mxu0 %v587
    %v1193 = vpop.f32.mrf.mxu0
    %v1194 = vadd.f32 0.0, %v1193
    %v1195 = vpop.f32.mrf.mxu0
    %v1196 = vadd.f32 0.0, %v1195
    %v1197 = vpop.f32.mrf.mxu0
    %v1198 = vadd.f32 0.0, %v1197
    %v1199 = vpop.f32.mrf.mxu0
    %v1200 = vadd.f32 0.0, %v1199
    %1201 = vmatprep.mubr.bf16.mxu0 %v872
    %1202 = vmatmul.mubr.bf16.gmra.mxu0 %v589
    %v1203 = vpop.f32.mrf.mxu0
    %v1204 = vadd.f32 0.0, %v1203
    %v1205 = vpop.f32.mrf.mxu0
    %v1206 = vadd.f32 0.0, %v1205
    %v1207 = vpop.f32.mrf.mxu0
    %v1208 = vadd.f32 0.0, %v1207
    %v1209 = vpop.f32.mrf.mxu0
    %v1210 = vadd.f32 0.0, %v1209
    %1211 = vmatprep.mubr.bf16.mxu0 %v875
    %1212 = vmatmul.mubr.bf16.gmra.mxu0 %v591
    %v1213 = vpop.f32.mrf.mxu0
    %v1214 = vadd.f32 0.0, %v1213
    %v1215 = vpop.f32.mrf.mxu0
    %v1216 = vadd.f32 0.0, %v1215
    %v1217 = vpop.f32.mrf.mxu0
    %v1218 = vadd.f32 0.0, %v1217
    %v1219 = vpop.f32.mrf.mxu0
    %v1220 = vadd.f32 0.0, %v1219
    %1221 = vmatprep.mubr.bf16.mxu0 %v878
    %1222 = vmatmul.mubr.bf16.gmra.mxu0 %v593
    %v1223 = vpop.f32.mrf.mxu0
    %v1224 = vadd.f32 0.0, %v1223
    %v1225 = vpop.f32.mrf.mxu0
    %v1226 = vadd.f32 0.0, %v1225
    %v1227 = vpop.f32.mrf.mxu0
    %v1228 = vadd.f32 0.0, %v1227
    %v1229 = vpop.f32.mrf.mxu0
    %v1230 = vadd.f32 0.0, %v1229
    %1231 = vmatprep.mubr.bf16.mxu0 %v881
    %1232 = vmatmul.mubr.bf16.gmra.mxu0 %v595
    %v1233 = vpop.f32.mrf.mxu0
    %v1234 = vadd.f32 0.0, %v1233
    %v1235 = vpop.f32.mrf.mxu0
    %v1236 = vadd.f32 0.0, %v1235
    %v1237 = vpop.f32.mrf.mxu0
    %v1238 = vadd.f32 0.0, %v1237
    %v1239 = vpop.f32.mrf.mxu0
    %v1240 = vadd.f32 0.0, %v1239
    %1241 = vmatprep.mubr.bf16.mxu0 %v884
    %1242 = vmatmul.mubr.bf16.gmra.mxu0 %v597
    %v1243 = vpop.f32.mrf.mxu0
    %v1244 = vadd.f32 0.0, %v1243
    %v1245 = vpop.f32.mrf.mxu0
    %v1246 = vadd.f32 0.0, %v1245
    %v1247 = vpop.f32.mrf.mxu0
    %v1248 = vadd.f32 0.0, %v1247
    %v1249 = vpop.f32.mrf.mxu0
    %v1250 = vadd.f32 0.0, %v1249
    %1251 = vdwg.mxu0
    %1252 = vmatprep.subr.bf16.mxu0 0
    %1253 = vmatpush1.bf16.msra.mxu0 %v755
    %1254 = vmatprep.subr.bf16.mxu0 0
    %1255 = vmatpush1.bf16.msra.mxu0 %v752
    %1256 = vmatprep.subr.bf16.mxu0 0
    %1257 = vmatpush1.bf16.msra.mxu0 %v749
    %1258 = vmatprep.subr.bf16.mxu0 0
    %1259 = vmatpush1.bf16.msra.mxu0 %v746
    %1260 = vmatprep.subr.bf16.mxu0 0
    %1261 = vmatpush1.bf16.msra.mxu0 %v743
    %1262 = vmatprep.subr.bf16.mxu0 0
    %1263 = vmatpush1.bf16.msra.mxu0 %v740
    %1264 = vmatprep.subr.bf16.mxu0 0
    %1265 = vmatpush1.bf16.msra.mxu0 %v737
    %1266 = vmatprep.subr.bf16.mxu0 0
    %1267 = vmatpush1.bf16.msra.mxu0 %v734
    %1268 = vmatprep.subr.bf16.mxu0 0
    %1269 = vmatpush2.bf16.msra.mxu0 0
    %1270 = vmatprep.subr.bf16.mxu0 0
    %1271 = vmatpush2.bf16.msra.mxu0 0
    %1272 = vmatprep.subr.bf16.mxu0 0
    %1273 = vmatpush2.bf16.msra.mxu0 0
    %1274 = vmatprep.subr.bf16.mxu0 0
    %1275 = vmatpush2.bf16.msra.mxu0 0
    %1276 = vmatprep.subr.bf16.mxu0 0
    %1277 = vmatpush2.bf16.msra.mxu0 0
    %1278 = vmatprep.subr.bf16.mxu0 0
    %1279 = vmatpush2.bf16.msra.mxu0 0
    %1280 = vmatprep.subr.bf16.mxu0 0
    %1281 = vmatpush2.bf16.msra.mxu0 %v897
    %1282 = vmatprep.subr.bf16.mxu0 0
    %1283 = vmatpush2.bf16.msra.mxu0 %v758
    %1284 = vmatprep.mubr.bf16.mxu0 %v791
    %1285 = vmatmul.mubr.bf16.gmra.mxu0 %v535
    %v1286 = vpop.f32.mrf.mxu0
    %v1287 = vadd.f32 0.0, %v1286
    %v1288 = vpop.f32.mrf.mxu0
    %v1289 = vpop.f32.mrf.mxu0
    %v1290 = vadd.f32 0.0, %v1289
    %v1291 = vpop.f32.mrf.mxu0
    %1292 = vmatprep.mubr.bf16.mxu0 %v794
    %1293 = vmatmul.mubr.bf16.gmra.mxu0 %v537
    %v1294 = vpop.f32.mrf.mxu0
    %v1295 = vadd.f32 0.0, %v1294
    %v1296 = vpop.f32.mrf.mxu0
    %v1297 = vpop.f32.mrf.mxu0
    %v1298 = vadd.f32 0.0, %v1297
    %v1299 = vpop.f32.mrf.mxu0
    %1300 = vmatprep.mubr.bf16.mxu0 %v797
    %1301 = vmatmul.mubr.bf16.gmra.mxu0 %v539
    %v1302 = vpop.f32.mrf.mxu0
    %v1303 = vadd.f32 0.0, %v1302
    %v1304 = vpop.f32.mrf.mxu0
    %v1305 = vpop.f32.mrf.mxu0
    %v1306 = vadd.f32 0.0, %v1305
    %v1307 = vpop.f32.mrf.mxu0
    %1308 = vmatprep.mubr.bf16.mxu0 %v800
    %1309 = vmatmul.mubr.bf16.gmra.mxu0 %v541
    %v1310 = vpop.f32.mrf.mxu0
    %v1311 = vadd.f32 0.0, %v1310
    %v1312 = vpop.f32.mrf.mxu0
    %v1313 = vpop.f32.mrf.mxu0
    %v1314 = vadd.f32 0.0, %v1313
    %v1315 = vpop.f32.mrf.mxu0
    %1316 = vmatprep.mubr.bf16.mxu0 %v803
    %1317 = vmatmul.mubr.bf16.gmra.mxu0 %v543
    %v1318 = vpop.f32.mrf.mxu0
    %v1319 = vadd.f32 0.0, %v1318
    %v1320 = vpop.f32.mrf.mxu0
    %v1321 = vpop.f32.mrf.mxu0
    %v1322 = vadd.f32 0.0, %v1321
    %v1323 = vpop.f32.mrf.mxu0
    %1324 = vmatprep.mubr.bf16.mxu0 %v806
    %1325 = vmatmul.mubr.bf16.gmra.mxu0 %v545
    %v1326 = vpop.f32.mrf.mxu0
    %v1327 = vadd.f32 0.0, %v1326
    %v1328 = vpop.f32.mrf.mxu0
    %v1329 = vpop.f32.mrf.mxu0
    %v1330 = vadd.f32 0.0, %v1329
    %v1331 = vpop.f32.mrf.mxu0
    %1332 = vmatprep.mubr.bf16.mxu0 %v809
    %1333 = vmatmul.mubr.bf16.gmra.mxu0 %v547
    %v1334 = vpop.f32.mrf.mxu0
    %v1335 = vadd.f32 0.0, %v1334
    %v1336 = vpop.f32.mrf.mxu0
    %v1337 = vpop.f32.mrf.mxu0
    %v1338 = vadd.f32 0.0, %v1337
    %v1339 = vpop.f32.mrf.mxu0
    %1340 = vmatprep.mubr.bf16.mxu0 %v812
    %1341 = vmatmul.mubr.bf16.gmra.mxu0 %v549
    %v1342 = vpop.f32.mrf.mxu0
    %v1343 = vadd.f32 0.0, %v1342
    %v1344 = vpop.f32.mrf.mxu0
    %v1345 = vpop.f32.mrf.mxu0
    %v1346 = vadd.f32 0.0, %v1345
    %v1347 = vpop.f32.mrf.mxu0
    %1348 = vmatprep.mubr.bf16.mxu0 %v815
    %1349 = vmatmul.mubr.bf16.gmra.mxu0 %v551
    %v1350 = vpop.f32.mrf.mxu0
    %v1351 = vadd.f32 0.0, %v1350
    %v1352 = vpop.f32.mrf.mxu0
    %v1353 = vpop.f32.mrf.mxu0
    %v1354 = vadd.f32 0.0, %v1353
    %v1355 = vpop.f32.mrf.mxu0
    %1356 = vmatprep.mubr.bf16.mxu0 %v818
    %1357 = vmatmul.mubr.bf16.gmra.mxu0 %v553
    %v1358 = vpop.f32.mrf.mxu0
    %v1359 = vadd.f32 0.0, %v1358
    %v1360 = vpop.f32.mrf.mxu0
    %v1361 = vpop.f32.mrf.mxu0
    %v1362 = vadd.f32 0.0, %v1361
    %v1363 = vpop.f32.mrf.mxu0
    %1364 = vmatprep.mubr.bf16.mxu0 %v821
    %1365 = vmatmul.mubr.bf16.gmra.mxu0 %v555
    %v1366 = vpop.f32.mrf.mxu0
    %v1367 = vadd.f32 0.0, %v1366
    %v1368 = vpop.f32.mrf.mxu0
    %v1369 = vpop.f32.mrf.mxu0
    %v1370 = vadd.f32 0.0, %v1369
    %v1371 = vpop.f32.mrf.mxu0
    %1372 = vmatprep.mubr.bf16.mxu0 %v824
    %1373 = vmatmul.mubr.bf16.gmra.mxu0 %v557
    %v1374 = vpop.f32.mrf.mxu0
    %v1375 = vadd.f32 0.0, %v1374
    %v1376 = vpop.f32.mrf.mxu0
    %v1377 = vpop.f32.mrf.mxu0
    %v1378 = vadd.f32 0.0, %v1377
    %v1379 = vpop.f32.mrf.mxu0
    %1380 = vmatprep.mubr.bf16.mxu0 %v827
    %1381 = vmatmul.mubr.bf16.gmra.mxu0 %v559
    %v1382 = vpop.f32.mrf.mxu0
    %v1383 = vadd.f32 0.0, %v1382
    %v1384 = vpop.f32.mrf.mxu0
    %v1385 = vpop.f32.mrf.mxu0
    %v1386 = vadd.f32 0.0, %v1385
    %v1387 = vpop.f32.mrf.mxu0
    %1388 = vmatprep.mubr.bf16.mxu0 %v830
    %1389 = vmatmul.mubr.bf16.gmra.mxu0 %v561
    %v1390 = vpop.f32.mrf.mxu0
    %v1391 = vadd.f32 0.0, %v1390
    %v1392 = vpop.f32.mrf.mxu0
    %v1393 = vpop.f32.mrf.mxu0
    %v1394 = vadd.f32 0.0, %v1393
    %v1395 = vpop.f32.mrf.mxu0
    %1396 = vmatprep.mubr.bf16.mxu0 %v833
    %1397 = vmatmul.mubr.bf16.gmra.mxu0 %v563
    %v1398 = vpop.f32.mrf.mxu0
    %v1399 = vadd.f32 0.0, %v1398
    %v1400 = vpop.f32.mrf.mxu0
    %v1401 = vpop.f32.mrf.mxu0
    %v1402 = vadd.f32 0.0, %v1401
    %v1403 = vpop.f32.mrf.mxu0
    %1404 = vmatprep.mubr.bf16.mxu0 %v836
    %1405 = vmatmul.mubr.bf16.gmra.mxu0 %v565
    %v1406 = vpop.f32.mrf.mxu0
    %v1407 = vadd.f32 0.0, %v1406
    %v1408 = vpop.f32.mrf.mxu0
    %v1409 = vpop.f32.mrf.mxu0
    %v1410 = vadd.f32 0.0, %v1409
    %v1411 = vpop.f32.mrf.mxu0
    %1412 = vmatprep.mubr.bf16.mxu0 %v839
    %1413 = vmatmul.mubr.bf16.gmra.mxu0 %v567
    %v1414 = vpop.f32.mrf.mxu0
    %v1415 = vadd.f32 0.0, %v1414
    %v1416 = vpop.f32.mrf.mxu0
    %v1417 = vpop.f32.mrf.mxu0
    %v1418 = vadd.f32 0.0, %v1417
    %v1419 = vpop.f32.mrf.mxu0
    %1420 = vmatprep.mubr.bf16.mxu0 %v842
    %1421 = vmatmul.mubr.bf16.gmra.mxu0 %v569
    %v1422 = vpop.f32.mrf.mxu0
    %v1423 = vadd.f32 0.0, %v1422
    %v1424 = vpop.f32.mrf.mxu0
    %v1425 = vpop.f32.mrf.mxu0
    %v1426 = vadd.f32 0.0, %v1425
    %v1427 = vpop.f32.mrf.mxu0
    %1428 = vmatprep.mubr.bf16.mxu0 %v845
    %1429 = vmatmul.mubr.bf16.gmra.mxu0 %v571
    %v1430 = vpop.f32.mrf.mxu0
    %v1431 = vadd.f32 0.0, %v1430
    %v1432 = vpop.f32.mrf.mxu0
    %v1433 = vpop.f32.mrf.mxu0
    %v1434 = vadd.f32 0.0, %v1433
    %v1435 = vpop.f32.mrf.mxu0
    %1436 = vmatprep.mubr.bf16.mxu0 %v848
    %1437 = vmatmul.mubr.bf16.gmra.mxu0 %v573
    %v1438 = vpop.f32.mrf.mxu0
    %v1439 = vadd.f32 0.0, %v1438
    %v1440 = vpop.f32.mrf.mxu0
    %v1441 = vpop.f32.mrf.mxu0
    %v1442 = vadd.f32 0.0, %v1441
    %v1443 = vpop.f32.mrf.mxu0
    %1444 = vmatprep.mubr.bf16.mxu0 %v851
    %1445 = vmatmul.mubr.bf16.gmra.mxu0 %v575
    %v1446 = vpop.f32.mrf.mxu0
    %v1447 = vadd.f32 0.0, %v1446
    %v1448 = vpop.f32.mrf.mxu0
    %v1449 = vpop.f32.mrf.mxu0
    %v1450 = vadd.f32 0.0, %v1449
    %v1451 = vpop.f32.mrf.mxu0
    %1452 = vmatprep.mubr.bf16.mxu0 %v854
    %1453 = vmatmul.mubr.bf16.gmra.mxu0 %v577
    %v1454 = vpop.f32.mrf.mxu0
    %v1455 = vadd.f32 0.0, %v1454
    %v1456 = vpop.f32.mrf.mxu0
    %v1457 = vpop.f32.mrf.mxu0
    %v1458 = vadd.f32 0.0, %v1457
    %v1459 = vpop.f32.mrf.mxu0
    %1460 = vmatprep.mubr.bf16.mxu0 %v857
    %1461 = vmatmul.mubr.bf16.gmra.mxu0 %v579
    %v1462 = vpop.f32.mrf.mxu0
    %v1463 = vadd.f32 0.0, %v1462
    %v1464 = vpop.f32.mrf.mxu0
    %v1465 = vpop.f32.mrf.mxu0
    %v1466 = vadd.f32 0.0, %v1465
    %v1467 = vpop.f32.mrf.mxu0
    %1468 = vmatprep.mubr.bf16.mxu0 %v860
    %1469 = vmatmul.mubr.bf16.gmra.mxu0 %v581
    %v1470 = vpop.f32.mrf.mxu0
    %v1471 = vadd.f32 0.0, %v1470
    %v1472 = vpop.f32.mrf.mxu0
    %v1473 = vpop.f32.mrf.mxu0
    %v1474 = vadd.f32 0.0, %v1473
    %v1475 = vpop.f32.mrf.mxu0
    %1476 = vmatprep.mubr.bf16.mxu0 %v863
    %1477 = vmatmul.mubr.bf16.gmra.mxu0 %v583
    %v1478 = vpop.f32.mrf.mxu0
    %v1479 = vadd.f32 0.0, %v1478
    %v1480 = vpop.f32.mrf.mxu0
    %v1481 = vpop.f32.mrf.mxu0
    %v1482 = vadd.f32 0.0, %v1481
    %v1483 = vpop.f32.mrf.mxu0
    %1484 = vmatprep.mubr.bf16.mxu0 %v866
    %1485 = vmatmul.mubr.bf16.gmra.mxu0 %v585
    %v1486 = vpop.f32.mrf.mxu0
    %v1487 = vadd.f32 0.0, %v1486
    %v1488 = vpop.f32.mrf.mxu0
    %v1489 = vpop.f32.mrf.mxu0
    %v1490 = vadd.f32 0.0, %v1489
    %v1491 = vpop.f32.mrf.mxu0
    %1492 = vmatprep.mubr.bf16.mxu0 %v869
    %1493 = vmatmul.mubr.bf16.gmra.mxu0 %v587
    %v1494 = vpop.f32.mrf.mxu0
    %v1495 = vadd.f32 0.0, %v1494
    %v1496 = vpop.f32.mrf.mxu0
    %v1497 = vpop.f32.mrf.mxu0
    %v1498 = vadd.f32 0.0, %v1497
    %v1499 = vpop.f32.mrf.mxu0
    %1500 = vmatprep.mubr.bf16.mxu0 %v872
    %1501 = vmatmul.mubr.bf16.gmra.mxu0 %v589
    %v1502 = vpop.f32.mrf.mxu0
    %v1503 = vadd.f32 0.0, %v1502
    %v1504 = vpop.f32.mrf.mxu0
    %v1505 = vpop.f32.mrf.mxu0
    %v1506 = vadd.f32 0.0, %v1505
    %v1507 = vpop.f32.mrf.mxu0
    %1508 = vmatprep.mubr.bf16.mxu0 %v875
    %1509 = vmatmul.mubr.bf16.gmra.mxu0 %v591
    %v1510 = vpop.f32.mrf.mxu0
    %v1511 = vadd.f32 0.0, %v1510
    %v1512 = vpop.f32.mrf.mxu0
    %v1513 = vpop.f32.mrf.mxu0
    %v1514 = vadd.f32 0.0, %v1513
    %v1515 = vpop.f32.mrf.mxu0
    %1516 = vmatprep.mubr.bf16.mxu0 %v878
    %1517 = vmatmul.mubr.bf16.gmra.mxu0 %v593
    %v1518 = vpop.f32.mrf.mxu0
    %v1519 = vadd.f32 0.0, %v1518
    %v1520 = vpop.f32.mrf.mxu0
    %v1521 = vpop.f32.mrf.mxu0
    %v1522 = vadd.f32 0.0, %v1521
    %v1523 = vpop.f32.mrf.mxu0
    %1524 = vmatprep.mubr.bf16.mxu0 %v881
    %1525 = vmatmul.mubr.bf16.gmra.mxu0 %v595
    %v1526 = vpop.f32.mrf.mxu0
    %v1527 = vadd.f32 0.0, %v1526
    %v1528 = vpop.f32.mrf.mxu0
    %v1529 = vpop.f32.mrf.mxu0
    %v1530 = vadd.f32 0.0, %v1529
    %v1531 = vpop.f32.mrf.mxu0
    %1532 = vmatprep.mubr.bf16.mxu0 %v884
    %1533 = vmatmul.mubr.bf16.gmra.mxu0 %v597
    %v1534 = vpop.f32.mrf.mxu0
    %v1535 = vadd.f32 0.0, %v1534
    %v1536 = vpop.f32.mrf.mxu0
    %v1537 = vpop.f32.mrf.mxu0
    %v1538 = vadd.f32 0.0, %v1537
    %v1539 = vpop.f32.mrf.mxu0
    %1540 = vdwg.mxu0
    %v1541 = vadd.f32 %v343, %v934
    %v1542 = vadd.f32 %v344, %v936
    %v1543 = vadd.f32 %v345, %v1287
    %v1544 = vadd.f32 %v346, %v938
    %v1545 = vadd.f32 %v347, %v940
    %v1546 = vadd.f32 %v348, %v1290
    %v1547 = vadd.f32 %v349, %v944
    %v1548 = vadd.f32 %v350, %v946
    %v1549 = vadd.f32 %v351, %v1295
    %v1550 = vadd.f32 %v352, %v948
    %v1551 = vadd.f32 %v353, %v950
    %v1552 = vadd.f32 %v354, %v1298
    %v1553 = vadd.f32 %v355, %v954
    %v1554 = vadd.f32 %v356, %v956
    %v1555 = vadd.f32 %v357, %v1303
    %v1556 = vadd.f32 %v358, %v958
    %v1557 = vadd.f32 %v359, %v960
    %v1558 = vadd.f32 %v360, %v1306
    %v1559 = vadd.f32 %v361, %v964
    %v1560 = vadd.f32 %v362, %v966
    %v1561 = vadd.f32 %v363, %v1311
    %v1562 = vadd.f32 %v364, %v968
    %v1563 = vadd.f32 %v365, %v970
    %v1564 = vadd.f32 %v366, %v1314
    %v1565 = vadd.f32 %v367, %v974
    %v1566 = vadd.f32 %v368, %v976
    %v1567 = vadd.f32 %v369, %v1319
    %v1568 = vadd.f32 %v370, %v978
    %v1569 = vadd.f32 %v371, %v980
    %v1570 = vadd.f32 %v372, %v1322
    %v1571 = vadd.f32 %v373, %v984
    %v1572 = vadd.f32 %v374, %v986
    %v1573 = vadd.f32 %v375, %v1327
    %v1574 = vadd.f32 %v376, %v988
    %v1575 = vadd.f32 %v377, %v990
    %v1576 = vadd.f32 %v378, %v1330
    %v1577 = vadd.f32 %v379, %v994
    %v1578 = vadd.f32 %v380, %v996
    %v1579 = vadd.f32 %v381, %v1335
    %v1580 = vadd.f32 %v382, %v998
    %v1581 = vadd.f32 %v383, %v1000
    %v1582 = vadd.f32 %v384, %v1338
    %v1583 = vadd.f32 %v385, %v1004
    %v1584 = vadd.f32 %v386, %v1006
    %v1585 = vadd.f32 %v387, %v1343
    %v1586 = vadd.f32 %v388, %v1008
    %v1587 = vadd.f32 %v389, %v1010
    %v1588 = vadd.f32 %v390, %v1346
    %v1589 = vadd.f32 %v391, %v1014
    %v1590 = vadd.f32 %v392, %v1016
    %v1591 = vadd.f32 %v393, %v1351
    %v1592 = vadd.f32 %v394, %v1018
    %v1593 = vadd.f32 %v395, %v1020
    %v1594 = vadd.f32 %v396, %v1354
    %v1595 = vadd.f32 %v397, %v1024
    %v1596 = vadd.f32 %v398, %v1026
    %v1597 = vadd.f32 %v399, %v1359
    %v1598 = vadd.f32 %v400, %v1028
    %v1599 = vadd.f32 %v401, %v1030
    %v1600 = vadd.f32 %v402, %v1362
    %v1601 = vadd.f32 %v403, %v1034
    %v1602 = vadd.f32 %v404, %v1036
    %v1603 = vadd.f32 %v405, %v1367
    %v1604 = vadd.f32 %v406, %v1038
    %v1605 = vadd.f32 %v407, %v1040
    %v1606 = vadd.f32 %v408, %v1370
    %v1607 = vadd.f32 %v409, %v1044
    %v1608 = vadd.f32 %v410, %v1046
    %v1609 = vadd.f32 %v411, %v1375
    %v1610 = vadd.f32 %v412, %v1048
    %v1611 = vadd.f32 %v413, %v1050
    %v1612 = vadd.f32 %v414, %v1378
    %v1613 = vadd.f32 %v415, %v1054
    %v1614 = vadd.f32 %v416, %v1056
    %v1615 = vadd.f32 %v417, %v1383
    %v1616 = vadd.f32 %v418, %v1058
    %v1617 = vadd.f32 %v419, %v1060
    %v1618 = vadd.f32 %v420, %v1386
    %v1619 = vadd.f32 %v421, %v1064
    %v1620 = vadd.f32 %v422, %v1066
    %v1621 = vadd.f32 %v423, %v1391
    %v1622 = vadd.f32 %v424, %v1068
    %v1623 = vadd.f32 %v425, %v1070
    %v1624 = vadd.f32 %v426, %v1394
    %v1625 = vadd.f32 %v427, %v1074
    %v1626 = vadd.f32 %v428, %v1076
    %v1627 = vadd.f32 %v429, %v1399
    %v1628 = vadd.f32 %v430, %v1078
    %v1629 = vadd.f32 %v431, %v1080
    %v1630 = vadd.f32 %v432, %v1402
    %v1631 = vadd.f32 %v433, %v1084
    %v1632 = vadd.f32 %v434, %v1086
    %v1633 = vadd.f32 %v435, %v1407
    %v1634 = vadd.f32 %v436, %v1088
    %v1635 = vadd.f32 %v437, %v1090
    %v1636 = vadd.f32 %v438, %v1410
    %v1637 = vadd.f32 %v439, %v1094
    %v1638 = vadd.f32 %v440, %v1096
    %v1639 = vadd.f32 %v441, %v1415
    %v1640 = vadd.f32 %v442, %v1098
    %v1641 = vadd.f32 %v443, %v1100
    %v1642 = vadd.f32 %v444, %v1418
    %v1643 = vadd.f32 %v445, %v1104
    %v1644 = vadd.f32 %v446, %v1106
    %v1645 = vadd.f32 %v447, %v1423
    %v1646 = vadd.f32 %v448, %v1108
    %v1647 = vadd.f32 %v449, %v1110
    %v1648 = vadd.f32 %v450, %v1426
    %v1649 = vadd.f32 %v451, %v1114
    %v1650 = vadd.f32 %v452, %v1116
    %v1651 = vadd.f32 %v453, %v1431
    %v1652 = vadd.f32 %v454, %v1118
    %v1653 = vadd.f32 %v455, %v1120
    %v1654 = vadd.f32 %v456, %v1434
    %v1655 = vadd.f32 %v457, %v1124
    %v1656 = vadd.f32 %v458, %v1126
    %v1657 = vadd.f32 %v459, %v1439
    %v1658 = vadd.f32 %v460, %v1128
    %v1659 = vadd.f32 %v461, %v1130
    %v1660 = vadd.f32 %v462, %v1442
    %v1661 = vadd.f32 %v463, %v1134
    %v1662 = vadd.f32 %v464, %v1136
    %v1663 = vadd.f32 %v465, %v1447
    %v1664 = vadd.f32 %v466, %v1138
    %v1665 = vadd.f32 %v467, %v1140
    %v1666 = vadd.f32 %v468, %v1450
    %v1667 = vadd.f32 %v469, %v1144
    %v1668 = vadd.f32 %v470, %v1146
    %v1669 = vadd.f32 %v471, %v1455
    %v1670 = vadd.f32 %v472, %v1148
    %v1671 = vadd.f32 %v473, %v1150
    %v1672 = vadd.f32 %v474, %v1458
    %v1673 = vadd.f32 %v475, %v1154
    %v1674 = vadd.f32 %v476, %v1156
    %v1675 = vadd.f32 %v477, %v1463
    %v1676 = vadd.f32 %v478, %v1158
    %v1677 = vadd.f32 %v479, %v1160
    %v1678 = vadd.f32 %v480, %v1466
    %v1679 = vadd.f32 %v481, %v1164
    %v1680 = vadd.f32 %v482, %v1166
    %v1681 = vadd.f32 %v483, %v1471
    %v1682 = vadd.f32 %v484, %v1168
    %v1683 = vadd.f32 %v485, %v1170
    %v1684 = vadd.f32 %v486, %v1474
    %v1685 = vadd.f32 %v487, %v1174
    %v1686 = vadd.f32 %v488, %v1176
    %v1687 = vadd.f32 %v489, %v1479
    %v1688 = vadd.f32 %v490, %v1178
    %v1689 = vadd.f32 %v491, %v1180
    %v1690 = vadd.f32 %v492, %v1482
    %v1691 = vadd.f32 %v493, %v1184
    %v1692 = vadd.f32 %v494, %v1186
    %v1693 = vadd.f32 %v495, %v1487
    %v1694 = vadd.f32 %v496, %v1188
    %v1695 = vadd.f32 %v497, %v1190
    %v1696 = vadd.f32 %v498, %v1490
    %v1697 = vadd.f32 %v499, %v1194
    %v1698 = vadd.f32 %v500, %v1196
    %v1699 = vadd.f32 %v501, %v1495
    %v1700 = vadd.f32 %v502, %v1198
    %v1701 = vadd.f32 %v503, %v1200
    %v1702 = vadd.f32 %v504, %v1498
    %v1703 = vadd.f32 %v505, %v1204
    %v1704 = vadd.f32 %v506, %v1206
    %v1705 = vadd.f32 %v507, %v1503
    %v1706 = vadd.f32 %v508, %v1208
    %v1707 = vadd.f32 %v509, %v1210
    %v1708 = vadd.f32 %v510, %v1506
    %v1709 = vadd.f32 %v511, %v1214
    %v1710 = vadd.f32 %v512, %v1216
    %v1711 = vadd.f32 %v513, %v1511
    %v1712 = vadd.f32 %v514, %v1218
    %v1713 = vadd.f32 %v515, %v1220
    %v1714 = vadd.f32 %v516, %v1514
    %v1715 = vadd.f32 %v517, %v1224
    %v1716 = vadd.f32 %v518, %v1226
    %v1717 = vadd.f32 %v519, %v1519
    %v1718 = vadd.f32 %v520, %v1228
    %v1719 = vadd.f32 %v521, %v1230
    %v1720 = vadd.f32 %v522, %v1522
    %v1721 = vadd.f32 %v523, %v1234
    %v1722 = vadd.f32 %v524, %v1236
    %v1723 = vadd.f32 %v525, %v1527
    %v1724 = vadd.f32 %v526, %v1238
    %v1725 = vadd.f32 %v527, %v1240
    %v1726 = vadd.f32 %v528, %v1530
    %v1727 = vadd.f32 %v529, %v1244
    %v1728 = vadd.f32 %v530, %v1246
    %v1729 = vadd.f32 %v531, %v1535
    %v1730 = vadd.f32 %v532, %v1248
    %v1731 = vadd.f32 %v533, %v1250
    %v1732 = vadd.f32 %v534, %v1538
    %1733 = vst [vmem:[#allocation2] sm:$0xff] %v1541
    %1734 = vst [vmem:[#allocation2 + $0x8] sm:$0xff] %v1542
    %1735 = vst [vmem:[#allocation2 + $0x10] sm:$0xff] %v1543
    %1736 = vst [vmem:[#allocation2 + $0x18] sm:$0xff] %v1544
    %1737 = vst [vmem:[#allocation2 + $0x20] sm:$0xff] %v1545
    %1738 = vst [vmem:[#allocation2 + $0x28] sm:$0xff] %v1546
    %1739 = vst [vmem:[#allocation2 + $0x30] sm:$0xff] %v1547
    %1740 = vst [vmem:[#allocation2 + $0x38] sm:$0xff] %v1548
    %1741 = vst [vmem:[#allocation2 + $0x40] sm:$0xff] %v1549
    %1742 = vst [vmem:[#allocation2 + $0x48] sm:$0xff] %v1550
    %1743 = vst [vmem:[#allocation2 + $0x50] sm:$0xff] %v1551
    %1744 = vst [vmem:[#allocation2 + $0x58] sm:$0xff] %v1552
    %1745 = vst [vmem:[#allocation2 + $0x60] sm:$0xff] %v1553
    %1746 = vst [vmem:[#allocation2 + $0x68] sm:$0xff] %v1554
    %1747 = vst [vmem:[#allocation2 + $0x70] sm:$0xff] %v1555
    %1748 = vst [vmem:[#allocation2 + $0x78] sm:$0xff] %v1556
    %1749 = vst [vmem:[#allocation2 + $0x80] sm:$0xff] %v1557
    %1750 = vst [vmem:[#allocation2 + $0x88] sm:$0xff] %v1558
    %1751 = vst [vmem:[#allocation2 + $0x90] sm:$0xff] %v1559
    %1752 = vst [vmem:[#allocation2 + $0x98] sm:$0xff] %v1560
    %1753 = vst [vmem:[#allocation2 + $0xa0] sm:$0xff] %v1561
    %1754 = vst [vmem:[#allocation2 + $0xa8] sm:$0xff] %v1562
    %1755 = vst [vmem:[#allocation2 + $0xb0] sm:$0xff] %v1563
    %1756 = vst [vmem:[#allocation2 + $0xb8] sm:$0xff] %v1564
    %1757 = vst [vmem:[#allocation2 + $0xc0] sm:$0xff] %v1565
    %1758 = vst [vmem:[#allocation2 + $0xc8] sm:$0xff] %v1566
    %1759 = vst [vmem:[#allocation2 + $0xd0] sm:$0xff] %v1567
    %1760 = vst [vmem:[#allocation2 + $0xd8] sm:$0xff] %v1568
    %1761 = vst [vmem:[#allocation2 + $0xe0] sm:$0xff] %v1569
    %1762 = vst [vmem:[#allocation2 + $0xe8] sm:$0xff] %v1570
    %1763 = vst [vmem:[#allocation2 + $0xf0] sm:$0xff] %v1571
    %1764 = vst [vmem:[#allocation2 + $0xf8] sm:$0xff] %v1572
    %1765 = vst [vmem:[#allocation2 + $0x100] sm:$0xff] %v1573
    %1766 = vst [vmem:[#allocation2 + $0x108] sm:$0xff] %v1574
    %1767 = vst [vmem:[#allocation2 + $0x110] sm:$0xff] %v1575
    %1768 = vst [vmem:[#allocation2 + $0x118] sm:$0xff] %v1576
    %1769 = vst [vmem:[#allocation2 + $0x120] sm:$0xff] %v1577
    %1770 = vst [vmem:[#allocation2 + $0x128] sm:$0xff] %v1578
    %1771 = vst [vmem:[#allocation2 + $0x130] sm:$0xff] %v1579
    %1772 = vst [vmem:[#allocation2 + $0x138] sm:$0xff] %v1580
    %1773 = vst [vmem:[#allocation2 + $0x140] sm:$0xff] %v1581
    %1774 = vst [vmem:[#allocation2 + $0x148] sm:$0xff] %v1582
    %1775 = vst [vmem:[#allocation2 + $0x150] sm:$0xff] %v1583
    %1776 = vst [vmem:[#allocation2 + $0x158] sm:$0xff] %v1584
    %1777 = vst [vmem:[#allocation2 + $0x160] sm:$0xff] %v1585
    %1778 = vst [vmem:[#allocation2 + $0x168] sm:$0xff] %v1586
    %1779 = vst [vmem:[#allocation2 + $0x170] sm:$0xff] %v1587
    %1780 = vst [vmem:[#allocation2 + $0x178] sm:$0xff] %v1588
    %1781 = vst [vmem:[#allocation2 + $0x180] sm:$0xff] %v1589
    %1782 = vst [vmem:[#allocation2 + $0x188] sm:$0xff] %v1590
    %1783 = vst [vmem:[#allocation2 + $0x190] sm:$0xff] %v1591
    %1784 = vst [vmem:[#allocation2 + $0x198] sm:$0xff] %v1592
    %1785 = vst [vmem:[#allocation2 + $0x1a0] sm:$0xff] %v1593
    %1786 = vst [vmem:[#allocation2 + $0x1a8] sm:$0xff] %v1594
    %1787 = vst [vmem:[#allocation2 + $0x1b0] sm:$0xff] %v1595
    %1788 = vst [vmem:[#allocation2 + $0x1b8] sm:$0xff] %v1596
    %1789 = vst [vmem:[#allocation2 + $0x1c0] sm:$0xff] %v1597
    %1790 = vst [vmem:[#allocation2 + $0x1c8] sm:$0xff] %v1598
    %1791 = vst [vmem:[#allocation2 + $0x1d0] sm:$0xff] %v1599
    %1792 = vst [vmem:[#allocation2 + $0x1d8] sm:$0xff] %v1600
    %1793 = vst [vmem:[#allocation2 + $0x1e0] sm:$0xff] %v1601
    %1794 = vst [vmem:[#allocation2 + $0x1e8] sm:$0xff] %v1602
    %1795 = vst [vmem:[#allocation2 + $0x1f0] sm:$0xff] %v1603
    %1796 = vst [vmem:[#allocation2 + $0x1f8] sm:$0xff] %v1604
    %1797 = vst [vmem:[#allocation2 + $0x200] sm:$0xff] %v1605
    %1798 = vst [vmem:[#allocation2 + $0x208] sm:$0xff] %v1606
    %1799 = vst [vmem:[#allocation2 + $0x210] sm:$0xff] %v1607
    %1800 = vst [vmem:[#allocation2 + $0x218] sm:$0xff] %v1608
    %1801 = vst [vmem:[#allocation2 + $0x220] sm:$0xff] %v1609
    %1802 = vst [vmem:[#allocation2 + $0x228] sm:$0xff] %v1610
    %1803 = vst [vmem:[#allocation2 + $0x230] sm:$0xff] %v1611
    %1804 = vst [vmem:[#allocation2 + $0x238] sm:$0xff] %v1612
    %1805 = vst [vmem:[#allocation2 + $0x240] sm:$0xff] %v1613
    %1806 = vst [vmem:[#allocation2 + $0x248] sm:$0xff] %v1614
    %1807 = vst [vmem:[#allocation2 + $0x250] sm:$0xff] %v1615
    %1808 = vst [vmem:[#allocation2 + $0x258] sm:$0xff] %v1616
    %1809 = vst [vmem:[#allocation2 + $0x260] sm:$0xff] %v1617
    %1810 = vst [vmem:[#allocation2 + $0x268] sm:$0xff] %v1618
    %1811 = vst [vmem:[#allocation2 + $0x270] sm:$0xff] %v1619
    %1812 = vst [vmem:[#allocation2 + $0x278] sm:$0xff] %v1620
    %1813 = vst [vmem:[#allocation2 + $0x280] sm:$0xff] %v1621
    %1814 = vst [vmem:[#allocation2 + $0x288] sm:$0xff] %v1622
    %1815 = vst [vmem:[#allocation2 + $0x290] sm:$0xff] %v1623
    %1816 = vst [vmem:[#allocation2 + $0x298] sm:$0xff] %v1624
    %1817 = vst [vmem:[#allocation2 + $0x2a0] sm:$0xff] %v1625
    %1818 = vst [vmem:[#allocation2 + $0x2a8] sm:$0xff] %v1626
    %1819 = vst [vmem:[#allocation2 + $0x2b0] sm:$0xff] %v1627
    %1820 = vst [vmem:[#allocation2 + $0x2b8] sm:$0xff] %v1628
    %1821 = vst [vmem:[#allocation2 + $0x2c0] sm:$0xff] %v1629
    %1822 = vst [vmem:[#allocation2 + $0x2c8] sm:$0xff] %v1630
    %1823 = vst [vmem:[#allocation2 + $0x2d0] sm:$0xff] %v1631
    %1824 = vst [vmem:[#allocation2 + $0x2d8] sm:$0xff] %v1632
    %1825 = vst [vmem:[#allocation2 + $0x2e0] sm:$0xff] %v1633
    %1826 = vst [vmem:[#allocation2 + $0x2e8] sm:$0xff] %v1634
    %1827 = vst [vmem:[#allocation2 + $0x2f0] sm:$0xff] %v1635
    %1828 = vst [vmem:[#allocation2 + $0x2f8] sm:$0xff] %v1636
    %1829 = vst [vmem:[#allocation2 + $0x300] sm:$0xff] %v1637
    %1830 = vst [vmem:[#allocation2 + $0x308] sm:$0xff] %v1638
    %1831 = vst [vmem:[#allocation2 + $0x310] sm:$0xff] %v1639
    %1832 = vst [vmem:[#allocation2 + $0x318] sm:$0xff] %v1640
    %1833 = vst [vmem:[#allocation2 + $0x320] sm:$0xff] %v1641
    %1834 = vst [vmem:[#allocation2 + $0x328] sm:$0xff] %v1642
    %1835 = vst [vmem:[#allocation2 + $0x330] sm:$0xff] %v1643
    %1836 = vst [vmem:[#allocation2 + $0x338] sm:$0xff] %v1644
    %1837 = vst [vmem:[#allocation2 + $0x340] sm:$0xff] %v1645
    %1838 = vst [vmem:[#allocation2 + $0x348] sm:$0xff] %v1646
    %1839 = vst [vmem:[#allocation2 + $0x350] sm:$0xff] %v1647
    %1840 = vst [vmem:[#allocation2 + $0x358] sm:$0xff] %v1648
    %1841 = vst [vmem:[#allocation2 + $0x360] sm:$0xff] %v1649
    %1842 = vst [vmem:[#allocation2 + $0x368] sm:$0xff] %v1650
    %1843 = vst [vmem:[#allocation2 + $0x370] sm:$0xff] %v1651
    %1844 = vst [vmem:[#allocation2 + $0x378] sm:$0xff] %v1652
    %1845 = vst [vmem:[#allocation2 + $0x380] sm:$0xff] %v1653
    %1846 = vst [vmem:[#allocation2 + $0x388] sm:$0xff] %v1654
    %1847 = vst [vmem:[#allocation2 + $0x390] sm:$0xff] %v1655
    %1848 = vst [vmem:[#allocation2 + $0x398] sm:$0xff] %v1656
    %1849 = vst [vmem:[#allocation2 + $0x3a0] sm:$0xff] %v1657
    %1850 = vst [vmem:[#allocation2 + $0x3a8] sm:$0xff] %v1658
    %1851 = vst [vmem:[#allocation2 + $0x3b0] sm:$0xff] %v1659
    %1852 = vst [vmem:[#allocation2 + $0x3b8] sm:$0xff] %v1660
    %1853 = vst [vmem:[#allocation2 + $0x3c0] sm:$0xff] %v1661
    %1854 = vst [vmem:[#allocation2 + $0x3c8] sm:$0xff] %v1662
    %1855 = vst [vmem:[#allocation2 + $0x3d0] sm:$0xff] %v1663
    %1856 = vst [vmem:[#allocation2 + $0x3d8] sm:$0xff] %v1664
    %1857 = vst [vmem:[#allocation2 + $0x3e0] sm:$0xff] %v1665
    %1858 = vst [vmem:[#allocation2 + $0x3e8] sm:$0xff] %v1666
    %1859 = vst [vmem:[#allocation2 + $0x3f0] sm:$0xff] %v1667
    %1860 = vst [vmem:[#allocation2 + $0x3f8] sm:$0xff] %v1668
    %1861 = vst [vmem:[#allocation2 + $0x400] sm:$0xff] %v1669
    %1862 = vst [vmem:[#allocation2 + $0x408] sm:$0xff] %v1670
    %1863 = vst [vmem:[#allocation2 + $0x410] sm:$0xff] %v1671
    %1864 = vst [vmem:[#allocation2 + $0x418] sm:$0xff] %v1672
    %1865 = vst [vmem:[#allocation2 + $0x420] sm:$0xff] %v1673
    %1866 = vst [vmem:[#allocation2 + $0x428] sm:$0xff] %v1674
    %1867 = vst [vmem:[#allocation2 + $0x430] sm:$0xff] %v1675
    %1868 = vst [vmem:[#allocation2 + $0x438] sm:$0xff] %v1676
    %1869 = vst [vmem:[#allocation2 + $0x440] sm:$0xff] %v1677
    %1870 = vst [vmem:[#allocation2 + $0x448] sm:$0xff] %v1678
    %1871 = vst [vmem:[#allocation2 + $0x450] sm:$0xff] %v1679
    %1872 = vst [vmem:[#allocation2 + $0x458] sm:$0xff] %v1680
    %1873 = vst [vmem:[#allocation2 + $0x460] sm:$0xff] %v1681
    %1874 = vst [vmem:[#allocation2 + $0x468] sm:$0xff] %v1682
    %1875 = vst [vmem:[#allocation2 + $0x470] sm:$0xff] %v1683
    %1876 = vst [vmem:[#allocation2 + $0x478] sm:$0xff] %v1684
    %1877 = vst [vmem:[#allocation2 + $0x480] sm:$0xff] %v1685
    %1878 = vst [vmem:[#allocation2 + $0x488] sm:$0xff] %v1686
    %1879 = vst [vmem:[#allocation2 + $0x490] sm:$0xff] %v1687
    %1880 = vst [vmem:[#allocation2 + $0x498] sm:$0xff] %v1688
    %1881 = vst [vmem:[#allocation2 + $0x4a0] sm:$0xff] %v1689
    %1882 = vst [vmem:[#allocation2 + $0x4a8] sm:$0xff] %v1690
    %1883 = vst [vmem:[#allocation2 + $0x4b0] sm:$0xff] %v1691
    %1884 = vst [vmem:[#allocation2 + $0x4b8] sm:$0xff] %v1692
    %1885 = vst [vmem:[#allocation2 + $0x4c0] sm:$0xff] %v1693
    %1886 = vst [vmem:[#allocation2 + $0x4c8] sm:$0xff] %v1694
    %1887 = vst [vmem:[#allocation2 + $0x4d0] sm:$0xff] %v1695
    %1888 = vst [vmem:[#allocation2 + $0x4d8] sm:$0xff] %v1696
    %1889 = vst [vmem:[#allocation2 + $0x4e0] sm:$0xff] %v1697
    %1890 = vst [vmem:[#allocation2 + $0x4e8] sm:$0xff] %v1698
    %1891 = vst [vmem:[#allocation2 + $0x4f0] sm:$0xff] %v1699
    %1892 = vst [vmem:[#allocation2 + $0x4f8] sm:$0xff] %v1700
    %1893 = vst [vmem:[#allocation2 + $0x500] sm:$0xff] %v1701
    %1894 = vst [vmem:[#allocation2 + $0x508] sm:$0xff] %v1702
    %1895 = vst [vmem:[#allocation2 + $0x510] sm:$0xff] %v1703
    %1896 = vst [vmem:[#allocation2 + $0x518] sm:$0xff] %v1704
    %1897 = vst [vmem:[#allocation2 + $0x520] sm:$0xff] %v1705
    %1898 = vst [vmem:[#allocation2 + $0x528] sm:$0xff] %v1706
    %1899 = vst [vmem:[#allocation2 + $0x530] sm:$0xff] %v1707
    %1900 = vst [vmem:[#allocation2 + $0x538] sm:$0xff] %v1708
    %1901 = vst [vmem:[#allocation2 + $0x540] sm:$0xff] %v1709
    %1902 = vst [vmem:[#allocation2 + $0x548] sm:$0xff] %v1710
    %1903 = vst [vmem:[#allocation2 + $0x550] sm:$0xff] %v1711
    %1904 = vst [vmem:[#allocation2 + $0x558] sm:$0xff] %v1712
    %1905 = vst [vmem:[#allocation2 + $0x560] sm:$0xff] %v1713
    %1906 = vst [vmem:[#allocation2 + $0x568] sm:$0xff] %v1714
    %1907 = vst [vmem:[#allocation2 + $0x570] sm:$0xff] %v1715
    %1908 = vst [vmem:[#allocation2 + $0x578] sm:$0xff] %v1716
    %1909 = vst [vmem:[#allocation2 + $0x580] sm:$0xff] %v1717
    %1910 = vst [vmem:[#allocation2 + $0x588] sm:$0xff] %v1718
    %1911 = vst [vmem:[#allocation2 + $0x590] sm:$0xff] %v1719
    %1912 = vst [vmem:[#allocation2 + $0x598] sm:$0xff] %v1720
    %1913 = vst [vmem:[#allocation2 + $0x5a0] sm:$0xff] %v1721
    %1914 = vst [vmem:[#allocation2 + $0x5a8] sm:$0xff] %v1722
    %1915 = vst [vmem:[#allocation2 + $0x5b0] sm:$0xff] %v1723
    %1916 = vst [vmem:[#allocation2 + $0x5b8] sm:$0xff] %v1724
    %1917 = vst [vmem:[#allocation2 + $0x5c0] sm:$0xff] %v1725
    %1918 = vst [vmem:[#allocation2 + $0x5c8] sm:$0xff] %v1726
    %1919 = vst [vmem:[#allocation2 + $0x5d0] sm:$0xff] %v1727
    %1920 = vst [vmem:[#allocation2 + $0x5d8] sm:$0xff] %v1728
    %1921 = vst [vmem:[#allocation2 + $0x5e0] sm:$0xff] %v1729
    %1922 = vst [vmem:[#allocation2 + $0x5e8] sm:$0xff] %v1730
    %1923 = vst [vmem:[#allocation2 + $0x5f0] sm:$0xff] %v1731
    %1924 = vst [vmem:[#allocation2 + $0x5f8] sm:$0xff] %v1732
    // Predicated region
    $region22: #{tpu_custom_call.1} parent=1 // pred_check
      %p1925 = pneg %p19
    $region23: #{tpu_custom_call.1} parent=1 // pred_check_branch
      %1927 = sbr.rel (%p1925) target = $region25
    $region24: #{tpu_custom_call.1} parent=1 // pred_region
      %v1928 = vld [vmem:[#allocation2] sm:$0xff]
      %v1929 = vld [vmem:[#allocation2 + $0x8] sm:$0xff]
      %v1930 = vld [vmem:[#allocation2 + $0x10] sm:$0xff]
      %v1931 = vld [vmem:[#allocation2 + $0x18] sm:$0xff]
      %v1932 = vld [vmem:[#allocation2 + $0x20] sm:$0xff]
      %v1933 = vld [vmem:[#allocation2 + $0x28] sm:$0xff]
      %v1934 = vld [vmem:[#allocation2 + $0x30] sm:$0xff]
      %v1935 = vld [vmem:[#allocation2 + $0x38] sm:$0xff]
      %v1936 = vld [vmem:[#allocation2 + $0x40] sm:$0xff]
      %v1937 = vld [vmem:[#allocation2 + $0x48] sm:$0xff]
      %v1938 = vld [vmem:[#allocation2 + $0x50] sm:$0xff]
      %v1939 = vld [vmem:[#allocation2 + $0x58] sm:$0xff]
      %v1940 = vld [vmem:[#allocation2 + $0x60] sm:$0xff]
      %v1941 = vld [vmem:[#allocation2 + $0x68] sm:$0xff]
      %v1942 = vld [vmem:[#allocation2 + $0x70] sm:$0xff]
      %v1943 = vld [vmem:[#allocation2 + $0x78] sm:$0xff]
      %v1944 = vld [vmem:[#allocation2 + $0x80] sm:$0xff]
      %v1945 = vld [vmem:[#allocation2 + $0x88] sm:$0xff]
      %v1946 = vld [vmem:[#allocation2 + $0x90] sm:$0xff]
      %v1947 = vld [vmem:[#allocation2 + $0x98] sm:$0xff]
      %v1948 = vld [vmem:[#allocation2 + $0xa0] sm:$0xff]
      %v1949 = vld [vmem:[#allocation2 + $0xa8] sm:$0xff]
      %v1950 = vld [vmem:[#allocation2 + $0xb0] sm:$0xff]
      %v1951 = vld [vmem:[#allocation2 + $0xb8] sm:$0xff]
      %v1952 = vld [vmem:[#allocation2 + $0xc0] sm:$0xff]
      %v1953 = vld [vmem:[#allocation2 + $0xc8] sm:$0xff]
      %v1954 = vld [vmem:[#allocation2 + $0xd0] sm:$0xff]
      %v1955 = vld [vmem:[#allocation2 + $0xd8] sm:$0xff]
      %v1956 = vld [vmem:[#allocation2 + $0xe0] sm:$0xff]
      %v1957 = vld [vmem:[#allocation2 + $0xe8] sm:$0xff]
      %v1958 = vld [vmem:[#allocation2 + $0xf0] sm:$0xff]
      %v1959 = vld [vmem:[#allocation2 + $0xf8] sm:$0xff]
      %v1960 = vld [vmem:[#allocation2 + $0x100] sm:$0xff]
      %v1961 = vld [vmem:[#allocation2 + $0x108] sm:$0xff]
      %v1962 = vld [vmem:[#allocation2 + $0x110] sm:$0xff]
      %v1963 = vld [vmem:[#allocation2 + $0x118] sm:$0xff]
      %v1964 = vld [vmem:[#allocation2 + $0x120] sm:$0xff]
      %v1965 = vld [vmem:[#allocation2 + $0x128] sm:$0xff]
      %v1966 = vld [vmem:[#allocation2 + $0x130] sm:$0xff]
      %v1967 = vld [vmem:[#allocation2 + $0x138] sm:$0xff]
      %v1968 = vld [vmem:[#allocation2 + $0x140] sm:$0xff]
      %v1969 = vld [vmem:[#allocation2 + $0x148] sm:$0xff]
      %v1970 = vld [vmem:[#allocation2 + $0x150] sm:$0xff]
      %v1971 = vld [vmem:[#allocation2 + $0x158] sm:$0xff]
      %v1972 = vld [vmem:[#allocation2 + $0x160] sm:$0xff]
      %v1973 = vld [vmem:[#allocation2 + $0x168] sm:$0xff]
      %v1974 = vld [vmem:[#allocation2 + $0x170] sm:$0xff]
      %v1975 = vld [vmem:[#allocation2 + $0x178] sm:$0xff]
      %v1976 = vld [vmem:[#allocation2 + $0x180] sm:$0xff]
      %v1977 = vld [vmem:[#allocation2 + $0x188] sm:$0xff]
      %v1978 = vld [vmem:[#allocation2 + $0x190] sm:$0xff]
      %v1979 = vld [vmem:[#allocation2 + $0x198] sm:$0xff]
      %v1980 = vld [vmem:[#allocation2 + $0x1a0] sm:$0xff]
      %v1981 = vld [vmem:[#allocation2 + $0x1a8] sm:$0xff]
      %v1982 = vld [vmem:[#allocation2 + $0x1b0] sm:$0xff]
      %v1983 = vld [vmem:[#allocation2 + $0x1b8] sm:$0xff]
      %v1984 = vld [vmem:[#allocation2 + $0x1c0] sm:$0xff]
      %v1985 = vld [vmem:[#allocation2 + $0x1c8] sm:$0xff]
      %v1986 = vld [vmem:[#allocation2 + $0x1d0] sm:$0xff]
      %v1987 = vld [vmem:[#allocation2 + $0x1d8] sm:$0xff]
      %v1988 = vld [vmem:[#allocation2 + $0x1e0] sm:$0xff]
      %v1989 = vld [vmem:[#allocation2 + $0x1e8] sm:$0xff]
      %v1990 = vld [vmem:[#allocation2 + $0x1f0] sm:$0xff]
      %v1991 = vld [vmem:[#allocation2 + $0x1f8] sm:$0xff]
      %v1992 = vld [vmem:[#allocation2 + $0x200] sm:$0xff]
      %v1993 = vld [vmem:[#allocation2 + $0x208] sm:$0xff]
      %v1994 = vld [vmem:[#allocation2 + $0x210] sm:$0xff]
      %v1995 = vld [vmem:[#allocation2 + $0x218] sm:$0xff]
      %v1996 = vld [vmem:[#allocation2 + $0x220] sm:$0xff]
      %v1997 = vld [vmem:[#allocation2 + $0x228] sm:$0xff]
      %v1998 = vld [vmem:[#allocation2 + $0x230] sm:$0xff]
      %v1999 = vld [vmem:[#allocation2 + $0x238] sm:$0xff]
      %v2000 = vld [vmem:[#allocation2 + $0x240] sm:$0xff]
      %v2001 = vld [vmem:[#allocation2 + $0x248] sm:$0xff]
      %v2002 = vld [vmem:[#allocation2 + $0x250] sm:$0xff]
      %v2003 = vld [vmem:[#allocation2 + $0x258] sm:$0xff]
      %v2004 = vld [vmem:[#allocation2 + $0x260] sm:$0xff]
      %v2005 = vld [vmem:[#allocation2 + $0x268] sm:$0xff]
      %v2006 = vld [vmem:[#allocation2 + $0x270] sm:$0xff]
      %v2007 = vld [vmem:[#allocation2 + $0x278] sm:$0xff]
      %v2008 = vld [vmem:[#allocation2 + $0x280] sm:$0xff]
      %v2009 = vld [vmem:[#allocation2 + $0x288] sm:$0xff]
      %v2010 = vld [vmem:[#allocation2 + $0x290] sm:$0xff]
      %v2011 = vld [vmem:[#allocation2 + $0x298] sm:$0xff]
      %v2012 = vld [vmem:[#allocation2 + $0x2a0] sm:$0xff]
      %v2013 = vld [vmem:[#allocation2 + $0x2a8] sm:$0xff]
      %v2014 = vld [vmem:[#allocation2 + $0x2b0] sm:$0xff]
      %v2015 = vld [vmem:[#allocation2 + $0x2b8] sm:$0xff]
      %v2016 = vld [vmem:[#allocation2 + $0x2c0] sm:$0xff]
      %v2017 = vld [vmem:[#allocation2 + $0x2c8] sm:$0xff]
      %v2018 = vld [vmem:[#allocation2 + $0x2d0] sm:$0xff]
      %v2019 = vld [vmem:[#allocation2 + $0x2d8] sm:$0xff]
      %v2020 = vld [vmem:[#allocation2 + $0x2e0] sm:$0xff]
      %v2021 = vld [vmem:[#allocation2 + $0x2e8] sm:$0xff]
      %v2022 = vld [vmem:[#allocation2 + $0x2f0] sm:$0xff]
      %v2023 = vld [vmem:[#allocation2 + $0x2f8] sm:$0xff]
      %v2024 = vld [vmem:[#allocation2 + $0x300] sm:$0xff]
      %v2025 = vld [vmem:[#allocation2 + $0x308] sm:$0xff]
      %v2026 = vld [vmem:[#allocation2 + $0x310] sm:$0xff]
      %v2027 = vld [vmem:[#allocation2 + $0x318] sm:$0xff]
      %v2028 = vld [vmem:[#allocation2 + $0x320] sm:$0xff]
      %v2029 = vld [vmem:[#allocation2 + $0x328] sm:$0xff]
      %v2030 = vld [vmem:[#allocation2 + $0x330] sm:$0xff]
      %v2031 = vld [vmem:[#allocation2 + $0x338] sm:$0xff]
      %v2032 = vld [vmem:[#allocation2 + $0x340] sm:$0xff]
      %v2033 = vld [vmem:[#allocation2 + $0x348] sm:$0xff]
      %v2034 = vld [vmem:[#allocation2 + $0x350] sm:$0xff]
      %v2035 = vld [vmem:[#allocation2 + $0x358] sm:$0xff]
      %v2036 = vld [vmem:[#allocation2 + $0x360] sm:$0xff]
      %v2037 = vld [vmem:[#allocation2 + $0x368] sm:$0xff]
      %v2038 = vld [vmem:[#allocation2 + $0x370] sm:$0xff]
      %v2039 = vld [vmem:[#allocation2 + $0x378] sm:$0xff]
      %v2040 = vld [vmem:[#allocation2 + $0x380] sm:$0xff]
      %v2041 = vld [vmem:[#allocation2 + $0x388] sm:$0xff]
      %v2042 = vld [vmem:[#allocation2 + $0x390] sm:$0xff]
      %v2043 = vld [vmem:[#allocation2 + $0x398] sm:$0xff]
      %v2044 = vld [vmem:[#allocation2 + $0x3a0] sm:$0xff]
      %v2045 = vld [vmem:[#allocation2 + $0x3a8] sm:$0xff]
      %v2046 = vld [vmem:[#allocation2 + $0x3b0] sm:$0xff]
      %v2047 = vld [vmem:[#allocation2 + $0x3b8] sm:$0xff]
      %v2048 = vld [vmem:[#allocation2 + $0x3c0] sm:$0xff]
      %v2049 = vld [vmem:[#allocation2 + $0x3c8] sm:$0xff]
      %v2050 = vld [vmem:[#allocation2 + $0x3d0] sm:$0xff]
      %v2051 = vld [vmem:[#allocation2 + $0x3d8] sm:$0xff]
      %v2052 = vld [vmem:[#allocation2 + $0x3e0] sm:$0xff]
      %v2053 = vld [vmem:[#allocation2 + $0x3e8] sm:$0xff]
      %v2054 = vld [vmem:[#allocation2 + $0x3f0] sm:$0xff]
      %v2055 = vld [vmem:[#allocation2 + $0x3f8] sm:$0xff]
      %v2056 = vld [vmem:[#allocation2 + $0x400] sm:$0xff]
      %v2057 = vld [vmem:[#allocation2 + $0x408] sm:$0xff]
      %v2058 = vld [vmem:[#allocation2 + $0x410] sm:$0xff]
      %v2059 = vld [vmem:[#allocation2 + $0x418] sm:$0xff]
      %v2060 = vld [vmem:[#allocation2 + $0x420] sm:$0xff]
      %v2061 = vld [vmem:[#allocation2 + $0x428] sm:$0xff]
      %v2062 = vld [vmem:[#allocation2 + $0x430] sm:$0xff]
      %v2063 = vld [vmem:[#allocation2 + $0x438] sm:$0xff]
      %v2064 = vld [vmem:[#allocation2 + $0x440] sm:$0xff]
      %v2065 = vld [vmem:[#allocation2 + $0x448] sm:$0xff]
      %v2066 = vld [vmem:[#allocation2 + $0x450] sm:$0xff]
      %v2067 = vld [vmem:[#allocation2 + $0x458] sm:$0xff]
      %v2068 = vld [vmem:[#allocation2 + $0x460] sm:$0xff]
      %v2069 = vld [vmem:[#allocation2 + $0x468] sm:$0xff]
      %v2070 = vld [vmem:[#allocation2 + $0x470] sm:$0xff]
      %v2071 = vld [vmem:[#allocation2 + $0x478] sm:$0xff]
      %v2072 = vld [vmem:[#allocation2 + $0x480] sm:$0xff]
      %v2073 = vld [vmem:[#allocation2 + $0x488] sm:$0xff]
      %v2074 = vld [vmem:[#allocation2 + $0x490] sm:$0xff]
      %v2075 = vld [vmem:[#allocation2 + $0x498] sm:$0xff]
      %v2076 = vld [vmem:[#allocation2 + $0x4a0] sm:$0xff]
      %v2077 = vld [vmem:[#allocation2 + $0x4a8] sm:$0xff]
      %v2078 = vld [vmem:[#allocation2 + $0x4b0] sm:$0xff]
      %v2079 = vld [vmem:[#allocation2 + $0x4b8] sm:$0xff]
      %v2080 = vld [vmem:[#allocation2 + $0x4c0] sm:$0xff]
      %v2081 = vld [vmem:[#allocation2 + $0x4c8] sm:$0xff]
      %v2082 = vld [vmem:[#allocation2 + $0x4d0] sm:$0xff]
      %v2083 = vld [vmem:[#allocation2 + $0x4d8] sm:$0xff]
      %v2084 = vld [vmem:[#allocation2 + $0x4e0] sm:$0xff]
      %v2085 = vld [vmem:[#allocation2 + $0x4e8] sm:$0xff]
      %v2086 = vld [vmem:[#allocation2 + $0x4f0] sm:$0xff]
      %v2087 = vld [vmem:[#allocation2 + $0x4f8] sm:$0xff]
      %v2088 = vld [vmem:[#allocation2 + $0x500] sm:$0xff]
      %v2089 = vld [vmem:[#allocation2 + $0x508] sm:$0xff]
      %v2090 = vld [vmem:[#allocation2 + $0x510] sm:$0xff]
      %v2091 = vld [vmem:[#allocation2 + $0x518] sm:$0xff]
      %v2092 = vld [vmem:[#allocation2 + $0x520] sm:$0xff]
      %v2093 = vld [vmem:[#allocation2 + $0x528] sm:$0xff]
      %v2094 = vld [vmem:[#allocation2 + $0x530] sm:$0xff]
      %v2095 = vld [vmem:[#allocation2 + $0x538] sm:$0xff]
      %v2096 = vld [vmem:[#allocation2 + $0x540] sm:$0xff]
      %v2097 = vld [vmem:[#allocation2 + $0x548] sm:$0xff]
      %v2098 = vld [vmem:[#allocation2 + $0x550] sm:$0xff]
      %v2099 = vld [vmem:[#allocation2 + $0x558] sm:$0xff]
      %v2100 = vld [vmem:[#allocation2 + $0x560] sm:$0xff]
      %v2101 = vld [vmem:[#allocation2 + $0x568] sm:$0xff]
      %v2102 = vld [vmem:[#allocation2 + $0x570] sm:$0xff]
      %v2103 = vld [vmem:[#allocation2 + $0x578] sm:$0xff]
      %v2104 = vld [vmem:[#allocation2 + $0x580] sm:$0xff]
      %v2105 = vld [vmem:[#allocation2 + $0x588] sm:$0xff]
      %v2106 = vld [vmem:[#allocation2 + $0x590] sm:$0xff]
      %v2107 = vld [vmem:[#allocation2 + $0x598] sm:$0xff]
      %v2108 = vld [vmem:[#allocation2 + $0x5a0] sm:$0xff]
      %v2109 = vld [vmem:[#allocation2 + $0x5a8] sm:$0xff]
      %v2110 = vld [vmem:[#allocation2 + $0x5b0] sm:$0xff]
      %v2111 = vld [vmem:[#allocation2 + $0x5b8] sm:$0xff]
      %v2112 = vld [vmem:[#allocation2 + $0x5c0] sm:$0xff]
      %v2113 = vld [vmem:[#allocation2 + $0x5c8] sm:$0xff]
      %v2114 = vld [vmem:[#allocation2 + $0x5d0] sm:$0xff]
      %v2115 = vld [vmem:[#allocation2 + $0x5d8] sm:$0xff]
      %v2116 = vld [vmem:[#allocation2 + $0x5e0] sm:$0xff]
      %v2117 = vld [vmem:[#allocation2 + $0x5e8] sm:$0xff]
      %v2118 = vld [vmem:[#allocation2 + $0x5f0] sm:$0xff]
      %v2119 = vld [vmem:[#allocation2 + $0x5f8] sm:$0xff]
      %v2120 = vld [vmem:[%s2] sm:$0x7]
      %v2122 = vlaneseq
      %v2123 = vshrl.u32 %v2122, 7
      %v2124 = vsub.s32 0, %v2123
      %v2125 = vrot.slane %v2120, %v2124
      %v2126 = vlaneseq
      %v2127 = vshrl.u32 %v2126, 7
      %v2128 = vsub.s32 1, %v2127
      %v2129 = vrot.slane %v2120, %v2128
      %v2130 = vlaneseq
      %v2131 = vshrl.u32 %v2130, 7
      %v2132 = vsub.s32 2, %v2131
      %v2133 = vrot.slane %v2120, %v2132
      %v2137 = vmul.f32 %v1928, %v2125
      %v2138 = vmul.f32 %v1929, %v2129
      %v2139 = vmul.f32 %v1930, %v2133
      %v2140 = vmul.f32 %v1931, %v2125
      %v2141 = vmul.f32 %v1932, %v2129
      %v2142 = vmul.f32 %v1933, %v2133
      %v2143 = vmul.f32 %v1934, %v2125
      %v2144 = vmul.f32 %v1935, %v2129
      %v2145 = vmul.f32 %v1936, %v2133
      %v2146 = vmul.f32 %v1937, %v2125
      %v2147 = vmul.f32 %v1938, %v2129
      %v2148 = vmul.f32 %v1939, %v2133
      %v2149 = vmul.f32 %v1940, %v2125
      %v2150 = vmul.f32 %v1941, %v2129
      %v2151 = vmul.f32 %v1942, %v2133
      %v2152 = vmul.f32 %v1943, %v2125
      %v2153 = vmul.f32 %v1944, %v2129
      %v2154 = vmul.f32 %v1945, %v2133
      %v2155 = vmul.f32 %v1946, %v2125
      %v2156 = vmul.f32 %v1947, %v2129
      %v2157 = vmul.f32 %v1948, %v2133
      %v2158 = vmul.f32 %v1949, %v2125
      %v2159 = vmul.f32 %v1950, %v2129
      %v2160 = vmul.f32 %v1951, %v2133
      %v2161 = vmul.f32 %v1952, %v2125
      %v2162 = vmul.f32 %v1953, %v2129
      %v2163 = vmul.f32 %v1954, %v2133
      %v2164 = vmul.f32 %v1955, %v2125
      %v2165 = vmul.f32 %v1956, %v2129
      %v2166 = vmul.f32 %v1957, %v2133
      %v2167 = vmul.f32 %v1958, %v2125
      %v2168 = vmul.f32 %v1959, %v2129
      %v2169 = vmul.f32 %v1960, %v2133
      %v2170 = vmul.f32 %v1961, %v2125
      %v2171 = vmul.f32 %v1962, %v2129
      %v2172 = vmul.f32 %v1963, %v2133
      %v2173 = vmul.f32 %v1964, %v2125
      %v2174 = vmul.f32 %v1965, %v2129
      %v2175 = vmul.f32 %v1966, %v2133
      %v2176 = vmul.f32 %v1967, %v2125
      %v2177 = vmul.f32 %v1968, %v2129
      %v2178 = vmul.f32 %v1969, %v2133
      %v2179 = vmul.f32 %v1970, %v2125
      %v2180 = vmul.f32 %v1971, %v2129
      %v2181 = vmul.f32 %v1972, %v2133
      %v2182 = vmul.f32 %v1973, %v2125
      %v2183 = vmul.f32 %v1974, %v2129
      %v2184 = vmul.f32 %v1975, %v2133
      %v2185 = vmul.f32 %v1976, %v2125
      %v2186 = vmul.f32 %v1977, %v2129
      %v2187 = vmul.f32 %v1978, %v2133
      %v2188 = vmul.f32 %v1979, %v2125
      %v2189 = vmul.f32 %v1980, %v2129
      %v2190 = vmul.f32 %v1981, %v2133
      %v2191 = vmul.f32 %v1982, %v2125
      %v2192 = vmul.f32 %v1983, %v2129
      %v2193 = vmul.f32 %v1984, %v2133
      %v2194 = vmul.f32 %v1985, %v2125
      %v2195 = vmul.f32 %v1986, %v2129
      %v2196 = vmul.f32 %v1987, %v2133
      %v2197 = vmul.f32 %v1988, %v2125
      %v2198 = vmul.f32 %v1989, %v2129
      %v2199 = vmul.f32 %v1990, %v2133
      %v2200 = vmul.f32 %v1991, %v2125
      %v2201 = vmul.f32 %v1992, %v2129
      %v2202 = vmul.f32 %v1993, %v2133
      %v2203 = vmul.f32 %v1994, %v2125
      %v2204 = vmul.f32 %v1995, %v2129
      %v2205 = vmul.f32 %v1996, %v2133
      %v2206 = vmul.f32 %v1997, %v2125
      %v2207 = vmul.f32 %v1998, %v2129
      %v2208 = vmul.f32 %v1999, %v2133
      %v2209 = vmul.f32 %v2000, %v2125
      %v2210 = vmul.f32 %v2001, %v2129
      %v2211 = vmul.f32 %v2002, %v2133
      %v2212 = vmul.f32 %v2003, %v2125
      %v2213 = vmul.f32 %v2004, %v2129
      %v2214 = vmul.f32 %v2005, %v2133
      %v2215 = vmul.f32 %v2006, %v2125
      %v2216 = vmul.f32 %v2007, %v2129
      %v2217 = vmul.f32 %v2008, %v2133
      %v2218 = vmul.f32 %v2009, %v2125
      %v2219 = vmul.f32 %v2010, %v2129
      %v2220 = vmul.f32 %v2011, %v2133
      %v2221 = vmul.f32 %v2012, %v2125
      %v2222 = vmul.f32 %v2013, %v2129
      %v2223 = vmul.f32 %v2014, %v2133
      %v2224 = vmul.f32 %v2015, %v2125
      %v2225 = vmul.f32 %v2016, %v2129
      %v2226 = vmul.f32 %v2017, %v2133
      %v2227 = vmul.f32 %v2018, %v2125
      %v2228 = vmul.f32 %v2019, %v2129
      %v2229 = vmul.f32 %v2020, %v2133
      %v2230 = vmul.f32 %v2021, %v2125
      %v2231 = vmul.f32 %v2022, %v2129
      %v2232 = vmul.f32 %v2023, %v2133
      %v2233 = vmul.f32 %v2024, %v2125
      %v2234 = vmul.f32 %v2025, %v2129
      %v2235 = vmul.f32 %v2026, %v2133
      %v2236 = vmul.f32 %v2027, %v2125
      %v2237 = vmul.f32 %v2028, %v2129
      %v2238 = vmul.f32 %v2029, %v2133
      %v2239 = vmul.f32 %v2030, %v2125
      %v2240 = vmul.f32 %v2031, %v2129
      %v2241 = vmul.f32 %v2032, %v2133
      %v2242 = vmul.f32 %v2033, %v2125
      %v2243 = vmul.f32 %v2034, %v2129
      %v2244 = vmul.f32 %v2035, %v2133
      %v2245 = vmul.f32 %v2036, %v2125
      %v2246 = vmul.f32 %v2037, %v2129
      %v2247 = vmul.f32 %v2038, %v2133
      %v2248 = vmul.f32 %v2039, %v2125
      %v2249 = vmul.f32 %v2040, %v2129
      %v2250 = vmul.f32 %v2041, %v2133
      %v2251 = vmul.f32 %v2042, %v2125
      %v2252 = vmul.f32 %v2043, %v2129
      %v2253 = vmul.f32 %v2044, %v2133
      %v2254 = vmul.f32 %v2045, %v2125
      %v2255 = vmul.f32 %v2046, %v2129
      %v2256 = vmul.f32 %v2047, %v2133
      %v2257 = vmul.f32 %v2048, %v2125
      %v2258 = vmul.f32 %v2049, %v2129
      %v2259 = vmul.f32 %v2050, %v2133
      %v2260 = vmul.f32 %v2051, %v2125
      %v2261 = vmul.f32 %v2052, %v2129
      %v2262 = vmul.f32 %v2053, %v2133
      %v2263 = vmul.f32 %v2054, %v2125
      %v2264 = vmul.f32 %v2055, %v2129
      %v2265 = vmul.f32 %v2056, %v2133
      %v2266 = vmul.f32 %v2057, %v2125
      %v2267 = vmul.f32 %v2058, %v2129
      %v2268 = vmul.f32 %v2059, %v2133
      %v2269 = vmul.f32 %v2060, %v2125
      %v2270 = vmul.f32 %v2061, %v2129
      %v2271 = vmul.f32 %v2062, %v2133
      %v2272 = vmul.f32 %v2063, %v2125
      %v2273 = vmul.f32 %v2064, %v2129
      %v2274 = vmul.f32 %v2065, %v2133
      %v2275 = vmul.f32 %v2066, %v2125
      %v2276 = vmul.f32 %v2067, %v2129
      %v2277 = vmul.f32 %v2068, %v2133
      %v2278 = vmul.f32 %v2069, %v2125
      %v2279 = vmul.f32 %v2070, %v2129
      %v2280 = vmul.f32 %v2071, %v2133
      %v2281 = vmul.f32 %v2072, %v2125
      %v2282 = vmul.f32 %v2073, %v2129
      %v2283 = vmul.f32 %v2074, %v2133
      %v2284 = vmul.f32 %v2075, %v2125
      %v2285 = vmul.f32 %v2076, %v2129
      %v2286 = vmul.f32 %v2077, %v2133
      %v2287 = vmul.f32 %v2078, %v2125
      %v2288 = vmul.f32 %v2079, %v2129
      %v2289 = vmul.f32 %v2080, %v2133
      %v2290 = vmul.f32 %v2081, %v2125
      %v2291 = vmul.f32 %v2082, %v2129
      %v2292 = vmul.f32 %v2083, %v2133
      %v2293 = vmul.f32 %v2084, %v2125
      %v2294 = vmul.f32 %v2085, %v2129
      %v2295 = vmul.f32 %v2086, %v2133
      %v2296 = vmul.f32 %v2087, %v2125
      %v2297 = vmul.f32 %v2088, %v2129
      %v2298 = vmul.f32 %v2089, %v2133
      %v2299 = vmul.f32 %v2090, %v2125
      %v2300 = vmul.f32 %v2091, %v2129
      %v2301 = vmul.f32 %v2092, %v2133
      %v2302 = vmul.f32 %v2093, %v2125
      %v2303 = vmul.f32 %v2094, %v2129
      %v2304 = vmul.f32 %v2095, %v2133
      %v2305 = vmul.f32 %v2096, %v2125
      %v2306 = vmul.f32 %v2097, %v2129
      %v2307 = vmul.f32 %v2098, %v2133
      %v2308 = vmul.f32 %v2099, %v2125
      %v2309 = vmul.f32 %v2100, %v2129
      %v2310 = vmul.f32 %v2101, %v2133
      %v2311 = vmul.f32 %v2102, %v2125
      %v2312 = vmul.f32 %v2103, %v2129
      %v2313 = vmul.f32 %v2104, %v2133
      %v2314 = vmul.f32 %v2105, %v2125
      %v2315 = vmul.f32 %v2106, %v2129
      %v2316 = vmul.f32 %v2107, %v2133
      %v2317 = vmul.f32 %v2108, %v2125
      %v2318 = vmul.f32 %v2109, %v2129
      %v2319 = vmul.f32 %v2110, %v2133
      %v2320 = vmul.f32 %v2111, %v2125
      %v2321 = vmul.f32 %v2112, %v2129
      %v2322 = vmul.f32 %v2113, %v2133
      %v2323 = vmul.f32 %v2114, %v2125
      %v2324 = vmul.f32 %v2115, %v2129
      %v2325 = vmul.f32 %v2116, %v2133
      %v2326 = vmul.f32 %v2117, %v2125
      %v2327 = vmul.f32 %v2118, %v2129
      %v2328 = vmul.f32 %v2119, %v2133
      %v2329 = vld [vmem:[%s3] sm:$0x7]
      %v2331 = vlaneseq
      %v2332 = vshrl.u32 %v2331, 7
      %v2333 = vsub.s32 0, %v2332
      %v2334 = vrot.slane %v2329, %v2333
      %v2335 = vlaneseq
      %v2336 = vshrl.u32 %v2335, 7
      %v2337 = vsub.s32 1, %v2336
      %v2338 = vrot.slane %v2329, %v2337
      %v2339 = vlaneseq
      %v2340 = vshrl.u32 %v2339, 7
      %v2341 = vsub.s32 2, %v2340
      %v2342 = vrot.slane %v2329, %v2341
      %v2346 = vadd.f32 %v2137, %v2334
      %v2347 = vadd.f32 %v2138, %v2338
      %v2348 = vadd.f32 %v2139, %v2342
      %v2349 = vadd.f32 %v2140, %v2334
      %v2350 = vadd.f32 %v2141, %v2338
      %v2351 = vadd.f32 %v2142, %v2342
      %v2352 = vadd.f32 %v2143, %v2334
      %v2353 = vadd.f32 %v2144, %v2338
      %v2354 = vadd.f32 %v2145, %v2342
      %v2355 = vadd.f32 %v2146, %v2334
      %v2356 = vadd.f32 %v2147, %v2338
      %v2357 = vadd.f32 %v2148, %v2342
      %v2358 = vadd.f32 %v2149, %v2334
      %v2359 = vadd.f32 %v2150, %v2338
      %v2360 = vadd.f32 %v2151, %v2342
      %v2361 = vadd.f32 %v2152, %v2334
      %v2362 = vadd.f32 %v2153, %v2338
      %v2363 = vadd.f32 %v2154, %v2342
      %v2364 = vadd.f32 %v2155, %v2334
      %v2365 = vadd.f32 %v2156, %v2338
      %v2366 = vadd.f32 %v2157, %v2342
      %v2367 = vadd.f32 %v2158, %v2334
      %v2368 = vadd.f32 %v2159, %v2338
      %v2369 = vadd.f32 %v2160, %v2342
      %v2370 = vadd.f32 %v2161, %v2334
      %v2371 = vadd.f32 %v2162, %v2338
      %v2372 = vadd.f32 %v2163, %v2342
      %v2373 = vadd.f32 %v2164, %v2334
      %v2374 = vadd.f32 %v2165, %v2338
      %v2375 = vadd.f32 %v2166, %v2342
      %v2376 = vadd.f32 %v2167, %v2334
      %v2377 = vadd.f32 %v2168, %v2338
      %v2378 = vadd.f32 %v2169, %v2342
      %v2379 = vadd.f32 %v2170, %v2334
      %v2380 = vadd.f32 %v2171, %v2338
      %v2381 = vadd.f32 %v2172, %v2342
      %v2382 = vadd.f32 %v2173, %v2334
      %v2383 = vadd.f32 %v2174, %v2338
      %v2384 = vadd.f32 %v2175, %v2342
      %v2385 = vadd.f32 %v2176, %v2334
      %v2386 = vadd.f32 %v2177, %v2338
      %v2387 = vadd.f32 %v2178, %v2342
      %v2388 = vadd.f32 %v2179, %v2334
      %v2389 = vadd.f32 %v2180, %v2338
      %v2390 = vadd.f32 %v2181, %v2342
      %v2391 = vadd.f32 %v2182, %v2334
      %v2392 = vadd.f32 %v2183, %v2338
      %v2393 = vadd.f32 %v2184, %v2342
      %v2394 = vadd.f32 %v2185, %v2334
      %v2395 = vadd.f32 %v2186, %v2338
      %v2396 = vadd.f32 %v2187, %v2342
      %v2397 = vadd.f32 %v2188, %v2334
      %v2398 = vadd.f32 %v2189, %v2338
      %v2399 = vadd.f32 %v2190, %v2342
      %v2400 = vadd.f32 %v2191, %v2334
      %v2401 = vadd.f32 %v2192, %v2338
      %v2402 = vadd.f32 %v2193, %v2342
      %v2403 = vadd.f32 %v2194, %v2334
      %v2404 = vadd.f32 %v2195, %v2338
      %v2405 = vadd.f32 %v2196, %v2342
      %v2406 = vadd.f32 %v2197, %v2334
      %v2407 = vadd.f32 %v2198, %v2338
      %v2408 = vadd.f32 %v2199, %v2342
      %v2409 = vadd.f32 %v2200, %v2334
      %v2410 = vadd.f32 %v2201, %v2338
      %v2411 = vadd.f32 %v2202, %v2342
      %v2412 = vadd.f32 %v2203, %v2334
      %v2413 = vadd.f32 %v2204, %v2338
      %v2414 = vadd.f32 %v2205, %v2342
      %v2415 = vadd.f32 %v2206, %v2334
      %v2416 = vadd.f32 %v2207, %v2338
      %v2417 = vadd.f32 %v2208, %v2342
      %v2418 = vadd.f32 %v2209, %v2334
      %v2419 = vadd.f32 %v2210, %v2338
      %v2420 = vadd.f32 %v2211, %v2342
      %v2421 = vadd.f32 %v2212, %v2334
      %v2422 = vadd.f32 %v2213, %v2338
      %v2423 = vadd.f32 %v2214, %v2342
      %v2424 = vadd.f32 %v2215, %v2334
      %v2425 = vadd.f32 %v2216, %v2338
      %v2426 = vadd.f32 %v2217, %v2342
      %v2427 = vadd.f32 %v2218, %v2334
      %v2428 = vadd.f32 %v2219, %v2338
      %v2429 = vadd.f32 %v2220, %v2342
      %v2430 = vadd.f32 %v2221, %v2334
      %v2431 = vadd.f32 %v2222, %v2338
      %v2432 = vadd.f32 %v2223, %v2342
      %v2433 = vadd.f32 %v2224, %v2334
      %v2434 = vadd.f32 %v2225, %v2338
      %v2435 = vadd.f32 %v2226, %v2342
      %v2436 = vadd.f32 %v2227, %v2334
      %v2437 = vadd.f32 %v2228, %v2338
      %v2438 = vadd.f32 %v2229, %v2342
      %v2439 = vadd.f32 %v2230, %v2334
      %v2440 = vadd.f32 %v2231, %v2338
      %v2441 = vadd.f32 %v2232, %v2342
      %v2442 = vadd.f32 %v2233, %v2334
      %v2443 = vadd.f32 %v2234, %v2338
      %v2444 = vadd.f32 %v2235, %v2342
      %v2445 = vadd.f32 %v2236, %v2334
      %v2446 = vadd.f32 %v2237, %v2338
      %v2447 = vadd.f32 %v2238, %v2342
      %v2448 = vadd.f32 %v2239, %v2334
      %v2449 = vadd.f32 %v2240, %v2338
      %v2450 = vadd.f32 %v2241, %v2342
      %v2451 = vadd.f32 %v2242, %v2334
      %v2452 = vadd.f32 %v2243, %v2338
      %v2453 = vadd.f32 %v2244, %v2342
      %v2454 = vadd.f32 %v2245, %v2334
      %v2455 = vadd.f32 %v2246, %v2338
      %v2456 = vadd.f32 %v2247, %v2342
      %v2457 = vadd.f32 %v2248, %v2334
      %v2458 = vadd.f32 %v2249, %v2338
      %v2459 = vadd.f32 %v2250, %v2342
      %v2460 = vadd.f32 %v2251, %v2334
      %v2461 = vadd.f32 %v2252, %v2338
      %v2462 = vadd.f32 %v2253, %v2342
      %v2463 = vadd.f32 %v2254, %v2334
      %v2464 = vadd.f32 %v2255, %v2338
      %v2465 = vadd.f32 %v2256, %v2342
      %v2466 = vadd.f32 %v2257, %v2334
      %v2467 = vadd.f32 %v2258, %v2338
      %v2468 = vadd.f32 %v2259, %v2342
      %v2469 = vadd.f32 %v2260, %v2334
      %v2470 = vadd.f32 %v2261, %v2338
      %v2471 = vadd.f32 %v2262, %v2342
      %v2472 = vadd.f32 %v2263, %v2334
      %v2473 = vadd.f32 %v2264, %v2338
      %v2474 = vadd.f32 %v2265, %v2342
      %v2475 = vadd.f32 %v2266, %v2334
      %v2476 = vadd.f32 %v2267, %v2338
      %v2477 = vadd.f32 %v2268, %v2342
      %v2478 = vadd.f32 %v2269, %v2334
      %v2479 = vadd.f32 %v2270, %v2338
      %v2480 = vadd.f32 %v2271, %v2342
      %v2481 = vadd.f32 %v2272, %v2334
      %v2482 = vadd.f32 %v2273, %v2338
      %v2483 = vadd.f32 %v2274, %v2342
      %v2484 = vadd.f32 %v2275, %v2334
      %v2485 = vadd.f32 %v2276, %v2338
      %v2486 = vadd.f32 %v2277, %v2342
      %v2487 = vadd.f32 %v2278, %v2334
      %v2488 = vadd.f32 %v2279, %v2338
      %v2489 = vadd.f32 %v2280, %v2342
      %v2490 = vadd.f32 %v2281, %v2334
      %v2491 = vadd.f32 %v2282, %v2338
      %v2492 = vadd.f32 %v2283, %v2342
      %v2493 = vadd.f32 %v2284, %v2334
      %v2494 = vadd.f32 %v2285, %v2338
      %v2495 = vadd.f32 %v2286, %v2342
      %v2496 = vadd.f32 %v2287, %v2334
      %v2497 = vadd.f32 %v2288, %v2338
      %v2498 = vadd.f32 %v2289, %v2342
      %v2499 = vadd.f32 %v2290, %v2334
      %v2500 = vadd.f32 %v2291, %v2338
      %v2501 = vadd.f32 %v2292, %v2342
      %v2502 = vadd.f32 %v2293, %v2334
      %v2503 = vadd.f32 %v2294, %v2338
      %v2504 = vadd.f32 %v2295, %v2342
      %v2505 = vadd.f32 %v2296, %v2334
      %v2506 = vadd.f32 %v2297, %v2338
      %v2507 = vadd.f32 %v2298, %v2342
      %v2508 = vadd.f32 %v2299, %v2334
      %v2509 = vadd.f32 %v2300, %v2338
      %v2510 = vadd.f32 %v2301, %v2342
      %v2511 = vadd.f32 %v2302, %v2334
      %v2512 = vadd.f32 %v2303, %v2338
      %v2513 = vadd.f32 %v2304, %v2342
      %v2514 = vadd.f32 %v2305, %v2334
      %v2515 = vadd.f32 %v2306, %v2338
      %v2516 = vadd.f32 %v2307, %v2342
      %v2517 = vadd.f32 %v2308, %v2334
      %v2518 = vadd.f32 %v2309, %v2338
      %v2519 = vadd.f32 %v2310, %v2342
      %v2520 = vadd.f32 %v2311, %v2334
      %v2521 = vadd.f32 %v2312, %v2338
      %v2522 = vadd.f32 %v2313, %v2342
      %v2523 = vadd.f32 %v2314, %v2334
      %v2524 = vadd.f32 %v2315, %v2338
      %v2525 = vadd.f32 %v2316, %v2342
      %v2526 = vadd.f32 %v2317, %v2334
      %v2527 = vadd.f32 %v2318, %v2338
      %v2528 = vadd.f32 %v2319, %v2342
      %v2529 = vadd.f32 %v2320, %v2334
      %v2530 = vadd.f32 %v2321, %v2338
      %v2531 = vadd.f32 %v2322, %v2342
      %v2532 = vadd.f32 %v2323, %v2334
      %v2533 = vadd.f32 %v2324, %v2338
      %v2534 = vadd.f32 %v2325, %v2342
      %v2535 = vadd.f32 %v2326, %v2334
      %v2536 = vadd.f32 %v2327, %v2338
      %v2537 = vadd.f32 %v2328, %v2342
      %v2538 = vmax.f32 %v2346, 0.0
      %v2539 = vmax.f32 %v2347, 0.0
      %v2540 = vmax.f32 %v2348, 0.0
      %v2541 = vmax.f32 %v2349, 0.0
      %v2542 = vmax.f32 %v2350, 0.0
      %v2543 = vmax.f32 %v2351, 0.0
      %v2544 = vmax.f32 %v2352, 0.0
      %v2545 = vmax.f32 %v2353, 0.0
      %v2546 = vmax.f32 %v2354, 0.0
      %v2547 = vmax.f32 %v2355, 0.0
      %v2548 = vmax.f32 %v2356, 0.0
      %v2549 = vmax.f32 %v2357, 0.0
      %v2550 = vmax.f32 %v2358, 0.0
      %v2551 = vmax.f32 %v2359, 0.0
      %v2552 = vmax.f32 %v2360, 0.0
      %v2553 = vmax.f32 %v2361, 0.0
      %v2554 = vmax.f32 %v2362, 0.0
      %v2555 = vmax.f32 %v2363, 0.0
      %v2556 = vmax.f32 %v2364, 0.0
      %v2557 = vmax.f32 %v2365, 0.0
      %v2558 = vmax.f32 %v2366, 0.0
      %v2559 = vmax.f32 %v2367, 0.0
      %v2560 = vmax.f32 %v2368, 0.0
      %v2561 = vmax.f32 %v2369, 0.0
      %v2562 = vmax.f32 %v2370, 0.0
      %v2563 = vmax.f32 %v2371, 0.0
      %v2564 = vmax.f32 %v2372, 0.0
      %v2565 = vmax.f32 %v2373, 0.0
      %v2566 = vmax.f32 %v2374, 0.0
      %v2567 = vmax.f32 %v2375, 0.0
      %v2568 = vmax.f32 %v2376, 0.0
      %v2569 = vmax.f32 %v2377, 0.0
      %v2570 = vmax.f32 %v2378, 0.0
      %v2571 = vmax.f32 %v2379, 0.0
      %v2572 = vmax.f32 %v2380, 0.0
      %v2573 = vmax.f32 %v2381, 0.0
      %v2574 = vmax.f32 %v2382, 0.0
      %v2575 = vmax.f32 %v2383, 0.0
      %v2576 = vmax.f32 %v2384, 0.0
      %v2577 = vmax.f32 %v2385, 0.0
      %v2578 = vmax.f32 %v2386, 0.0
      %v2579 = vmax.f32 %v2387, 0.0
      %v2580 = vmax.f32 %v2388, 0.0
      %v2581 = vmax.f32 %v2389, 0.0
      %v2582 = vmax.f32 %v2390, 0.0
      %v2583 = vmax.f32 %v2391, 0.0
      %v2584 = vmax.f32 %v2392, 0.0
      %v2585 = vmax.f32 %v2393, 0.0
      %v2586 = vmax.f32 %v2394, 0.0
      %v2587 = vmax.f32 %v2395, 0.0
      %v2588 = vmax.f32 %v2396, 0.0
      %v2589 = vmax.f32 %v2397, 0.0
      %v2590 = vmax.f32 %v2398, 0.0
      %v2591 = vmax.f32 %v2399, 0.0
      %v2592 = vmax.f32 %v2400, 0.0
      %v2593 = vmax.f32 %v2401, 0.0
      %v2594 = vmax.f32 %v2402, 0.0
      %v2595 = vmax.f32 %v2403, 0.0
      %v2596 = vmax.f32 %v2404, 0.0
      %v2597 = vmax.f32 %v2405, 0.0
      %v2598 = vmax.f32 %v2406, 0.0
      %v2599 = vmax.f32 %v2407, 0.0
      %v2600 = vmax.f32 %v2408, 0.0
      %v2601 = vmax.f32 %v2409, 0.0
      %v2602 = vmax.f32 %v2410, 0.0
      %v2603 = vmax.f32 %v2411, 0.0
      %v2604 = vmax.f32 %v2412, 0.0
      %v2605 = vmax.f32 %v2413, 0.0
      %v2606 = vmax.f32 %v2414, 0.0
      %v2607 = vmax.f32 %v2415, 0.0
      %v2608 = vmax.f32 %v2416, 0.0
      %v2609 = vmax.f32 %v2417, 0.0
      %v2610 = vmax.f32 %v2418, 0.0
      %v2611 = vmax.f32 %v2419, 0.0
      %v2612 = vmax.f32 %v2420, 0.0
      %v2613 = vmax.f32 %v2421, 0.0
      %v2614 = vmax.f32 %v2422, 0.0
      %v2615 = vmax.f32 %v2423, 0.0
      %v2616 = vmax.f32 %v2424, 0.0
      %v2617 = vmax.f32 %v2425, 0.0
      %v2618 = vmax.f32 %v2426, 0.0
      %v2619 = vmax.f32 %v2427, 0.0
      %v2620 = vmax.f32 %v2428, 0.0
      %v2621 = vmax.f32 %v2429, 0.0
      %v2622 = vmax.f32 %v2430, 0.0
      %v2623 = vmax.f32 %v2431, 0.0
      %v2624 = vmax.f32 %v2432, 0.0
      %v2625 = vmax.f32 %v2433, 0.0
      %v2626 = vmax.f32 %v2434, 0.0
      %v2627 = vmax.f32 %v2435, 0.0
      %v2628 = vmax.f32 %v2436, 0.0
      %v2629 = vmax.f32 %v2437, 0.0
      %v2630 = vmax.f32 %v2438, 0.0
      %v2631 = vmax.f32 %v2439, 0.0
      %v2632 = vmax.f32 %v2440, 0.0
      %v2633 = vmax.f32 %v2441, 0.0
      %v2634 = vmax.f32 %v2442, 0.0
      %v2635 = vmax.f32 %v2443, 0.0
      %v2636 = vmax.f32 %v2444, 0.0
      %v2637 = vmax.f32 %v2445, 0.0
      %v2638 = vmax.f32 %v2446, 0.0
      %v2639 = vmax.f32 %v2447, 0.0
      %v2640 = vmax.f32 %v2448, 0.0
      %v2641 = vmax.f32 %v2449, 0.0
      %v2642 = vmax.f32 %v2450, 0.0
      %v2643 = vmax.f32 %v2451, 0.0
      %v2644 = vmax.f32 %v2452, 0.0
      %v2645 = vmax.f32 %v2453, 0.0
      %v2646 = vmax.f32 %v2454, 0.0
      %v2647 = vmax.f32 %v2455, 0.0
      %v2648 = vmax.f32 %v2456, 0.0
      %v2649 = vmax.f32 %v2457, 0.0
      %v2650 = vmax.f32 %v2458, 0.0
      %v2651 = vmax.f32 %v2459, 0.0
      %v2652 = vmax.f32 %v2460, 0.0
      %v2653 = vmax.f32 %v2461, 0.0
      %v2654 = vmax.f32 %v2462, 0.0
      %v2655 = vmax.f32 %v2463, 0.0
      %v2656 = vmax.f32 %v2464, 0.0
      %v2657 = vmax.f32 %v2465, 0.0
      %v2658 = vmax.f32 %v2466, 0.0
      %v2659 = vmax.f32 %v2467, 0.0
      %v2660 = vmax.f32 %v2468, 0.0
      %v2661 = vmax.f32 %v2469, 0.0
      %v2662 = vmax.f32 %v2470, 0.0
      %v2663 = vmax.f32 %v2471, 0.0
      %v2664 = vmax.f32 %v2472, 0.0
      %v2665 = vmax.f32 %v2473, 0.0
      %v2666 = vmax.f32 %v2474, 0.0
      %v2667 = vmax.f32 %v2475, 0.0
      %v2668 = vmax.f32 %v2476, 0.0
      %v2669 = vmax.f32 %v2477, 0.0
      %v2670 = vmax.f32 %v2478, 0.0
      %v2671 = vmax.f32 %v2479, 0.0
      %v2672 = vmax.f32 %v2480, 0.0
      %v2673 = vmax.f32 %v2481, 0.0
      %v2674 = vmax.f32 %v2482, 0.0
      %v2675 = vmax.f32 %v2483, 0.0
      %v2676 = vmax.f32 %v2484, 0.0
      %v2677 = vmax.f32 %v2485, 0.0
      %v2678 = vmax.f32 %v2486, 0.0
      %v2679 = vmax.f32 %v2487, 0.0
      %v2680 = vmax.f32 %v2488, 0.0
      %v2681 = vmax.f32 %v2489, 0.0
      %v2682 = vmax.f32 %v2490, 0.0
      %v2683 = vmax.f32 %v2491, 0.0
      %v2684 = vmax.f32 %v2492, 0.0
      %v2685 = vmax.f32 %v2493, 0.0
      %v2686 = vmax.f32 %v2494, 0.0
      %v2687 = vmax.f32 %v2495, 0.0
      %v2688 = vmax.f32 %v2496, 0.0
      %v2689 = vmax.f32 %v2497, 0.0
      %v2690 = vmax.f32 %v2498, 0.0
      %v2691 = vmax.f32 %v2499, 0.0
      %v2692 = vmax.f32 %v2500, 0.0
      %v2693 = vmax.f32 %v2501, 0.0
      %v2694 = vmax.f32 %v2502, 0.0
      %v2695 = vmax.f32 %v2503, 0.0
      %v2696 = vmax.f32 %v2504, 0.0
      %v2697 = vmax.f32 %v2505, 0.0
      %v2698 = vmax.f32 %v2506, 0.0
      %v2699 = vmax.f32 %v2507, 0.0
      %v2700 = vmax.f32 %v2508, 0.0
      %v2701 = vmax.f32 %v2509, 0.0
      %v2702 = vmax.f32 %v2510, 0.0
      %v2703 = vmax.f32 %v2511, 0.0
      %v2704 = vmax.f32 %v2512, 0.0
      %v2705 = vmax.f32 %v2513, 0.0
      %v2706 = vmax.f32 %v2514, 0.0
      %v2707 = vmax.f32 %v2515, 0.0
      %v2708 = vmax.f32 %v2516, 0.0
      %v2709 = vmax.f32 %v2517, 0.0
      %v2710 = vmax.f32 %v2518, 0.0
      %v2711 = vmax.f32 %v2519, 0.0
      %v2712 = vmax.f32 %v2520, 0.0
      %v2713 = vmax.f32 %v2521, 0.0
      %v2714 = vmax.f32 %v2522, 0.0
      %v2715 = vmax.f32 %v2523, 0.0
      %v2716 = vmax.f32 %v2524, 0.0
      %v2717 = vmax.f32 %v2525, 0.0
      %v2718 = vmax.f32 %v2526, 0.0
      %v2719 = vmax.f32 %v2527, 0.0
      %v2720 = vmax.f32 %v2528, 0.0
      %v2721 = vmax.f32 %v2529, 0.0
      %v2722 = vmax.f32 %v2530, 0.0
      %v2723 = vmax.f32 %v2531, 0.0
      %v2724 = vmax.f32 %v2532, 0.0
      %v2725 = vmax.f32 %v2533, 0.0
      %v2726 = vmax.f32 %v2534, 0.0
      %v2727 = vmax.f32 %v2535, 0.0
      %v2728 = vmax.f32 %v2536, 0.0
      %v2729 = vmax.f32 %v2537, 0.0
      %2730 = vst [vmem:[#allocation3] sm:$0xff] %v2538
      %2731 = vst [vmem:[#allocation3 + $0x8] sm:$0xff] %v2539
      %2732 = vst [vmem:[#allocation3 + $0x10] sm:$0xff] %v2540
      %2733 = vst [vmem:[#allocation3 + $0x18] sm:$0xff] %v2541
      %2734 = vst [vmem:[#allocation3 + $0x20] sm:$0xff] %v2542
      %2735 = vst [vmem:[#allocation3 + $0x28] sm:$0xff] %v2543
      %2736 = vst [vmem:[#allocation3 + $0x30] sm:$0xff] %v2544
      %2737 = vst [vmem:[#allocation3 + $0x38] sm:$0xff] %v2545
      %2738 = vst [vmem:[#allocation3 + $0x40] sm:$0xff] %v2546
      %2739 = vst [vmem:[#allocation3 + $0x48] sm:$0xff] %v2547
      %2740 = vst [vmem:[#allocation3 + $0x50] sm:$0xff] %v2548
      %2741 = vst [vmem:[#allocation3 + $0x58] sm:$0xff] %v2549
      %2742 = vst [vmem:[#allocation3 + $0x60] sm:$0xff] %v2550
      %2743 = vst [vmem:[#allocation3 + $0x68] sm:$0xff] %v2551
      %2744 = vst [vmem:[#allocation3 + $0x70] sm:$0xff] %v2552
      %2745 = vst [vmem:[#allocation3 + $0x78] sm:$0xff] %v2553
      %2746 = vst [vmem:[#allocation3 + $0x80] sm:$0xff] %v2554
      %2747 = vst [vmem:[#allocation3 + $0x88] sm:$0xff] %v2555
      %2748 = vst [vmem:[#allocation3 + $0x90] sm:$0xff] %v2556
      %2749 = vst [vmem:[#allocation3 + $0x98] sm:$0xff] %v2557
      %2750 = vst [vmem:[#allocation3 + $0xa0] sm:$0xff] %v2558
      %2751 = vst [vmem:[#allocation3 + $0xa8] sm:$0xff] %v2559
      %2752 = vst [vmem:[#allocation3 + $0xb0] sm:$0xff] %v2560
      %2753 = vst [vmem:[#allocation3 + $0xb8] sm:$0xff] %v2561
      %2754 = vst [vmem:[#allocation3 + $0xc0] sm:$0xff] %v2562
      %2755 = vst [vmem:[#allocation3 + $0xc8] sm:$0xff] %v2563
      %2756 = vst [vmem:[#allocation3 + $0xd0] sm:$0xff] %v2564
      %2757 = vst [vmem:[#allocation3 + $0xd8] sm:$0xff] %v2565
      %2758 = vst [vmem:[#allocation3 + $0xe0] sm:$0xff] %v2566
      %2759 = vst [vmem:[#allocation3 + $0xe8] sm:$0xff] %v2567
      %2760 = vst [vmem:[#allocation3 + $0xf0] sm:$0xff] %v2568
      %2761 = vst [vmem:[#allocation3 + $0xf8] sm:$0xff] %v2569
      %2762 = vst [vmem:[#allocation3 + $0x100] sm:$0xff] %v2570
      %2763 = vst [vmem:[#allocation3 + $0x108] sm:$0xff] %v2571
      %2764 = vst [vmem:[#allocation3 + $0x110] sm:$0xff] %v2572
      %2765 = vst [vmem:[#allocation3 + $0x118] sm:$0xff] %v2573
      %2766 = vst [vmem:[#allocation3 + $0x120] sm:$0xff] %v2574
      %2767 = vst [vmem:[#allocation3 + $0x128] sm:$0xff] %v2575
      %2768 = vst [vmem:[#allocation3 + $0x130] sm:$0xff] %v2576
      %2769 = vst [vmem:[#allocation3 + $0x138] sm:$0xff] %v2577
      %2770 = vst [vmem:[#allocation3 + $0x140] sm:$0xff] %v2578
      %2771 = vst [vmem:[#allocation3 + $0x148] sm:$0xff] %v2579
      %2772 = vst [vmem:[#allocation3 + $0x150] sm:$0xff] %v2580
      %2773 = vst [vmem:[#allocation3 + $0x158] sm:$0xff] %v2581
      %2774 = vst [vmem:[#allocation3 + $0x160] sm:$0xff] %v2582
      %2775 = vst [vmem:[#allocation3 + $0x168] sm:$0xff] %v2583
      %2776 = vst [vmem:[#allocation3 + $0x170] sm:$0xff] %v2584
      %2777 = vst [vmem:[#allocation3 + $0x178] sm:$0xff] %v2585
      %2778 = vst [vmem:[#allocation3 + $0x180] sm:$0xff] %v2586
      %2779 = vst [vmem:[#allocation3 + $0x188] sm:$0xff] %v2587
      %2780 = vst [vmem:[#allocation3 + $0x190] sm:$0xff] %v2588
      %2781 = vst [vmem:[#allocation3 + $0x198] sm:$0xff] %v2589
      %2782 = vst [vmem:[#allocation3 + $0x1a0] sm:$0xff] %v2590
      %2783 = vst [vmem:[#allocation3 + $0x1a8] sm:$0xff] %v2591
      %2784 = vst [vmem:[#allocation3 + $0x1b0] sm:$0xff] %v2592
      %2785 = vst [vmem:[#allocation3 + $0x1b8] sm:$0xff] %v2593
      %2786 = vst [vmem:[#allocation3 + $0x1c0] sm:$0xff] %v2594
      %2787 = vst [vmem:[#allocation3 + $0x1c8] sm:$0xff] %v2595
      %2788 = vst [vmem:[#allocation3 + $0x1d0] sm:$0xff] %v2596
      %2789 = vst [vmem:[#allocation3 + $0x1d8] sm:$0xff] %v2597
      %2790 = vst [vmem:[#allocation3 + $0x1e0] sm:$0xff] %v2598
      %2791 = vst [vmem:[#allocation3 + $0x1e8] sm:$0xff] %v2599
      %2792 = vst [vmem:[#allocation3 + $0x1f0] sm:$0xff] %v2600
      %2793 = vst [vmem:[#allocation3 + $0x1f8] sm:$0xff] %v2601
      %2794 = vst [vmem:[#allocation3 + $0x200] sm:$0xff] %v2602
      %2795 = vst [vmem:[#allocation3 + $0x208] sm:$0xff] %v2603
      %2796 = vst [vmem:[#allocation3 + $0x210] sm:$0xff] %v2604
      %2797 = vst [vmem:[#allocation3 + $0x218] sm:$0xff] %v2605
      %2798 = vst [vmem:[#allocation3 + $0x220] sm:$0xff] %v2606
      %2799 = vst [vmem:[#allocation3 + $0x228] sm:$0xff] %v2607
      %2800 = vst [vmem:[#allocation3 + $0x230] sm:$0xff] %v2608
      %2801 = vst [vmem:[#allocation3 + $0x238] sm:$0xff] %v2609
      %2802 = vst [vmem:[#allocation3 + $0x240] sm:$0xff] %v2610
      %2803 = vst [vmem:[#allocation3 + $0x248] sm:$0xff] %v2611
      %2804 = vst [vmem:[#allocation3 + $0x250] sm:$0xff] %v2612
      %2805 = vst [vmem:[#allocation3 + $0x258] sm:$0xff] %v2613
      %2806 = vst [vmem:[#allocation3 + $0x260] sm:$0xff] %v2614
      %2807 = vst [vmem:[#allocation3 + $0x268] sm:$0xff] %v2615
      %2808 = vst [vmem:[#allocation3 + $0x270] sm:$0xff] %v2616
      %2809 = vst [vmem:[#allocation3 + $0x278] sm:$0xff] %v2617
      %2810 = vst [vmem:[#allocation3 + $0x280] sm:$0xff] %v2618
      %2811 = vst [vmem:[#allocation3 + $0x288] sm:$0xff] %v2619
      %2812 = vst [vmem:[#allocation3 + $0x290] sm:$0xff] %v2620
      %2813 = vst [vmem:[#allocation3 + $0x298] sm:$0xff] %v2621
      %2814 = vst [vmem:[#allocation3 + $0x2a0] sm:$0xff] %v2622
      %2815 = vst [vmem:[#allocation3 + $0x2a8] sm:$0xff] %v2623
      %2816 = vst [vmem:[#allocation3 + $0x2b0] sm:$0xff] %v2624
      %2817 = vst [vmem:[#allocation3 + $0x2b8] sm:$0xff] %v2625
      %2818 = vst [vmem:[#allocation3 + $0x2c0] sm:$0xff] %v2626
      %2819 = vst [vmem:[#allocation3 + $0x2c8] sm:$0xff] %v2627
      %2820 = vst [vmem:[#allocation3 + $0x2d0] sm:$0xff] %v2628
      %2821 = vst [vmem:[#allocation3 + $0x2d8] sm:$0xff] %v2629
      %2822 = vst [vmem:[#allocation3 + $0x2e0] sm:$0xff] %v2630
      %2823 = vst [vmem:[#allocation3 + $0x2e8] sm:$0xff] %v2631
      %2824 = vst [vmem:[#allocation3 + $0x2f0] sm:$0xff] %v2632
      %2825 = vst [vmem:[#allocation3 + $0x2f8] sm:$0xff] %v2633
      %2826 = vst [vmem:[#allocation3 + $0x300] sm:$0xff] %v2634
      %2827 = vst [vmem:[#allocation3 + $0x308] sm:$0xff] %v2635
      %2828 = vst [vmem:[#allocation3 + $0x310] sm:$0xff] %v2636
      %2829 = vst [vmem:[#allocation3 + $0x318] sm:$0xff] %v2637
      %2830 = vst [vmem:[#allocation3 + $0x320] sm:$0xff] %v2638
      %2831 = vst [vmem:[#allocation3 + $0x328] sm:$0xff] %v2639
      %2832 = vst [vmem:[#allocation3 + $0x330] sm:$0xff] %v2640
      %2833 = vst [vmem:[#allocation3 + $0x338] sm:$0xff] %v2641
      %2834 = vst [vmem:[#allocation3 + $0x340] sm:$0xff] %v2642
      %2835 = vst [vmem:[#allocation3 + $0x348] sm:$0xff] %v2643
      %2836 = vst [vmem:[#allocation3 + $0x350] sm:$0xff] %v2644
      %2837 = vst [vmem:[#allocation3 + $0x358] sm:$0xff] %v2645
      %2838 = vst [vmem:[#allocation3 + $0x360] sm:$0xff] %v2646
      %2839 = vst [vmem:[#allocation3 + $0x368] sm:$0xff] %v2647
      %2840 = vst [vmem:[#allocation3 + $0x370] sm:$0xff] %v2648
      %2841 = vst [vmem:[#allocation3 + $0x378] sm:$0xff] %v2649
      %2842 = vst [vmem:[#allocation3 + $0x380] sm:$0xff] %v2650
      %2843 = vst [vmem:[#allocation3 + $0x388] sm:$0xff] %v2651
      %2844 = vst [vmem:[#allocation3 + $0x390] sm:$0xff] %v2652
      %2845 = vst [vmem:[#allocation3 + $0x398] sm:$0xff] %v2653
      %2846 = vst [vmem:[#allocation3 + $0x3a0] sm:$0xff] %v2654
      %2847 = vst [vmem:[#allocation3 + $0x3a8] sm:$0xff] %v2655
      %2848 = vst [vmem:[#allocation3 + $0x3b0] sm:$0xff] %v2656
      %2849 = vst [vmem:[#allocation3 + $0x3b8] sm:$0xff] %v2657
      %2850 = vst [vmem:[#allocation3 + $0x3c0] sm:$0xff] %v2658
      %2851 = vst [vmem:[#allocation3 + $0x3c8] sm:$0xff] %v2659
      %2852 = vst [vmem:[#allocation3 + $0x3d0] sm:$0xff] %v2660
      %2853 = vst [vmem:[#allocation3 + $0x3d8] sm:$0xff] %v2661
      %2854 = vst [vmem:[#allocation3 + $0x3e0] sm:$0xff] %v2662
      %2855 = vst [vmem:[#allocation3 + $0x3e8] sm:$0xff] %v2663
      %2856 = vst [vmem:[#allocation3 + $0x3f0] sm:$0xff] %v2664
      %2857 = vst [vmem:[#allocation3 + $0x3f8] sm:$0xff] %v2665
      %2858 = vst [vmem:[#allocation3 + $0x400] sm:$0xff] %v2666
      %2859 = vst [vmem:[#allocation3 + $0x408] sm:$0xff] %v2667
      %2860 = vst [vmem:[#allocation3 + $0x410] sm:$0xff] %v2668
      %2861 = vst [vmem:[#allocation3 + $0x418] sm:$0xff] %v2669
      %2862 = vst [vmem:[#allocation3 + $0x420] sm:$0xff] %v2670
      %2863 = vst [vmem:[#allocation3 + $0x428] sm:$0xff] %v2671
      %2864 = vst [vmem:[#allocation3 + $0x430] sm:$0xff] %v2672
      %2865 = vst [vmem:[#allocation3 + $0x438] sm:$0xff] %v2673
      %2866 = vst [vmem:[#allocation3 + $0x440] sm:$0xff] %v2674
      %2867 = vst [vmem:[#allocation3 + $0x448] sm:$0xff] %v2675
      %2868 = vst [vmem:[#allocation3 + $0x450] sm:$0xff] %v2676
      %2869 = vst [vmem:[#allocation3 + $0x458] sm:$0xff] %v2677
      %2870 = vst [vmem:[#allocation3 + $0x460] sm:$0xff] %v2678
      %2871 = vst [vmem:[#allocation3 + $0x468] sm:$0xff] %v2679
      %2872 = vst [vmem:[#allocation3 + $0x470] sm:$0xff] %v2680
      %2873 = vst [vmem:[#allocation3 + $0x478] sm:$0xff] %v2681
      %2874 = vst [vmem:[#allocation3 + $0x480] sm:$0xff] %v2682
      %2875 = vst [vmem:[#allocation3 + $0x488] sm:$0xff] %v2683
      %2876 = vst [vmem:[#allocation3 + $0x490] sm:$0xff] %v2684
      %2877 = vst [vmem:[#allocation3 + $0x498] sm:$0xff] %v2685
      %2878 = vst [vmem:[#allocation3 + $0x4a0] sm:$0xff] %v2686
      %2879 = vst [vmem:[#allocation3 + $0x4a8] sm:$0xff] %v2687
      %2880 = vst [vmem:[#allocation3 + $0x4b0] sm:$0xff] %v2688
      %2881 = vst [vmem:[#allocation3 + $0x4b8] sm:$0xff] %v2689
      %2882 = vst [vmem:[#allocation3 + $0x4c0] sm:$0xff] %v2690
      %2883 = vst [vmem:[#allocation3 + $0x4c8] sm:$0xff] %v2691
      %2884 = vst [vmem:[#allocation3 + $0x4d0] sm:$0xff] %v2692
      %2885 = vst [vmem:[#allocation3 + $0x4d8] sm:$0xff] %v2693
      %2886 = vst [vmem:[#allocation3 + $0x4e0] sm:$0xff] %v2694
      %2887 = vst [vmem:[#allocation3 + $0x4e8] sm:$0xff] %v2695
      %2888 = vst [vmem:[#allocation3 + $0x4f0] sm:$0xff] %v2696
      %2889 = vst [vmem:[#allocation3 + $0x4f8] sm:$0xff] %v2697
      %2890 = vst [vmem:[#allocation3 + $0x500] sm:$0xff] %v2698
      %2891 = vst [vmem:[#allocation3 + $0x508] sm:$0xff] %v2699
      %2892 = vst [vmem:[#allocation3 + $0x510] sm:$0xff] %v2700
      %2893 = vst [vmem:[#allocation3 + $0x518] sm:$0xff] %v2701
      %2894 = vst [vmem:[#allocation3 + $0x520] sm:$0xff] %v2702
      %2895 = vst [vmem:[#allocation3 + $0x528] sm:$0xff] %v2703
      %2896 = vst [vmem:[#allocation3 + $0x530] sm:$0xff] %v2704
      %2897 = vst [vmem:[#allocation3 + $0x538] sm:$0xff] %v2705
      %2898 = vst [vmem:[#allocation3 + $0x540] sm:$0xff] %v2706
      %2899 = vst [vmem:[#allocation3 + $0x548] sm:$0xff] %v2707
      %2900 = vst [vmem:[#allocation3 + $0x550] sm:$0xff] %v2708
      %2901 = vst [vmem:[#allocation3 + $0x558] sm:$0xff] %v2709
      %2902 = vst [vmem:[#allocation3 + $0x560] sm:$0xff] %v2710
      %2903 = vst [vmem:[#allocation3 + $0x568] sm:$0xff] %v2711
      %2904 = vst [vmem:[#allocation3 + $0x570] sm:$0xff] %v2712
      %2905 = vst [vmem:[#allocation3 + $0x578] sm:$0xff] %v2713
      %2906 = vst [vmem:[#allocation3 + $0x580] sm:$0xff] %v2714
      %2907 = vst [vmem:[#allocation3 + $0x588] sm:$0xff] %v2715
      %2908 = vst [vmem:[#allocation3 + $0x590] sm:$0xff] %v2716
      %2909 = vst [vmem:[#allocation3 + $0x598] sm:$0xff] %v2717
      %2910 = vst [vmem:[#allocation3 + $0x5a0] sm:$0xff] %v2718
      %2911 = vst [vmem:[#allocation3 + $0x5a8] sm:$0xff] %v2719
      %2912 = vst [vmem:[#allocation3 + $0x5b0] sm:$0xff] %v2720
      %2913 = vst [vmem:[#allocation3 + $0x5b8] sm:$0xff] %v2721
      %2914 = vst [vmem:[#allocation3 + $0x5c0] sm:$0xff] %v2722
      %2915 = vst [vmem:[#allocation3 + $0x5c8] sm:$0xff] %v2723
      %2916 = vst [vmem:[#allocation3 + $0x5d0] sm:$0xff] %v2724
      %2917 = vst [vmem:[#allocation3 + $0x5d8] sm:$0xff] %v2725
      %2918 = vst [vmem:[#allocation3 + $0x5e0] sm:$0xff] %v2726
      %2919 = vst [vmem:[#allocation3 + $0x5e8] sm:$0xff] %v2727
      %2920 = vst [vmem:[#allocation3 + $0x5f0] sm:$0xff] %v2728
      %2921 = vst [vmem:[#allocation3 + $0x5f8] sm:$0xff] %v2729
    $region25: #{tpu_custom_call.1} parent=1 // pred_fallthru
      _
    // Predicated region
    $region26: #{tpu_custom_call.1} parent=1 // pred_check
      _
    $region27: #{tpu_custom_call.1} parent=1 // pred_check_branch
      %2923 = sbr.rel (0) target = $region29
    $region28: #{tpu_custom_call.1} parent=1 // pred_region
      %s2925 = ssub.s32 24576, 24576
      %2926 = vsyncadd [#allocation4], %s2925
      %s2927 = sshll.u32 [#allocation3], 4
      %s2928 = int_to_ptr.vmem [resolvable:$true] %s2927
      %2933 = dma.vmem_to_hbm [thread:$0]  %s2928, 24576, %s4, [#allocation4], 384, 384, 24
    $region29: #{tpu_custom_call.1} parent=1 // pred_fallthru
      _
    // Predicated region
    $region30: #{tpu_custom_call.1} parent=1 // pred_check
      _
    $region31: #{tpu_custom_call.1} parent=1 // pred_check_branch
      %2935 = sbr.rel (0) target = $region33
    $region32: #{tpu_custom_call.1} parent=1 // pred_region
      %2936 = dma.done [#allocation4], 24576
    $region33: #{tpu_custom_call.1} parent=1 // pred_fallthru
      _
    %2937 = vsyncpa [#allocation4], 1

</llo_original>
